<compile_context>
chip_gen: v7x
topology: tpu7x:2x2x1
jax: 0.10.0
libtpu: 0.0.40
codegen_flags: <defaults>
</compile_context>

<pallas_src>
import functools

import jax
import jax.numpy as jnp
from jax import lax
from jax.experimental import pallas as pl
from jax.experimental.pallas import tpu as pltpu


def _ru(x, m):
    return (x + m - 1) // m * m


def _halo_base(W):
    # Top halo rows of the padded o1 scratch; 16-aligned so the bf16 interior
    # store (16 sublanes / packed vreg) is sublane-aligned.
    return _ru(W + 1, 16)


def bottleneck_kernel(x_ref, w1_ref, b1_ref, w2_ref, b2_ref, w3_ref, b3_ref,
                      out_ref, o1p_ref, acc_ref, *, H, W):
    """One image per grid step.

    x_ref  : (1, H*W, Cin_p)  f32   NHWC pixels flattened row-major
    w1_ref : (Cin_p, WID)     bf16  conv1 weight with bn1 scale folded in
    w2_ref : (9, WID, WID)    bf16  conv2 taps (t = (dy+1)*3 + (dx+1)), bn2 folded
    w3_ref : (WID, Cout_p)    bf16  conv3 weight with bn3 scale folded in
    b*_ref : (1, C)           f32   folded BN biases
    out_ref: (1, H*W, Cout_p) f32
    o1p_ref: (pad_rows, WID)  bf16  vertically zero-padded o1 scratch
    acc_ref: (H*W, WID)       f32   conv2 accumulator
    """
    HW = H * W
    WID = o1p_ref.shape[1]
    base = _halo_base(W)
    tail = o1p_ref.shape[0] - base - HW

    x = x_ref[0]                                        # (HW, Cin_p) f32

    # Zero the halo rows every step (the interior is fully overwritten below)
    # so each grid step is self-contained under the megacore "parallel" split.
    o1p_ref[pl.ds(0, base), :] = jnp.zeros((base, WID), o1p_ref.dtype)
    o1p_ref[pl.ds(base + HW, tail), :] = jnp.zeros((tail, WID), o1p_ref.dtype)

    # ---- conv1 (1x1, bn1 scale pre-folded) + bias + ReLU -----------------
    o1 = jnp.dot(x.astype(jnp.bfloat16), w1_ref[...],
                 preferred_element_type=jnp.float32)
    o1 = jnp.maximum(o1 + b1_ref[...], 0.0)
    # Single contiguous, sublane-aligned store into the padded scratch.
    o1p_ref[pl.ds(base, HW), :] = o1.astype(jnp.bfloat16)

    # ---- conv2 (3x3, stride 1, pad 1, bn2 scale pre-folded) --------------
    # Column masks for the horizontally shifted taps: zero contributions that
    # would wrap across image-row boundaries.  (HW, 1), computed once.
    col = lax.broadcasted_iota(jnp.int32, (HW, 1), 0) % W
    has_left = col > 0            # dx = -1 neighbour exists
    has_right = col < (W - 1)     # dx = +1 neighbour exists

    for t in range(9):
        dy, dx = t // 3 - 1, t % 3 - 1
        # Pixel r's (dy,dx) neighbour lives at scratch row base + r + dy*W + dx;
        # vertical out-of-image reads land in the zero halo rows.
        tap = o1p_ref[pl.ds(base + dy * W + dx, HW), :]          # (HW, WID) bf16
        if dx == -1:
            tap = jnp.where(has_left, tap, jnp.zeros_like(tap))
        elif dx == 1:
            tap = jnp.where(has_right, tap, jnp.zeros_like(tap))
        part = jnp.dot(tap, w2_ref[t], preferred_element_type=jnp.float32)
        if t == 0:
            acc_ref[...] = part + b2_ref[...]      # fuse bn2 bias into init
        else:
            acc_ref[...] += part

    o2 = jnp.maximum(acc_ref[...], 0.0)

    # ---- conv3 (1x1, bn3 scale pre-folded) + bias + residual + ReLU ------
    o3 = jnp.dot(o2.astype(jnp.bfloat16), w3_ref[...],
                 preferred_element_type=jnp.float32)
    out_ref[0] = jnp.maximum(o3 + b3_ref[...] + x, 0.0)


def prepare_params(params):
    """Fold eval-mode BN scales into the conv weights, zero-pad channel dims
    to multiples of 128 lanes, and cast matmul operands to bf16."""
    w1, s1, b1 = params["w1"], params["s1"], params["b1"]
    w2, s2, b2 = params["w2"], params["s2"], params["b2"]
    w3, s3, b3 = params["w3"], params["s3"], params["b3"]
    Cin, width = w1.shape
    Cout = w3.shape[1]
    Cin_p, WID, Cout_p = _ru(Cin, 128), _ru(width, 128), _ru(Cout, 128)

    w1f = w1 * s1            # BN scale acts on output channels (last dim)
    w2f = w2 * s2
    w3f = w3 * s3

    w1p = jnp.pad(w1f, ((0, Cin_p - Cin), (0, WID - width))).astype(jnp.bfloat16)
    w2p = jnp.pad(w2f, ((0, 0), (0, WID - width), (0, WID - width))).astype(jnp.bfloat16)
    w3p = jnp.pad(w3f, ((0, WID - width), (0, Cout_p - Cout))).astype(jnp.bfloat16)
    b1p = jnp.pad(b1, ((0, 0), (0, WID - width))).astype(jnp.float32)
    b2p = jnp.pad(b2, ((0, 0), (0, WID - width))).astype(jnp.float32)
    b3p = jnp.pad(b3, ((0, 0), (0, Cout_p - Cout))).astype(jnp.float32)
    return (w1p, b1p, w2p, b2p, w3p, b3p), (Cin, Cin_p, WID, Cout, Cout_p)


def bottleneck_forward_nhwc(x_nhwc, params):
    """Bottleneck forward on NHWC input (N, H, W, Cin) -> (N, H, W, Cout)."""
    N, H, W, Cin = x_nhwc.shape
    (w1p, b1p, w2p, b2p, w3p, b3p), (Cin0, Cin_p, WID, Cout, Cout_p) = \
        prepare_params(params)
    assert Cin == Cin0 and Cin == Cout, \
        "downsample=None requires inplanes == planes * expansion"
    HW = H * W

    xf = x_nhwc.reshape(N, HW, Cin).astype(jnp.float32)
    if Cin_p != Cin:
        xf = jnp.pad(xf, ((0, 0), (0, 0), (0, Cin_p - Cin)))

    base = _halo_base(W)
    pad_rows = _ru(base + HW + W + 1, 16)

    # VMEM budget per grid step: double-buffered in/out blocks + weights + scratch.
    block_bytes = (
        2 * HW * Cin_p * 4 + 2 * HW * Cout_p * 4
        + 2 * (w1p.size + w2p.size + w3p.size) * 2
        + 2 * (b1p.size + b2p.size + b3p.size) * 4
        + pad_rows * WID * 2 + HW * WID * 4)
    assert block_bytes < 48 * 1024 * 1024, \
        "per-image block too large for v7x VMEM; tile the H*W axis as well"
    vmem_limit = min(64 * 1024 * 1024, max(2 * block_bytes, 16 * 1024 * 1024))

    kernel = functools.partial(bottleneck_kernel, H=H, W=W)
    out = pl.pallas_call(
        kernel,
        out_shape=jax.ShapeDtypeStruct((N, HW, Cout_p), jnp.float32),
        grid_spec=pltpu.PrefetchScalarGridSpec(
            num_scalar_prefetch=0,
            grid=(N,),
            in_specs=[
                pl.BlockSpec((1, HW, Cin_p), lambda n: (n, 0, 0)),
                pl.BlockSpec(w1p.shape, lambda n: (0, 0)),
                pl.BlockSpec(b1p.shape, lambda n: (0, 0)),
                pl.BlockSpec(w2p.shape, lambda n: (0, 0, 0)),
                pl.BlockSpec(b2p.shape, lambda n: (0, 0)),
                pl.BlockSpec(w3p.shape, lambda n: (0, 0)),
                pl.BlockSpec(b3p.shape, lambda n: (0, 0)),
            ],
            out_specs=pl.BlockSpec((1, HW, Cout_p), lambda n: (n, 0, 0)),
            scratch_shapes=[
                pltpu.VMEM((pad_rows, WID), jnp.bfloat16),   # zero-halo o1
                pltpu.VMEM((HW, WID), jnp.float32),          # conv2 accumulator
            ]),
        compiler_params=pltpu.CompilerParams(
            dimension_semantics=("parallel",),
            vmem_limit_bytes=vmem_limit),
    )(xf, w1p, b1p, w2p, b2p, w3p, b3p)

    out = out.reshape(N, H, W, Cout_p)
    if Cout_p != Cout:
        out = out[..., :Cout]
    return out


def bottleneck_forward(x_nchw, params):
    """Drop-in for the PyTorch NCHW contract.  The two transposes each cost a
    full HBM pass; prefer bottleneck_forward_nhwc inside an NHWC pipeline."""
    x_nhwc = jnp.transpose(x_nchw, (0, 2, 3, 1))
    out = bottleneck_forward_nhwc(x_nhwc, params)
    return jnp.transpose(out, (0, 3, 1, 2))


def bottleneck_reference_nhwc(x_nhwc, params):
    """Pure-JAX/XLA reference with the same numerics policy as the kernel
    (BN scales folded into weights, bf16 conv operands, f32 accumulation)."""
    width = params["w1"].shape[1]
    w1f = (params["w1"] * params["s1"]).astype(jnp.bfloat16)
    w2f = (params["w2"] * params["s2"]).astype(jnp.bfloat16)
    w3f = (params["w3"] * params["s3"]).astype(jnp.bfloat16)

    def conv(v, w_hwio, pad):
        return lax.conv_general_dilated(
            v.astype(jnp.bfloat16), w_hwio, window_strides=(1, 1),
            padding=((pad, pad), (pad, pad)),
            dimension_numbers=("NHWC", "HWIO", "NHWC"),
            preferred_element_type=jnp.float32)

    o = jnp.maximum(conv(x_nhwc, w1f[None, None], 0) + params["b1"], 0.0)
    o = jnp.maximum(conv(o, w2f.reshape(3, 3, width, width), 1) + params["b2"], 0.0)
    o = conv(o, w3f[None, None], 0) + params["b3"]
    return jnp.maximum(o + x_nhwc, 0.0)


def make_params(key, inplanes, planes, expansion=4, base_width=64, groups=1):
    """Deterministic synthetic weights; BN (eval mode, eps=1e-5) folded to
    per-channel scale/bias.  Conv weights stored as (Cin, Cout) per tap:
    w[i, o] == torch_weight[o, i, ky, kx]."""
    width = int(planes * (base_width / 64.0)) * groups
    cout = planes * expansion
    eps = 1e-5
    kw, k1, k2, k3 = jax.random.split(key, 4)

    def bn_fold(k, c):
        kg, kb, km, kv = jax.random.split(k, 4)
        gamma = 1.0 + 0.1 * jax.random.normal(kg, (1, c), jnp.float32)
        beta = 0.1 * jax.random.normal(kb, (1, c), jnp.float32)
        mean = 0.1 * jax.random.normal(km, (1, c), jnp.float32)
        var = jax.random.uniform(kv, (1, c), jnp.float32, 0.5, 1.5)
        scale = gamma / jnp.sqrt(var + eps)
        bias = beta - mean * scale
        return scale, bias

    kw1, kw2, kw3 = jax.random.split(kw, 3)
    w1 = 0.05 * jax.random.normal(kw1, (inplanes, width), jnp.float32)
    w2 = 0.05 * jax.random.normal(kw2, (9, width, width), jnp.float32)
    w3 = 0.05 * jax.random.normal(kw3, (width, cout), jnp.float32)
    s1, b1 = bn_fold(k1, width)
    s2, b2 = bn_fold(k2, width)
    s3, b3 = bn_fold(k3, cout)
    return dict(w1=w1, s1=s1, b1=b1, w2=w2, s2=s2, b2=b2, w3=w3, s3=s3, b3=b3)


if __name__ == "__main__":
    # Bottleneck(inplanes=128, planes=32): width=32 (padded to 128 lanes inside
    # the kernel), out channels = 128, stride=1, downsample=None (identity).
    N, H, W = 2, 16, 16
    planes, expansion = 32, 4
    inplanes = planes * expansion            # 128

    key = jax.random.PRNGKey(0)
    kx, kp = jax.random.split(key)
    # Data kept NHWC end-to-end (no NCHW<->NHWC transposes around the kernel).
    x_nhwc = jax.random.normal(kx, (N, H, W, inplanes), jnp.float32)
    params = make_params(kp, inplanes, planes, expansion)

    out = jax.block_until_ready(jax.jit(bottleneck_forward_nhwc)(x_nhwc, params))
    ref = jax.block_until_ready(bottleneck_reference_nhwc(x_nhwc, params))

    assert out.shape == (N, H, W, inplanes)
    err = float(jnp.max(jnp.abs(out - ref)))
    assert err < 2e-2, f"mismatch vs reference: max abs err = {err}"
    print("KERNEL_OK")
</pallas_src>

<mosaic_0001>
module attributes {stable_mosaic.version = 11 : i64} {
  func.func @bottleneck_kernel(%arg0: i32, %arg1: memref<1x256x128xf32, #tpu.memory_space<vmem>>, %arg2: memref<128x128xbf16, #tpu.memory_space<vmem>>, %arg3: memref<1x128xf32, #tpu.memory_space<vmem>>, %arg4: memref<9x128x128xbf16, #tpu.memory_space<vmem>>, %arg5: memref<1x128xf32, #tpu.memory_space<vmem>>, %arg6: memref<128x128xbf16, #tpu.memory_space<vmem>>, %arg7: memref<1x128xf32, #tpu.memory_space<vmem>>, %arg8: memref<1x256x128xf32, #tpu.memory_space<vmem>>, %arg9: memref<320x128xbf16, #tpu.memory_space<vmem>>, %arg10: memref<256x128xf32, #tpu.memory_space<vmem>>) attributes {dimension_semantics = [#tpu.dimension_semantics<parallel>], iteration_bounds = array<i64: 2>, scalar_prefetch = 0 : i64, scratch_operands = 2 : i64, tpu.core_type = #tpu.core_type<tc>, window_params = [{transform_indices = @transform_0, window_bounds = array<i64: 1, 256, 128>}, {pipeline_mode = #tpu.pipeline_mode<synchronous>, transform_indices = @transform_1, window_bounds = array<i64: 128, 128>}, {pipeline_mode = #tpu.pipeline_mode<synchronous>, transform_indices = @transform_2, window_bounds = array<i64: 1, 128>}, {pipeline_mode = #tpu.pipeline_mode<synchronous>, transform_indices = @transform_3, window_bounds = array<i64: 9, 128, 128>}, {pipeline_mode = #tpu.pipeline_mode<synchronous>, transform_indices = @transform_4, window_bounds = array<i64: 1, 128>}, {pipeline_mode = #tpu.pipeline_mode<synchronous>, transform_indices = @transform_5, window_bounds = array<i64: 128, 128>}, {pipeline_mode = #tpu.pipeline_mode<synchronous>, transform_indices = @transform_6, window_bounds = array<i64: 1, 128>}, {transform_indices = @transform_7, window_bounds = array<i64: 1, 256, 128>}]} {
    %c0 = arith.constant 0 : index
    %c0_0 = arith.constant 0 : index
    %c0_1 = arith.constant 0 : index
    %0 = vector.load %arg1[%c0, %c0_0, %c0_1] : memref<1x256x128xf32, #tpu.memory_space<vmem>>, vector<1x256x128xf32>
    %1 = vector.shape_cast %0 : vector<1x256x128xf32> to vector<256x128xf32>
    %cst = arith.constant 0.000000e+00 : bf16
    %2 = vector.broadcast %cst : bf16 to vector<32x128xbf16>
    %c0_2 = arith.constant 0 : index
    %c0_3 = arith.constant 0 : index
    %3 = vector.load %arg9[%c0_2, %c0_3] : memref<320x128xbf16, #tpu.memory_space<vmem>>, vector<32x128xbf16>
    tpu.vector_store %arg9[%c0_2, %c0_3], %2 {strides = array<i32>} : memref<320x128xbf16, #tpu.memory_space<vmem>>, vector<32x128xbf16>,
    %cst_4 = arith.constant 0.000000e+00 : bf16
    %4 = vector.broadcast %cst_4 : bf16 to vector<32x128xbf16>
    %c288 = arith.constant 288 : index
    %c0_5 = arith.constant 0 : index
    %5 = vector.load %arg9[%c288, %c0_5] : memref<320x128xbf16, #tpu.memory_space<vmem>>, vector<32x128xbf16>
    tpu.vector_store %arg9[%c288, %c0_5], %4 {strides = array<i32>} : memref<320x128xbf16, #tpu.memory_space<vmem>>, vector<32x128xbf16>,
    %6 = arith.truncf %1 : vector<256x128xf32> to vector<256x128xbf16>
    %c0_6 = arith.constant 0 : index
    %c0_7 = arith.constant 0 : index
    %7 = vector.load %arg2[%c0_6, %c0_7] : memref<128x128xbf16, #tpu.memory_space<vmem>>, vector<128x128xbf16>
    %cst_8 = arith.constant dense<0.000000e+00> : vector<256x128xf32>
    %8 = tpu.matmul %6, %7, %cst_8 {dimension_numbers = #tpu.dot_dimension_numbers<[1], [0], [0], [1], [0, 0, 1, 1], [], []>} : vector<256x128xbf16>, vector<128x128xbf16>, vector<256x128xf32> -> vector<256x128xf32>
    %c0_9 = arith.constant 0 : index
    %c0_10 = arith.constant 0 : index
    %9 = vector.load %arg3[%c0_9, %c0_10] : memref<1x128xf32, #tpu.memory_space<vmem>>, vector<1x128xf32>
    %10 = vector.broadcast %9 : vector<1x128xf32> to vector<256x128xf32>
    %11 = arith.addf %8, %10 : vector<256x128xf32>
    %cst_11 = arith.constant 0.000000e+00 : f32
    %12 = vector.broadcast %cst_11 : f32 to vector<256x128xf32>
    %13 = arith.maximumf %11, %12 : vector<256x128xf32>
    %14 = arith.truncf %13 : vector<256x128xf32> to vector<256x128xbf16>
    %c32 = arith.constant 32 : index
    %c0_12 = arith.constant 0 : index
    %15 = vector.load %arg9[%c32, %c0_12] : memref<320x128xbf16, #tpu.memory_space<vmem>>, vector<256x128xbf16>
    tpu.vector_store %arg9[%c32, %c0_12], %14 {strides = array<i32>} : memref<320x128xbf16, #tpu.memory_space<vmem>>, vector<256x128xbf16>,
    %16 = tpu.iota {dimensions = array<i32: 0>} : vector<256x1xi32>
    %c16_i32 = arith.constant 16 : i32
    %c0_i32 = arith.constant 0 : i32
    %17 = arith.cmpi eq, %c16_i32, %c0_i32 : i32
    %c1_i32 = arith.constant 1 : i32
    %18 = arith.select %17, %c1_i32, %c16_i32 : i32
    %19 = vector.broadcast %18 : i32 to vector<256x1xi32>
    %20 = arith.remsi %16, %19 : vector<256x1xi32>
    %c0_i32_13 = arith.constant 0 : i32
    %21 = vector.broadcast %c0_i32_13 : i32 to vector<256x1xi32>
    %22 = arith.cmpi ne, %20, %21 : vector<256x1xi32>
    %c0_i32_14 = arith.constant 0 : i32
    %23 = vector.broadcast %c0_i32_14 : i32 to vector<256x1xi32>
    %24 = arith.cmpi slt, %20, %23 : vector<256x1xi32>
    %c0_i32_15 = arith.constant 0 : i32
    %25 = arith.cmpi slt, %18, %c0_i32_15 : i32
    %26 = vector.broadcast %25 : i1 to vector<256x1xi1>
    %27 = vector.broadcast %26 : vector<256x1xi1> to vector<256x1xi1>
    %28 = arith.xori %24, %27 : vector<256x1xi1>
    %29 = arith.andi %28, %22 : vector<256x1xi1>
    %30 = vector.broadcast %18 : i32 to vector<256x1xi32>
    %31 = arith.addi %20, %30 : vector<256x1xi32>
    %32 = arith.select %29, %31, %20 : vector<256x1xi1>, vector<256x1xi32>
    %c0_i32_16 = arith.constant 0 : i32
    %33 = vector.broadcast %c0_i32_16 : i32 to vector<256x1xi32>
    %34 = arith.cmpi sgt, %32, %33 : vector<256x1xi32>
    %c15_i32 = arith.constant 15 : i32
    %35 = vector.broadcast %c15_i32 : i32 to vector<256x1xi32>
    %36 = arith.cmpi slt, %32, %35 : vector<256x1xi32>
    %c15 = arith.constant 15 : index
    %c0_17 = arith.constant 0 : index
    %37 = vector.load %arg9[%c15, %c0_17] : memref<320x128xbf16, #tpu.memory_space<vmem>>, vector<256x128xbf16>
    %cst_18 = arith.constant 0.000000e+00 : bf16
    %38 = vector.broadcast %cst_18 : bf16 to vector<256x128xbf16>
    %39 = vector.shape_cast %34 : vector<256x1xi1> to vector<256x1xi1>
    %40 = vector.broadcast %39 : vector<256x1xi1> to vector<256x128xi1>
    %41 = arith.select %40, %37, %38 : vector<256x128xi1>, vector<256x128xbf16>
    %c0_19 = arith.constant 0 : index
    %c0_20 = arith.constant 0 : index
    %c0_21 = arith.constant 0 : index
    %42 = vector.load %arg4[%c0_19, %c0_20, %c0_21] : memref<9x128x128xbf16, #tpu.memory_space<vmem>>, vector<1x128x128xbf16>
    %43 = vector.shape_cast %42 : vector<1x128x128xbf16> to vector<128x128xbf16>
    %cst_22 = arith.constant dense<0.000000e+00> : vector<256x128xf32>
    %44 = tpu.matmul %41, %43, %cst_22 {dimension_numbers = #tpu.dot_dimension_numbers<[1], [0], [0], [1], [0, 0, 1, 1], [], []>} : vector<256x128xbf16>, vector<128x128xbf16>, vector<256x128xf32> -> vector<256x128xf32>
    %c0_23 = arith.constant 0 : index
    %c0_24 = arith.constant 0 : index
    %45 = vector.load %arg5[%c0_23, %c0_24] : memref<1x128xf32, #tpu.memory_space<vmem>>, vector<1x128xf32>
    %46 = vector.broadcast %45 : vector<1x128xf32> to vector<256x128xf32>
    %47 = arith.addf %44, %46 : vector<256x128xf32>
    %c0_25 = arith.constant 0 : index
    %c0_26 = arith.constant 0 : index
    %48 = vector.load %arg10[%c0_25, %c0_26] : memref<256x128xf32, #tpu.memory_space<vmem>>, vector<256x128xf32>
    tpu.vector_store %arg10[%c0_25, %c0_26], %47 {strides = array<i32>} : memref<256x128xf32, #tpu.memory_space<vmem>>, vector<256x128xf32>,
    %c16 = arith.constant 16 : index
    %c0_27 = arith.constant 0 : index
    %49 = vector.load %arg9[%c16, %c0_27] : memref<320x128xbf16, #tpu.memory_space<vmem>>, vector<256x128xbf16>
    %c1 = arith.constant 1 : index
    %c0_28 = arith.constant 0 : index
    %c0_29 = arith.constant 0 : index
    %50 = vector.load %arg4[%c1, %c0_28, %c0_29] : memref<9x128x128xbf16, #tpu.memory_space<vmem>>, vector<1x128x128xbf16>
    %51 = vector.shape_cast %50 : vector<1x128x128xbf16> to vector<128x128xbf16>
    %cst_30 = arith.constant dense<0.000000e+00> : vector<256x128xf32>
    %52 = tpu.matmul %49, %51, %cst_30 {dimension_numbers = #tpu.dot_dimension_numbers<[1], [0], [0], [1], [0, 0, 1, 1], [], []>} : vector<256x128xbf16>, vector<128x128xbf16>, vector<256x128xf32> -> vector<256x128xf32>
    %c0_31 = arith.constant 0 : index
    %c0_32 = arith.constant 0 : index
    %53 = vector.load %arg10[%c0_31, %c0_32] : memref<256x128xf32, #tpu.memory_space<vmem>>, vector<256x128xf32>
    %54 = arith.addf %53, %52 : vector<256x128xf32>
    %c0_33 = arith.constant 0 : index
    %c0_34 = arith.constant 0 : index
    %55 = vector.load %arg10[%c0_33, %c0_34] : memref<256x128xf32, #tpu.memory_space<vmem>>, vector<256x128xf32>
    tpu.vector_store %arg10[%c0_33, %c0_34], %54 {strides = array<i32>} : memref<256x128xf32, #tpu.memory_space<vmem>>, vector<256x128xf32>,
    %c17 = arith.constant 17 : index
    %c0_35 = arith.constant 0 : index
    %56 = vector.load %arg9[%c17, %c0_35] : memref<320x128xbf16, #tpu.memory_space<vmem>>, vector<256x128xbf16>
    %cst_36 = arith.constant 0.000000e+00 : bf16
    %57 = vector.broadcast %cst_36 : bf16 to vector<256x128xbf16>
    %58 = vector.shape_cast %36 : vector<256x1xi1> to vector<256x1xi1>
    %59 = vector.broadcast %58 : vector<256x1xi1> to vector<256x128xi1>
    %60 = arith.select %59, %56, %57 : vector<256x128xi1>, vector<256x128xbf16>
    %c2 = arith.constant 2 : index
    %c0_37 = arith.constant 0 : index
    %c0_38 = arith.constant 0 : index
    %61 = vector.load %arg4[%c2, %c0_37, %c0_38] : memref<9x128x128xbf16, #tpu.memory_space<vmem>>, vector<1x128x128xbf16>
    %62 = vector.shape_cast %61 : vector<1x128x128xbf16> to vector<128x128xbf16>
    %cst_39 = arith.constant dense<0.000000e+00> : vector<256x128xf32>
    %63 = tpu.matmul %60, %62, %cst_39 {dimension_numbers = #tpu.dot_dimension_numbers<[1], [0], [0], [1], [0, 0, 1, 1], [], []>} : vector<256x128xbf16>, vector<128x128xbf16>, vector<256x128xf32> -> vector<256x128xf32>
    %c0_40 = arith.constant 0 : index
    %c0_41 = arith.constant 0 : index
    %64 = vector.load %arg10[%c0_40, %c0_41] : memref<256x128xf32, #tpu.memory_space<vmem>>, vector<256x128xf32>
    %65 = arith.addf %64, %63 : vector<256x128xf32>
    %c0_42 = arith.constant 0 : index
    %c0_43 = arith.constant 0 : index
    %66 = vector.load %arg10[%c0_42, %c0_43] : memref<256x128xf32, #tpu.memory_space<vmem>>, vector<256x128xf32>
    tpu.vector_store %arg10[%c0_42, %c0_43], %65 {strides = array<i32>} : memref<256x128xf32, #tpu.memory_space<vmem>>, vector<256x128xf32>,
    %c31 = arith.constant 31 : index
    %c0_44 = arith.constant 0 : index
    %67 = vector.load %arg9[%c31, %c0_44] : memref<320x128xbf16, #tpu.memory_space<vmem>>, vector<256x128xbf16>
    %cst_45 = arith.constant 0.000000e+00 : bf16
    %68 = vector.broadcast %cst_45 : bf16 to vector<256x128xbf16>
    %69 = vector.shape_cast %34 : vector<256x1xi1> to vector<256x1xi1>
    %70 = vector.broadcast %69 : vector<256x1xi1> to vector<256x128xi1>
    %71 = arith.select %70, %67, %68 : vector<256x128xi1>, vector<256x128xbf16>
    %c3 = arith.constant 3 : index
    %c0_46 = arith.constant 0 : index
    %c0_47 = arith.constant 0 : index
    %72 = vector.load %arg4[%c3, %c0_46, %c0_47] : memref<9x128x128xbf16, #tpu.memory_space<vmem>>, vector<1x128x128xbf16>
    %73 = vector.shape_cast %72 : vector<1x128x128xbf16> to vector<128x128xbf16>
    %cst_48 = arith.constant dense<0.000000e+00> : vector<256x128xf32>
    %74 = tpu.matmul %71, %73, %cst_48 {dimension_numbers = #tpu.dot_dimension_numbers<[1], [0], [0], [1], [0, 0, 1, 1], [], []>} : vector<256x128xbf16>, vector<128x128xbf16>, vector<256x128xf32> -> vector<256x128xf32>
    %c0_49 = arith.constant 0 : index
    %c0_50 = arith.constant 0 : index
    %75 = vector.load %arg10[%c0_49, %c0_50] : memref<256x128xf32, #tpu.memory_space<vmem>>, vector<256x128xf32>
    %76 = arith.addf %75, %74 : vector<256x128xf32>
    %c0_51 = arith.constant 0 : index
    %c0_52 = arith.constant 0 : index
    %77 = vector.load %arg10[%c0_51, %c0_52] : memref<256x128xf32, #tpu.memory_space<vmem>>, vector<256x128xf32>
    tpu.vector_store %arg10[%c0_51, %c0_52], %76 {strides = array<i32>} : memref<256x128xf32, #tpu.memory_space<vmem>>, vector<256x128xf32>,
    %c32_53 = arith.constant 32 : index
    %c0_54 = arith.constant 0 : index
    %78 = vector.load %arg9[%c32_53, %c0_54] : memref<320x128xbf16, #tpu.memory_space<vmem>>, vector<256x128xbf16>
    %c4 = arith.constant 4 : index
    %c0_55 = arith.constant 0 : index
    %c0_56 = arith.constant 0 : index
    %79 = vector.load %arg4[%c4, %c0_55, %c0_56] : memref<9x128x128xbf16, #tpu.memory_space<vmem>>, vector<1x128x128xbf16>
    %80 = vector.shape_cast %79 : vector<1x128x128xbf16> to vector<128x128xbf16>
    %cst_57 = arith.constant dense<0.000000e+00> : vector<256x128xf32>
    %81 = tpu.matmul %78, %80, %cst_57 {dimension_numbers = #tpu.dot_dimension_numbers<[1], [0], [0], [1], [0, 0, 1, 1], [], []>} : vector<256x128xbf16>, vector<128x128xbf16>, vector<256x128xf32> -> vector<256x128xf32>
    %c0_58 = arith.constant 0 : index
    %c0_59 = arith.constant 0 : index
    %82 = vector.load %arg10[%c0_58, %c0_59] : memref<256x128xf32, #tpu.memory_space<vmem>>, vector<256x128xf32>
    %83 = arith.addf %82, %81 : vector<256x128xf32>
    %c0_60 = arith.constant 0 : index
    %c0_61 = arith.constant 0 : index
    %84 = vector.load %arg10[%c0_60, %c0_61] : memref<256x128xf32, #tpu.memory_space<vmem>>, vector<256x128xf32>
    tpu.vector_store %arg10[%c0_60, %c0_61], %83 {strides = array<i32>} : memref<256x128xf32, #tpu.memory_space<vmem>>, vector<256x128xf32>,
    %c33 = arith.constant 33 : index
    %c0_62 = arith.constant 0 : index
    %85 = vector.load %arg9[%c33, %c0_62] : memref<320x128xbf16, #tpu.memory_space<vmem>>, vector<256x128xbf16>
    %cst_63 = arith.constant 0.000000e+00 : bf16
    %86 = vector.broadcast %cst_63 : bf16 to vector<256x128xbf16>
    %87 = vector.shape_cast %36 : vector<256x1xi1> to vector<256x1xi1>
    %88 = vector.broadcast %87 : vector<256x1xi1> to vector<256x128xi1>
    %89 = arith.select %88, %85, %86 : vector<256x128xi1>, vector<256x128xbf16>
    %c5 = arith.constant 5 : index
    %c0_64 = arith.constant 0 : index
    %c0_65 = arith.constant 0 : index
    %90 = vector.load %arg4[%c5, %c0_64, %c0_65] : memref<9x128x128xbf16, #tpu.memory_space<vmem>>, vector<1x128x128xbf16>
    %91 = vector.shape_cast %90 : vector<1x128x128xbf16> to vector<128x128xbf16>
    %cst_66 = arith.constant dense<0.000000e+00> : vector<256x128xf32>
    %92 = tpu.matmul %89, %91, %cst_66 {dimension_numbers = #tpu.dot_dimension_numbers<[1], [0], [0], [1], [0, 0, 1, 1], [], []>} : vector<256x128xbf16>, vector<128x128xbf16>, vector<256x128xf32> -> vector<256x128xf32>
    %c0_67 = arith.constant 0 : index
    %c0_68 = arith.constant 0 : index
    %93 = vector.load %arg10[%c0_67, %c0_68] : memref<256x128xf32, #tpu.memory_space<vmem>>, vector<256x128xf32>
    %94 = arith.addf %93, %92 : vector<256x128xf32>
    %c0_69 = arith.constant 0 : index
    %c0_70 = arith.constant 0 : index
    %95 = vector.load %arg10[%c0_69, %c0_70] : memref<256x128xf32, #tpu.memory_space<vmem>>, vector<256x128xf32>
    tpu.vector_store %arg10[%c0_69, %c0_70], %94 {strides = array<i32>} : memref<256x128xf32, #tpu.memory_space<vmem>>, vector<256x128xf32>,
    %c47 = arith.constant 47 : index
    %c0_71 = arith.constant 0 : index
    %96 = vector.load %arg9[%c47, %c0_71] : memref<320x128xbf16, #tpu.memory_space<vmem>>, vector<256x128xbf16>
    %cst_72 = arith.constant 0.000000e+00 : bf16
    %97 = vector.broadcast %cst_72 : bf16 to vector<256x128xbf16>
    %98 = vector.shape_cast %34 : vector<256x1xi1> to vector<256x1xi1>
    %99 = vector.broadcast %98 : vector<256x1xi1> to vector<256x128xi1>
    %100 = arith.select %99, %96, %97 : vector<256x128xi1>, vector<256x128xbf16>
    %c6 = arith.constant 6 : index
    %c0_73 = arith.constant 0 : index
    %c0_74 = arith.constant 0 : index
    %101 = vector.load %arg4[%c6, %c0_73, %c0_74] : memref<9x128x128xbf16, #tpu.memory_space<vmem>>, vector<1x128x128xbf16>
    %102 = vector.shape_cast %101 : vector<1x128x128xbf16> to vector<128x128xbf16>
    %cst_75 = arith.constant dense<0.000000e+00> : vector<256x128xf32>
    %103 = tpu.matmul %100, %102, %cst_75 {dimension_numbers = #tpu.dot_dimension_numbers<[1], [0], [0], [1], [0, 0, 1, 1], [], []>} : vector<256x128xbf16>, vector<128x128xbf16>, vector<256x128xf32> -> vector<256x128xf32>
    %c0_76 = arith.constant 0 : index
    %c0_77 = arith.constant 0 : index
    %104 = vector.load %arg10[%c0_76, %c0_77] : memref<256x128xf32, #tpu.memory_space<vmem>>, vector<256x128xf32>
    %105 = arith.addf %104, %103 : vector<256x128xf32>
    %c0_78 = arith.constant 0 : index
    %c0_79 = arith.constant 0 : index
    %106 = vector.load %arg10[%c0_78, %c0_79] : memref<256x128xf32, #tpu.memory_space<vmem>>, vector<256x128xf32>
    tpu.vector_store %arg10[%c0_78, %c0_79], %105 {strides = array<i32>} : memref<256x128xf32, #tpu.memory_space<vmem>>, vector<256x128xf32>,
    %c48 = arith.constant 48 : index
    %c0_80 = arith.constant 0 : index
    %107 = vector.load %arg9[%c48, %c0_80] : memref<320x128xbf16, #tpu.memory_space<vmem>>, vector<256x128xbf16>
    %c7 = arith.constant 7 : index
    %c0_81 = arith.constant 0 : index
    %c0_82 = arith.constant 0 : index
    %108 = vector.load %arg4[%c7, %c0_81, %c0_82] : memref<9x128x128xbf16, #tpu.memory_space<vmem>>, vector<1x128x128xbf16>
    %109 = vector.shape_cast %108 : vector<1x128x128xbf16> to vector<128x128xbf16>
    %cst_83 = arith.constant dense<0.000000e+00> : vector<256x128xf32>
    %110 = tpu.matmul %107, %109, %cst_83 {dimension_numbers = #tpu.dot_dimension_numbers<[1], [0], [0], [1], [0, 0, 1, 1], [], []>} : vector<256x128xbf16>, vector<128x128xbf16>, vector<256x128xf32> -> vector<256x128xf32>
    %c0_84 = arith.constant 0 : index
    %c0_85 = arith.constant 0 : index
    %111 = vector.load %arg10[%c0_84, %c0_85] : memref<256x128xf32, #tpu.memory_space<vmem>>, vector<256x128xf32>
    %112 = arith.addf %111, %110 : vector<256x128xf32>
    %c0_86 = arith.constant 0 : index
    %c0_87 = arith.constant 0 : index
    %113 = vector.load %arg10[%c0_86, %c0_87] : memref<256x128xf32, #tpu.memory_space<vmem>>, vector<256x128xf32>
    tpu.vector_store %arg10[%c0_86, %c0_87], %112 {strides = array<i32>} : memref<256x128xf32, #tpu.memory_space<vmem>>, vector<256x128xf32>,
    %c49 = arith.constant 49 : index
    %c0_88 = arith.constant 0 : index
    %114 = vector.load %arg9[%c49, %c0_88] : memref<320x128xbf16, #tpu.memory_space<vmem>>, vector<256x128xbf16>
    %cst_89 = arith.constant 0.000000e+00 : bf16
    %115 = vector.broadcast %cst_89 : bf16 to vector<256x128xbf16>
    %116 = vector.shape_cast %36 : vector<256x1xi1> to vector<256x1xi1>
    %117 = vector.broadcast %116 : vector<256x1xi1> to vector<256x128xi1>
    %118 = arith.select %117, %114, %115 : vector<256x128xi1>, vector<256x128xbf16>
    %c8 = arith.constant 8 : index
    %c0_90 = arith.constant 0 : index
    %c0_91 = arith.constant 0 : index
    %119 = vector.load %arg4[%c8, %c0_90, %c0_91] : memref<9x128x128xbf16, #tpu.memory_space<vmem>>, vector<1x128x128xbf16>
    %120 = vector.shape_cast %119 : vector<1x128x128xbf16> to vector<128x128xbf16>
    %cst_92 = arith.constant dense<0.000000e+00> : vector<256x128xf32>
    %121 = tpu.matmul %118, %120, %cst_92 {dimension_numbers = #tpu.dot_dimension_numbers<[1], [0], [0], [1], [0, 0, 1, 1], [], []>} : vector<256x128xbf16>, vector<128x128xbf16>, vector<256x128xf32> -> vector<256x128xf32>
    %c0_93 = arith.constant 0 : index
    %c0_94 = arith.constant 0 : index
    %122 = vector.load %arg10[%c0_93, %c0_94] : memref<256x128xf32, #tpu.memory_space<vmem>>, vector<256x128xf32>
    %123 = arith.addf %122, %121 : vector<256x128xf32>
    %c0_95 = arith.constant 0 : index
    %c0_96 = arith.constant 0 : index
    %124 = vector.load %arg10[%c0_95, %c0_96] : memref<256x128xf32, #tpu.memory_space<vmem>>, vector<256x128xf32>
    tpu.vector_store %arg10[%c0_95, %c0_96], %123 {strides = array<i32>} : memref<256x128xf32, #tpu.memory_space<vmem>>, vector<256x128xf32>,
    %c0_97 = arith.constant 0 : index
    %c0_98 = arith.constant 0 : index
    %125 = vector.load %arg10[%c0_97, %c0_98] : memref<256x128xf32, #tpu.memory_space<vmem>>, vector<256x128xf32>
    %cst_99 = arith.constant 0.000000e+00 : f32
    %126 = vector.broadcast %cst_99 : f32 to vector<256x128xf32>
    %127 = arith.maximumf %125, %126 : vector<256x128xf32>
    %128 = arith.truncf %127 : vector<256x128xf32> to vector<256x128xbf16>
    %c0_100 = arith.constant 0 : index
    %c0_101 = arith.constant 0 : index
    %129 = vector.load %arg6[%c0_100, %c0_101] : memref<128x128xbf16, #tpu.memory_space<vmem>>, vector<128x128xbf16>
    %cst_102 = arith.constant dense<0.000000e+00> : vector<256x128xf32>
    %130 = tpu.matmul %128, %129, %cst_102 {dimension_numbers = #tpu.dot_dimension_numbers<[1], [0], [0], [1], [0, 0, 1, 1], [], []>} : vector<256x128xbf16>, vector<128x128xbf16>, vector<256x128xf32> -> vector<256x128xf32>
    %c0_103 = arith.constant 0 : index
    %c0_104 = arith.constant 0 : index
    %131 = vector.load %arg7[%c0_103, %c0_104] : memref<1x128xf32, #tpu.memory_space<vmem>>, vector<1x128xf32>
    %132 = vector.broadcast %131 : vector<1x128xf32> to vector<256x128xf32>
    %133 = arith.addf %130, %132 : vector<256x128xf32>
    %134 = arith.addf %133, %1 : vector<256x128xf32>
    %cst_105 = arith.constant 0.000000e+00 : f32
    %135 = vector.broadcast %cst_105 : f32 to vector<256x128xf32>
    %136 = arith.maximumf %134, %135 : vector<256x128xf32>
    %c0_106 = arith.constant 0 : index
    %c0_107 = arith.constant 0 : index
    %c0_108 = arith.constant 0 : index
    %137 = vector.load %arg8[%c0_106, %c0_107, %c0_108] : memref<1x256x128xf32, #tpu.memory_space<vmem>>, vector<1x256x128xf32>
    %138 = vector.shape_cast %137 : vector<1x256x128xf32> to vector<256x128xf32>
    %139 = vector.shape_cast %136 : vector<256x128xf32> to vector<1x256x128xf32>
    tpu.vector_store %arg8[%c0_106, %c0_107, %c0_108], %139 {strides = array<i32>} : memref<1x256x128xf32, #tpu.memory_space<vmem>>, vector<1x256x128xf32>,
    return
  }
  func.func @transform_0(%arg0: i32) -> (i32, i32, i32) {
    %c0_i32 = arith.constant 0 : i32
    %c0_i32_0 = arith.constant 0 : i32
    %c0_i32_1 = arith.constant 0 : i32
    return %arg0, %c0_i32, %c0_i32_0 : i32, i32, i32
  }
  func.func @transform_1(%arg0: i32) -> (i32, i32) {
    %c0_i32 = arith.constant 0 : i32
    %c0_i32_0 = arith.constant 0 : i32
    %c0_i32_1 = arith.constant 0 : i32
    return %c0_i32, %c0_i32_0 : i32, i32
  }
  func.func @transform_2(%arg0: i32) -> (i32, i32) {
    %c0_i32 = arith.constant 0 : i32
    %c0_i32_0 = arith.constant 0 : i32
    %c0_i32_1 = arith.constant 0 : i32
    return %c0_i32, %c0_i32_0 : i32, i32
  }
  func.func @transform_3(%arg0: i32) -> (i32, i32, i32) {
    %c0_i32 = arith.constant 0 : i32
    %c0_i32_0 = arith.constant 0 : i32
    %c0_i32_1 = arith.constant 0 : i32
    %c0_i32_2 = arith.constant 0 : i32
    return %c0_i32, %c0_i32_0, %c0_i32_1 : i32, i32, i32
  }
  func.func @transform_4(%arg0: i32) -> (i32, i32) {
    %c0_i32 = arith.constant 0 : i32
    %c0_i32_0 = arith.constant 0 : i32
    %c0_i32_1 = arith.constant 0 : i32
    return %c0_i32, %c0_i32_0 : i32, i32
  }
  func.func @transform_5(%arg0: i32) -> (i32, i32) {
    %c0_i32 = arith.constant 0 : i32
    %c0_i32_0 = arith.constant 0 : i32
    %c0_i32_1 = arith.constant 0 : i32
    return %c0_i32, %c0_i32_0 : i32, i32
  }
  func.func @transform_6(%arg0: i32) -> (i32, i32) {
    %c0_i32 = arith.constant 0 : i32
    %c0_i32_0 = arith.constant 0 : i32
    %c0_i32_1 = arith.constant 0 : i32
    return %c0_i32, %c0_i32_0 : i32, i32
  }
  func.func @transform_7(%arg0: i32) -> (i32, i32, i32) {
    %c0_i32 = arith.constant 0 : i32
    %c0_i32_0 = arith.constant 0 : i32
    %c0_i32_1 = arith.constant 0 : i32
    return %arg0, %c0_i32, %c0_i32_0 : i32, i32, i32
  }
}

</mosaic_0001>

<llo_original>
// kernel: bottleneck_forward_nhwc.1
$region0: #{bottleneck_forward_nhwc.1}
  #allocation0 [shape = 'u32[]', space=smem, size = 0x4, offset = 0x4, fixed_abs, tag = 'smem constant byte address 0x4 - core index']
  #allocation1 [shape = 'u32[144,128]{1,0:T(1,128)}', space=vmem, size = 0x12000, scoped, tag = 'internal scratch']
  #allocation2 [shape = 'bf16[320,128]{1,0:T(16,128)(2,1)}', space=vmem, size = 0x14000, scoped, tag = 'scratch operand']
  #allocation3 [shape = 'f32[256,128]{1,0:T(8,128)}', space=vmem, size = 0x20000, scoped, tag = 'scratch operand']
  %s0 = inlined_call_operand.vmem [shape: f32[2,256,128], index: 0, kind: input, shape index: {}]
  %s1 = inlined_call_operand.vmem [shape: bf16[128,128], index: 1, kind: input, shape index: {}]
  %s2 = inlined_call_operand.vmem [shape: f32[1,128], index: 2, kind: input, shape index: {}]
  %s3 = inlined_call_operand.vmem [shape: bf16[9,128,128], index: 3, kind: input, shape index: {}]
  %s4 = inlined_call_operand.vmem [shape: f32[1,128], index: 4, kind: input, shape index: {}]
  %s5 = inlined_call_operand.vmem [shape: bf16[128,128], index: 5, kind: input, shape index: {}]
  %s6 = inlined_call_operand.vmem [shape: f32[1,128], index: 6, kind: input, shape index: {}]
  %s7 = inlined_call_operand.hbm [shape: f32[2,256,128], index: 7, kind: output, shape index: {}]
  %s8 = sld [smem:[#allocation0]]
  $region61: #{bottleneck_forward_nhwc.1} parent=0
    _
  %s10 = ssub.s32 1, %s8
  %s11 = scalar_select 0, %s10, %s8
  $region1: #{bottleneck_forward_nhwc.1} parent=0
    #allocation4 [shape = 'u8[262144]{0}', space=vmem, size = 0x40000, scoped, tag = 'output window, operand 0']
    #allocation5 [shape = 's32[2]{0}', space=sflag, size = 0x8, scoped, tag = 'scoped memory for bottleneck_forward_nhwc.1']
    %12 = vsyncpa [#allocation5], 0
    %s13 = scalar_lea.sflag [#allocation5], 1
    %14 = vsyncpa %s13, 0
    loop: start=0, step=1, limit=4
    $region2: #{bottleneck_forward_nhwc.1} parent=1 // loop_pre_header
      _
    $region3: #{bottleneck_forward_nhwc.1} parent=1 // loop_header
      %s16 = sphi 0, %s20
      %p17 = scmp.ge.s32.totalorder %s16, 4
      %s26 = sphi 0, %s28
      %s29 = sphi 0, %s26
      %s30 = sphi 0, %s29
      %s46 = sphi 0, %s30
      %s50 = sphi 0, %s50
      %s52 = sphi 0, %s50
      %s53 = sphi 0, %s52
      %s67 = sphi 0, %s53
      %s71 = sphi 0, %s71
      %s73 = sphi 0, %s71
      %s74 = sphi 0, %s73
      %s88 = sphi 0, %s74
      %s92 = sphi 0, %s92
      %s94 = sphi 0, %s92
      %s95 = sphi 0, %s94
      %s109 = sphi 0, %s95
      %s113 = sphi 0, %s113
      %s115 = sphi 0, %s113
      %s116 = sphi 0, %s115
      %s130 = sphi 0, %s116
      %s134 = sphi 0, %s134
      %s136 = sphi 0, %s134
      %s137 = sphi 0, %s136
      %s151 = sphi 0, %s137
      %s155 = sphi 0, %s155
      %s157 = sphi 0, %s155
      %s158 = sphi 0, %s157
      %s172 = sphi 0, %s158
      %s178 = sphi 0, %s180
      %s181 = sphi 0, %s178
      %s182 = sphi 0, %s181
      %s198 = sphi 0, %s182
    $region4: #{bottleneck_forward_nhwc.1} parent=1 // loop_header_branch
      %19 = sbr.rel (%p17) target = $region8
    $region5: #{bottleneck_forward_nhwc.1} parent=1 // loop_body
      %s21 = ssub.s32 %s16, 1
      %s22 = ssub.s32 %s16, 2
      %s23 = sadd.s32 %s16, 1
      %s24 = ssub.s32 %s16, %s23
      %p25 = scmp.eq.s32.totalorder %s24, 0
      %s27 = sadd.s32 %s26, 1
      %s28 = scalar_select %p25, %s26, %s27
      %p31 = pneg %p25
      %p32 = scmp.eq.s32.totalorder %s16, 1
      %p33 = por %p31, %p32
      %p34 = scmp.ne.s32.totalorder %s26, %s29
      %p35 = scmp.eq.s32.totalorder %s16, 0
      %p36 = por %p34, %p35
      %p37 = scmp.ne.s32.totalorder %s26, %s29
      %p38 = scmp.eq.s32.totalorder %s21, 1
      %p39 = por %p37, %p38
      %p40 = scmp.ne.s32.totalorder %s29, %s30
      %p41 = scmp.eq.s32.totalorder %s21, 0
      %p42 = por %p40, %p41
      %p43 = scmp.ne.s32.totalorder %s29, %s30
      %p44 = scmp.eq.s32.totalorder %s22, 1
      %p45 = por %p43, %p44
      %p47 = scmp.ne.s32.totalorder %s30, %s46
      %p48 = scmp.eq.s32.totalorder %s22, 0
      %p49 = por %p47, %p48
      %s51 = sadd.s32 %s50, 1
      %p54 = scmp.eq.s32.totalorder %s16, 1
      %p55 = scmp.ne.s32.totalorder %s50, %s52
      %p56 = scmp.eq.s32.totalorder %s16, 0
      %p57 = por %p55, %p56
      %p58 = scmp.ne.s32.totalorder %s50, %s52
      %p59 = scmp.eq.s32.totalorder %s21, 1
      %p60 = por %p58, %p59
      %p61 = scmp.ne.s32.totalorder %s52, %s53
      %p62 = scmp.eq.s32.totalorder %s21, 0
      %p63 = por %p61, %p62
      %p64 = scmp.ne.s32.totalorder %s52, %s53
      %p65 = scmp.eq.s32.totalorder %s22, 1
      %p66 = por %p64, %p65
      %p68 = scmp.ne.s32.totalorder %s53, %s67
      %p69 = scmp.eq.s32.totalorder %s22, 0
      %p70 = por %p68, %p69
      %s72 = sadd.s32 %s71, 1
      %p75 = scmp.eq.s32.totalorder %s16, 1
      %p76 = scmp.ne.s32.totalorder %s71, %s73
      %p77 = scmp.eq.s32.totalorder %s16, 0
      %p78 = por %p76, %p77
      %p79 = scmp.ne.s32.totalorder %s71, %s73
      %p80 = scmp.eq.s32.totalorder %s21, 1
      %p81 = por %p79, %p80
      %p82 = scmp.ne.s32.totalorder %s73, %s74
      %p83 = scmp.eq.s32.totalorder %s21, 0
      %p84 = por %p82, %p83
      %p85 = scmp.ne.s32.totalorder %s73, %s74
      %p86 = scmp.eq.s32.totalorder %s22, 1
      %p87 = por %p85, %p86
      %p89 = scmp.ne.s32.totalorder %s74, %s88
      %p90 = scmp.eq.s32.totalorder %s22, 0
      %p91 = por %p89, %p90
      %s93 = sadd.s32 %s92, 1
      %p96 = scmp.eq.s32.totalorder %s16, 1
      %p97 = scmp.ne.s32.totalorder %s92, %s94
      %p98 = scmp.eq.s32.totalorder %s16, 0
      %p99 = por %p97, %p98
      %p100 = scmp.ne.s32.totalorder %s92, %s94
      %p101 = scmp.eq.s32.totalorder %s21, 1
      %p102 = por %p100, %p101
      %p103 = scmp.ne.s32.totalorder %s94, %s95
      %p104 = scmp.eq.s32.totalorder %s21, 0
      %p105 = por %p103, %p104
      %p106 = scmp.ne.s32.totalorder %s94, %s95
      %p107 = scmp.eq.s32.totalorder %s22, 1
      %p108 = por %p106, %p107
      %p110 = scmp.ne.s32.totalorder %s95, %s109
      %p111 = scmp.eq.s32.totalorder %s22, 0
      %p112 = por %p110, %p111
      %s114 = sadd.s32 %s113, 1
      %p117 = scmp.eq.s32.totalorder %s16, 1
      %p118 = scmp.ne.s32.totalorder %s113, %s115
      %p119 = scmp.eq.s32.totalorder %s16, 0
      %p120 = por %p118, %p119
      %p121 = scmp.ne.s32.totalorder %s113, %s115
      %p122 = scmp.eq.s32.totalorder %s21, 1
      %p123 = por %p121, %p122
      %p124 = scmp.ne.s32.totalorder %s115, %s116
      %p125 = scmp.eq.s32.totalorder %s21, 0
      %p126 = por %p124, %p125
      %p127 = scmp.ne.s32.totalorder %s115, %s116
      %p128 = scmp.eq.s32.totalorder %s22, 1
      %p129 = por %p127, %p128
      %p131 = scmp.ne.s32.totalorder %s116, %s130
      %p132 = scmp.eq.s32.totalorder %s22, 0
      %p133 = por %p131, %p132
      %s135 = sadd.s32 %s134, 1
      %p138 = scmp.eq.s32.totalorder %s16, 1
      %p139 = scmp.ne.s32.totalorder %s134, %s136
      %p140 = scmp.eq.s32.totalorder %s16, 0
      %p141 = por %p139, %p140
      %p142 = scmp.ne.s32.totalorder %s134, %s136
      %p143 = scmp.eq.s32.totalorder %s21, 1
      %p144 = por %p142, %p143
      %p145 = scmp.ne.s32.totalorder %s136, %s137
      %p146 = scmp.eq.s32.totalorder %s21, 0
      %p147 = por %p145, %p146
      %p148 = scmp.ne.s32.totalorder %s136, %s137
      %p149 = scmp.eq.s32.totalorder %s22, 1
      %p150 = por %p148, %p149
      %p152 = scmp.ne.s32.totalorder %s137, %s151
      %p153 = scmp.eq.s32.totalorder %s22, 0
      %p154 = por %p152, %p153
      %s156 = sadd.s32 %s155, 1
      %p159 = scmp.eq.s32.totalorder %s16, 1
      %p160 = scmp.ne.s32.totalorder %s155, %s157
      %p161 = scmp.eq.s32.totalorder %s16, 0
      %p162 = por %p160, %p161
      %p163 = scmp.ne.s32.totalorder %s155, %s157
      %p164 = scmp.eq.s32.totalorder %s21, 1
      %p165 = por %p163, %p164
      %p166 = scmp.ne.s32.totalorder %s157, %s158
      %p167 = scmp.eq.s32.totalorder %s21, 0
      %p168 = por %p166, %p167
      %p169 = scmp.ne.s32.totalorder %s157, %s158
      %p170 = scmp.eq.s32.totalorder %s22, 1
      %p171 = por %p169, %p170
      %p173 = scmp.ne.s32.totalorder %s158, %s172
      %p174 = scmp.eq.s32.totalorder %s22, 0
      %p175 = por %p173, %p174
      %s176 = ssub.s32 %s16, %s23
      %p177 = scmp.eq.s32.totalorder %s176, 0
      %s179 = sadd.s32 %s178, 1
      %s180 = scalar_select %p177, %s178, %s179
      %p183 = pneg %p177
      %p184 = scmp.eq.s32.totalorder %s16, 1
      %p185 = por %p183, %p184
      %p186 = scmp.ne.s32.totalorder %s178, %s181
      %p187 = scmp.eq.s32.totalorder %s16, 0
      %p188 = por %p186, %p187
      %p189 = scmp.ne.s32.totalorder %s178, %s181
      %p190 = scmp.eq.s32.totalorder %s21, 1
      %p191 = por %p189, %p190
      %p192 = scmp.ne.s32.totalorder %s181, %s182
      %p193 = scmp.eq.s32.totalorder %s21, 0
      %p194 = por %p192, %p193
      %p195 = scmp.ne.s32.totalorder %s181, %s182
      %p196 = scmp.eq.s32.totalorder %s22, 1
      %p197 = por %p195, %p196
      %p199 = scmp.ne.s32.totalorder %s182, %s198
      %p200 = scmp.eq.s32.totalorder %s22, 0
      %p201 = por %p199, %p200
      %p202 = scmp.le.s32.totalorder 1, %s16
      %p203 = scmp.lt.s32.totalorder %s16, 3
      %p204 = pnand %p202, %p203
      %p205 = pneg %p204
      // Predicated region
      $region9: #{bottleneck_forward_nhwc.1} parent=5 // pred_check
        _
      $region10: #{bottleneck_forward_nhwc.1} parent=5 // pred_check_branch
        %207 = sbr.rel (%p204) target = $region12
      $region11: #{bottleneck_forward_nhwc.1} parent=5 // pred_region
        %s208 = ssub.s32 %s16, 1
        // Predicated region
        $region13: #{bottleneck_forward_nhwc.1} parent=11 // pred_check
          %p209 = pneg %p63
        $region14: #{bottleneck_forward_nhwc.1} parent=11 // pred_check_branch
          %211 = sbr.rel (%p209) target = $region16
        $region15: #{bottleneck_forward_nhwc.1} parent=11 // pred_region
          _
        $region16: #{bottleneck_forward_nhwc.1} parent=11 // pred_fallthru
          _
        // Predicated region
        $region17: #{bottleneck_forward_nhwc.1} parent=11 // pred_check
          %p212 = pneg %p84
        $region18: #{bottleneck_forward_nhwc.1} parent=11 // pred_check_branch
          %214 = sbr.rel (%p212) target = $region20
        $region19: #{bottleneck_forward_nhwc.1} parent=11 // pred_region
          _
        $region20: #{bottleneck_forward_nhwc.1} parent=11 // pred_fallthru
          _
        // Predicated region
        $region21: #{bottleneck_forward_nhwc.1} parent=11 // pred_check
          %p215 = pneg %p105
        $region22: #{bottleneck_forward_nhwc.1} parent=11 // pred_check_branch
          %217 = sbr.rel (%p215) target = $region24
        $region23: #{bottleneck_forward_nhwc.1} parent=11 // pred_region
          _
        $region24: #{bottleneck_forward_nhwc.1} parent=11 // pred_fallthru
          _
        // Predicated region
        $region25: #{bottleneck_forward_nhwc.1} parent=11 // pred_check
          %p218 = pneg %p126
        $region26: #{bottleneck_forward_nhwc.1} parent=11 // pred_check_branch
          %220 = sbr.rel (%p218) target = $region28
        $region27: #{bottleneck_forward_nhwc.1} parent=11 // pred_region
          _
        $region28: #{bottleneck_forward_nhwc.1} parent=11 // pred_fallthru
          _
        // Predicated region
        $region29: #{bottleneck_forward_nhwc.1} parent=11 // pred_check
          %p221 = pneg %p147
        $region30: #{bottleneck_forward_nhwc.1} parent=11 // pred_check_branch
          %223 = sbr.rel (%p221) target = $region32
        $region31: #{bottleneck_forward_nhwc.1} parent=11 // pred_region
          _
        $region32: #{bottleneck_forward_nhwc.1} parent=11 // pred_fallthru
          _
        // Predicated region
        $region33: #{bottleneck_forward_nhwc.1} parent=11 // pred_check
          %p224 = pneg %p168
        $region34: #{bottleneck_forward_nhwc.1} parent=11 // pred_check_branch
          %226 = sbr.rel (%p224) target = $region36
        $region35: #{bottleneck_forward_nhwc.1} parent=11 // pred_region
          _
        $region36: #{bottleneck_forward_nhwc.1} parent=11 // pred_fallthru
          _
      $region12: #{bottleneck_forward_nhwc.1} parent=5 // pred_fallthru
        _
      %p227 = scmp.lt.s32.totalorder %s16, 2
      // Predicated region
      $region37: #{bottleneck_forward_nhwc.1} parent=5 // pred_check
        %p228 = pneg %p227
      $region38: #{bottleneck_forward_nhwc.1} parent=5 // pred_check_branch
        %230 = sbr.rel (%p228) target = $region40
      $region39: #{bottleneck_forward_nhwc.1} parent=5 // pred_region
        // Predicated region
        $region41: #{bottleneck_forward_nhwc.1} parent=39 // pred_check
          %p231 = pneg %p36
        $region42: #{bottleneck_forward_nhwc.1} parent=39 // pred_check_branch
          %233 = sbr.rel (%p231) target = $region44
        $region43: #{bottleneck_forward_nhwc.1} parent=39 // pred_region
          %p234 = scmp.lt.s32.totalorder %s16, 1
          %s235 = scalar_select %p234, %s16, 1
          %s236 = smul.addr %s235, 32
          %s237 = smul.addr %s236, 8
          %s238 = scalar_lea.vmem %s0, %s237
        $region44: #{bottleneck_forward_nhwc.1} parent=39 // pred_fallthru
          _
      $region40: #{bottleneck_forward_nhwc.1} parent=5 // pred_fallthru
        _
      %p239 = scmp.le.s32.totalorder 1, %s16
      %p240 = scmp.lt.s32.totalorder %s16, 3
      %p241 = pnand %p239, %p240
      %p242 = pneg %p241
      // Predicated region
      $region45: #{bottleneck_forward_nhwc.1} parent=5 // pred_check
        _
      $region46: #{bottleneck_forward_nhwc.1} parent=5 // pred_check_branch
        %244 = sbr.rel (%p241) target = $region48
      $region47: #{bottleneck_forward_nhwc.1} parent=5 // pred_region
        %s245 = ssub.s32 %s16, 1
        %p246 = scmp.lt.s32.totalorder %s21, 1
        %s247 = scalar_select %p246, %s21, 1
        %s248 = smul.addr %s247, 32
        %s249 = smul.addr %s248, 8
        %s250 = scalar_lea.vmem %s0, %s249
        %p251 = pneg %p42
        %p252 = pneg %p39
        %p253 = pneg %p63
        %p254 = pneg %p60
        %p255 = pneg %p84
        %p256 = pneg %p81
        %p257 = pneg %p105
        %p258 = pneg %p102
        %p259 = pneg %p126
        %p260 = pneg %p123
        %p261 = pneg %p147
        %p262 = pneg %p144
        %p263 = pneg %p168
        %p264 = pneg %p165
        %p265 = pneg %p194
        %p266 = pneg %p191
        %s267 = sand.u32 %s181, 1
        %s268 = scalar_lea.sflag [#allocation5], %s267
        %s269 = sand.u32 %s181, 1
        %s270 = smul.addr %s269, 256
        %s271 = scalar_lea.vmem [#allocation4], %s270
        %p272 = scmp.lt.s32.totalorder %s21, 1
        %s273 = scalar_select %p272, %s21, 1
        %s274 = smul.addr %s273, 32
        %s275 = smul.addr %s274, 8
        %s276 = scalar_lea.vmem %s0, %s275
        %v280 = vld [vmem:[%s276] sm:$0xff]
        %v281 = vld [vmem:[%s276 + $0x8] sm:$0xff]
        %v282 = vld [vmem:[%s276 + $0x10] sm:$0xff]
        %v283 = vld [vmem:[%s276 + $0x18] sm:$0xff]
        %v284 = vld [vmem:[%s276 + $0x20] sm:$0xff]
        %v285 = vld [vmem:[%s276 + $0x28] sm:$0xff]
        %v286 = vld [vmem:[%s276 + $0x30] sm:$0xff]
        %v287 = vld [vmem:[%s276 + $0x38] sm:$0xff]
        %v288 = vld [vmem:[%s276 + $0x40] sm:$0xff]
        %v289 = vld [vmem:[%s276 + $0x48] sm:$0xff]
        %v290 = vld [vmem:[%s276 + $0x50] sm:$0xff]
        %v291 = vld [vmem:[%s276 + $0x58] sm:$0xff]
        %v292 = vld [vmem:[%s276 + $0x60] sm:$0xff]
        %v293 = vld [vmem:[%s276 + $0x68] sm:$0xff]
        %v294 = vld [vmem:[%s276 + $0x70] sm:$0xff]
        %v295 = vld [vmem:[%s276 + $0x78] sm:$0xff]
        %v296 = vld [vmem:[%s276 + $0x80] sm:$0xff]
        %v297 = vld [vmem:[%s276 + $0x88] sm:$0xff]
        %v298 = vld [vmem:[%s276 + $0x90] sm:$0xff]
        %v299 = vld [vmem:[%s276 + $0x98] sm:$0xff]
        %v300 = vld [vmem:[%s276 + $0xa0] sm:$0xff]
        %v301 = vld [vmem:[%s276 + $0xa8] sm:$0xff]
        %v302 = vld [vmem:[%s276 + $0xb0] sm:$0xff]
        %v303 = vld [vmem:[%s276 + $0xb8] sm:$0xff]
        %v304 = vld [vmem:[%s276 + $0xc0] sm:$0xff]
        %v305 = vld [vmem:[%s276 + $0xc8] sm:$0xff]
        %v306 = vld [vmem:[%s276 + $0xd0] sm:$0xff]
        %v307 = vld [vmem:[%s276 + $0xd8] sm:$0xff]
        %v308 = vld [vmem:[%s276 + $0xe0] sm:$0xff]
        %v309 = vld [vmem:[%s276 + $0xe8] sm:$0xff]
        %v310 = vld [vmem:[%s276 + $0xf0] sm:$0xff]
        %v311 = vld [vmem:[%s276 + $0xf8] sm:$0xff]
        %312 = vst [vmem:[#allocation2] sm:$0xff] 0
        %313 = vst [vmem:[#allocation2 + $0x8] sm:$0xff] 0
        %314 = vst [vmem:[#allocation2 + $0x90] sm:$0xff] 0
        %315 = vst [vmem:[#allocation2 + $0x98] sm:$0xff] 0
        %v316 = vpack.c.bf16 %v281, %v280
        %v317 = vpack.c.bf16 %v283, %v282
        %v318 = vpack.c.bf16 %v285, %v284
        %v319 = vpack.c.bf16 %v287, %v286
        %v320 = vpack.c.bf16 %v289, %v288
        %v321 = vpack.c.bf16 %v291, %v290
        %v322 = vpack.c.bf16 %v293, %v292
        %v323 = vpack.c.bf16 %v295, %v294
        %v324 = vpack.c.bf16 %v297, %v296
        %v325 = vpack.c.bf16 %v299, %v298
        %v326 = vpack.c.bf16 %v301, %v300
        %v327 = vpack.c.bf16 %v303, %v302
        %v328 = vpack.c.bf16 %v305, %v304
        %v329 = vpack.c.bf16 %v307, %v306
        %v330 = vpack.c.bf16 %v309, %v308
        %v331 = vpack.c.bf16 %v311, %v310
        %v332 = vld [vmem:[%s1] sm:$0xf]
        %v333 = vld [vmem:[%s1 + $0x4] sm:$0xf]
        %v334 = vld [vmem:[%s1 + $0x8] sm:$0xf]
        %v335 = vld [vmem:[%s1 + $0xc] sm:$0xf]
        %v336 = vld [vmem:[%s1 + $0x10] sm:$0xf]
        %v337 = vld [vmem:[%s1 + $0x14] sm:$0xf]
        %v338 = vld [vmem:[%s1 + $0x18] sm:$0xf]
        %v339 = vld [vmem:[%s1 + $0x1c] sm:$0xf]
        %v340 = vld [vmem:[%s1 + $0x20] sm:$0xf]
        %v341 = vld [vmem:[%s1 + $0x24] sm:$0xf]
        %v342 = vld [vmem:[%s1 + $0x28] sm:$0xf]
        %v343 = vld [vmem:[%s1 + $0x2c] sm:$0xf]
        %v344 = vld [vmem:[%s1 + $0x30] sm:$0xf]
        %v345 = vld [vmem:[%s1 + $0x34] sm:$0xf]
        %v346 = vld [vmem:[%s1 + $0x38] sm:$0xf]
        %v347 = vld [vmem:[%s1 + $0x3c] sm:$0xf]
        %v348 = vld [vmem:[%s2] sm:$0x1]
        %v350 = vlaneseq
        %v351 = vshrl.u32 %v350, 7
        %v352 = vsub.s32 0, %v351
        %v353 = vrot.slane %v348, %v352
        %v371 = vunpack.c.l.b16 %v332
        %v372 = vunpack.c.l.b16 %v333
        %v373 = vunpack.c.l.b16 %v334
        %v374 = vunpack.c.l.b16 %v335
        %v375 = vunpack.c.l.b16 %v336
        %v376 = vunpack.c.l.b16 %v337
        %v377 = vunpack.c.l.b16 %v338
        %v378 = vunpack.c.l.b16 %v339
        %v379 = vunpack.c.l.b16 %v340
        %v380 = vunpack.c.l.b16 %v341
        %v381 = vunpack.c.l.b16 %v342
        %v382 = vunpack.c.l.b16 %v343
        %v383 = vunpack.c.l.b16 %v344
        %v384 = vunpack.c.l.b16 %v345
        %v385 = vunpack.c.l.b16 %v346
        %v386 = vunpack.c.l.b16 %v347
        %v387 = vpack.c.b16 %v372, %v371
        %v388 = vpack.c.b16 %v374, %v373
        %v389 = vpack.c.b16 %v376, %v375
        %v390 = vpack.c.b16 %v378, %v377
        %v391 = vpack.c.b16 %v380, %v379
        %v392 = vpack.c.b16 %v382, %v381
        %v393 = vpack.c.b16 %v384, %v383
        %v394 = vpack.c.b16 %v386, %v385
        %403 = vmatprep.subr.bf16.mxu0 0
        %404 = vmatpush1.bf16.msra.mxu0 %v387
        %405 = vmatprep.subr.bf16.mxu0 0
        %406 = vmatpush1.bf16.msra.mxu0 %v388
        %407 = vmatprep.subr.bf16.mxu0 0
        %408 = vmatpush1.bf16.msra.mxu0 %v389
        %409 = vmatprep.subr.bf16.mxu0 0
        %410 = vmatpush1.bf16.msra.mxu0 %v390
        %411 = vmatprep.subr.bf16.mxu0 0
        %412 = vmatpush1.bf16.msra.mxu0 %v391
        %413 = vmatprep.subr.bf16.mxu0 0
        %414 = vmatpush1.bf16.msra.mxu0 %v392
        %415 = vmatprep.subr.bf16.mxu0 0
        %416 = vmatpush1.bf16.msra.mxu0 %v393
        %417 = vmatprep.subr.bf16.mxu0 0
        %418 = vmatpush1.bf16.msra.mxu0 %v394
        %419 = vmatprep.subr.bf16.mxu0 0
        %420 = vmatpush1.bf16.msra.mxu0 0
        %421 = vmatprep.subr.bf16.mxu0 0
        %422 = vmatpush1.bf16.msra.mxu0 0
        %423 = vmatprep.subr.bf16.mxu0 0
        %424 = vmatpush1.bf16.msra.mxu0 0
        %425 = vmatprep.subr.bf16.mxu0 0
        %426 = vmatpush1.bf16.msra.mxu0 0
        %427 = vmatprep.subr.bf16.mxu0 0
        %428 = vmatpush1.bf16.msra.mxu0 0
        %429 = vmatprep.subr.bf16.mxu0 0
        %430 = vmatpush1.bf16.msra.mxu0 0
        %431 = vmatprep.subr.bf16.mxu0 0
        %432 = vmatpush1.bf16.msra.mxu0 0
        %433 = vmatprep.subr.bf16.mxu0 0
        %434 = vmatpush1.bf16.msra.mxu0 0
        %435 = vmatprep.mubr.bf16.mxu0 0
        %436 = vmatmul.mubr.bf16.gmra.mrb[0].mxu0 %v316
        %v437 = vpop.f32.mrb[0].mxu0
        %v438 = vadd.f32 %v353, %v437
        %v439 = vpop.f32.mrb[0].mxu0
        %v440 = vpop.f32.mrb[0].mxu0
        %v441 = vadd.f32 %v353, %v440
        %v442 = vpop.f32.mrb[0].mxu0
        %443 = vmatprep.mubr.bf16.mxu0 0
        %444 = vmatmul.mubr.bf16.gmra.mrb[0].mxu0 %v317
        %v445 = vpop.f32.mrb[0].mxu0
        %v446 = vadd.f32 %v353, %v445
        %v447 = vpop.f32.mrb[0].mxu0
        %v448 = vpop.f32.mrb[0].mxu0
        %v449 = vadd.f32 %v353, %v448
        %v450 = vpop.f32.mrb[0].mxu0
        %451 = vmatprep.mubr.bf16.mxu0 0
        %452 = vmatmul.mubr.bf16.gmra.mrb[0].mxu0 %v318
        %v453 = vpop.f32.mrb[0].mxu0
        %v454 = vadd.f32 %v353, %v453
        %v455 = vpop.f32.mrb[0].mxu0
        %v456 = vpop.f32.mrb[0].mxu0
        %v457 = vadd.f32 %v353, %v456
        %v458 = vpop.f32.mrb[0].mxu0
        %459 = vmatprep.mubr.bf16.mxu0 0
        %460 = vmatmul.mubr.bf16.gmra.mrb[0].mxu0 %v319
        %v461 = vpop.f32.mrb[0].mxu0
        %v462 = vadd.f32 %v353, %v461
        %v463 = vpop.f32.mrb[0].mxu0
        %v464 = vpop.f32.mrb[0].mxu0
        %v465 = vadd.f32 %v353, %v464
        %v466 = vpop.f32.mrb[0].mxu0
        %467 = vmatprep.mubr.bf16.mxu0 0
        %468 = vmatmul.mubr.bf16.gmra.mrb[0].mxu0 %v320
        %v469 = vpop.f32.mrb[0].mxu0
        %v470 = vadd.f32 %v353, %v469
        %v471 = vpop.f32.mrb[0].mxu0
        %v472 = vpop.f32.mrb[0].mxu0
        %v473 = vadd.f32 %v353, %v472
        %v474 = vpop.f32.mrb[0].mxu0
        %475 = vmatprep.mubr.bf16.mxu0 0
        %476 = vmatmul.mubr.bf16.gmra.mrb[0].mxu0 %v321
        %v477 = vpop.f32.mrb[0].mxu0
        %v478 = vadd.f32 %v353, %v477
        %v479 = vpop.f32.mrb[0].mxu0
        %v480 = vpop.f32.mrb[0].mxu0
        %v481 = vadd.f32 %v353, %v480
        %v482 = vpop.f32.mrb[0].mxu0
        %483 = vmatprep.mubr.bf16.mxu0 0
        %484 = vmatmul.mubr.bf16.gmra.mrb[0].mxu0 %v322
        %v485 = vpop.f32.mrb[0].mxu0
        %v486 = vadd.f32 %v353, %v485
        %v487 = vpop.f32.mrb[0].mxu0
        %v488 = vpop.f32.mrb[0].mxu0
        %v489 = vadd.f32 %v353, %v488
        %v490 = vpop.f32.mrb[0].mxu0
        %491 = vmatprep.mubr.bf16.mxu0 0
        %492 = vmatmul.mubr.bf16.gmra.mrb[0].mxu0 %v323
        %v493 = vpop.f32.mrb[0].mxu0
        %v494 = vadd.f32 %v353, %v493
        %v495 = vpop.f32.mrb[0].mxu0
        %v496 = vpop.f32.mrb[0].mxu0
        %v497 = vadd.f32 %v353, %v496
        %v498 = vpop.f32.mrb[0].mxu0
        %499 = vmatprep.mubr.bf16.mxu0 0
        %500 = vmatmul.mubr.bf16.gmra.mrb[0].mxu0 %v324
        %v501 = vpop.f32.mrb[0].mxu0
        %v502 = vadd.f32 %v353, %v501
        %v503 = vpop.f32.mrb[0].mxu0
        %v504 = vpop.f32.mrb[0].mxu0
        %v505 = vadd.f32 %v353, %v504
        %v506 = vpop.f32.mrb[0].mxu0
        %507 = vmatprep.mubr.bf16.mxu0 0
        %508 = vmatmul.mubr.bf16.gmra.mrb[0].mxu0 %v325
        %v509 = vpop.f32.mrb[0].mxu0
        %v510 = vadd.f32 %v353, %v509
        %v511 = vpop.f32.mrb[0].mxu0
        %v512 = vpop.f32.mrb[0].mxu0
        %v513 = vadd.f32 %v353, %v512
        %v514 = vpop.f32.mrb[0].mxu0
        %515 = vmatprep.mubr.bf16.mxu0 0
        %516 = vmatmul.mubr.bf16.gmra.mrb[0].mxu0 %v326
        %v517 = vpop.f32.mrb[0].mxu0
        %v518 = vadd.f32 %v353, %v517
        %v519 = vpop.f32.mrb[0].mxu0
        %v520 = vpop.f32.mrb[0].mxu0
        %v521 = vadd.f32 %v353, %v520
        %v522 = vpop.f32.mrb[0].mxu0
        %523 = vmatprep.mubr.bf16.mxu0 0
        %524 = vmatmul.mubr.bf16.gmra.mrb[0].mxu0 %v327
        %v525 = vpop.f32.mrb[0].mxu0
        %v526 = vadd.f32 %v353, %v525
        %v527 = vpop.f32.mrb[0].mxu0
        %v528 = vpop.f32.mrb[0].mxu0
        %v529 = vadd.f32 %v353, %v528
        %v530 = vpop.f32.mrb[0].mxu0
        %531 = vmatprep.mubr.bf16.mxu0 0
        %532 = vmatmul.mubr.bf16.gmra.mrb[0].mxu0 %v328
        %v533 = vpop.f32.mrb[0].mxu0
        %v534 = vadd.f32 %v353, %v533
        %v535 = vpop.f32.mrb[0].mxu0
        %v536 = vpop.f32.mrb[0].mxu0
        %v537 = vadd.f32 %v353, %v536
        %v538 = vpop.f32.mrb[0].mxu0
        %539 = vmatprep.mubr.bf16.mxu0 0
        %540 = vmatmul.mubr.bf16.gmra.mrb[0].mxu0 %v329
        %v541 = vpop.f32.mrb[0].mxu0
        %v542 = vadd.f32 %v353, %v541
        %v543 = vpop.f32.mrb[0].mxu0
        %v544 = vpop.f32.mrb[0].mxu0
        %v545 = vadd.f32 %v353, %v544
        %v546 = vpop.f32.mrb[0].mxu0
        %547 = vmatprep.mubr.bf16.mxu0 0
        %548 = vmatmul.mubr.bf16.gmra.mrb[0].mxu0 %v330
        %v549 = vpop.f32.mrb[0].mxu0
        %v550 = vadd.f32 %v353, %v549
        %v551 = vpop.f32.mrb[0].mxu0
        %v552 = vpop.f32.mrb[0].mxu0
        %v553 = vadd.f32 %v353, %v552
        %v554 = vpop.f32.mrb[0].mxu0
        %555 = vmatprep.mubr.bf16.mxu0 0
        %556 = vmatmul.mubr.bf16.gmra.mrb[0].mxu0 %v331
        %v557 = vpop.f32.mrb[0].mxu0
        %v558 = vadd.f32 %v353, %v557
        %v559 = vpop.f32.mrb[0].mxu0
        %v560 = vpop.f32.mrb[0].mxu0
        %v561 = vadd.f32 %v353, %v560
        %v562 = vpop.f32.mrb[0].mxu0
        %563 = vdwg.mxu0
        %v564 = vmax.f32 %v438, 0.0
        %v565 = vmax.f32 %v441, 0.0
        %v566 = vmax.f32 %v446, 0.0
        %v567 = vmax.f32 %v449, 0.0
        %v568 = vmax.f32 %v454, 0.0
        %v569 = vmax.f32 %v457, 0.0
        %v570 = vmax.f32 %v462, 0.0
        %v571 = vmax.f32 %v465, 0.0
        %v572 = vmax.f32 %v470, 0.0
        %v573 = vmax.f32 %v473, 0.0
        %v574 = vmax.f32 %v478, 0.0
        %v575 = vmax.f32 %v481, 0.0
        %v576 = vmax.f32 %v486, 0.0
        %v577 = vmax.f32 %v489, 0.0
        %v578 = vmax.f32 %v494, 0.0
        %v579 = vmax.f32 %v497, 0.0
        %v580 = vmax.f32 %v502, 0.0
        %v581 = vmax.f32 %v505, 0.0
        %v582 = vmax.f32 %v510, 0.0
        %v583 = vmax.f32 %v513, 0.0
        %v584 = vmax.f32 %v518, 0.0
        %v585 = vmax.f32 %v521, 0.0
        %v586 = vmax.f32 %v526, 0.0
        %v587 = vmax.f32 %v529, 0.0
        %v588 = vmax.f32 %v534, 0.0
        %v589 = vmax.f32 %v537, 0.0
        %v590 = vmax.f32 %v542, 0.0
        %v591 = vmax.f32 %v545, 0.0
        %v592 = vmax.f32 %v550, 0.0
        %v593 = vmax.f32 %v553, 0.0
        %v594 = vmax.f32 %v558, 0.0
        %v595 = vmax.f32 %v561, 0.0
        %v596 = vpack.c.bf16 %v565, %v564
        %v597 = vpack.c.bf16 %v567, %v566
        %v598 = vpack.c.bf16 %v569, %v568
        %v599 = vpack.c.bf16 %v571, %v570
        %v600 = vpack.c.bf16 %v573, %v572
        %v601 = vpack.c.bf16 %v575, %v574
        %v602 = vpack.c.bf16 %v577, %v576
        %v603 = vpack.c.bf16 %v579, %v578
        %v604 = vpack.c.bf16 %v581, %v580
        %v605 = vpack.c.bf16 %v583, %v582
        %v606 = vpack.c.bf16 %v585, %v584
        %v607 = vpack.c.bf16 %v587, %v586
        %v608 = vpack.c.bf16 %v589, %v588
        %v609 = vpack.c.bf16 %v591, %v590
        %v610 = vpack.c.bf16 %v593, %v592
        %v611 = vpack.c.bf16 %v595, %v594
        %612 = vst [vmem:[#allocation2 + $0x10] sm:$0xff] %v596
        %613 = vst [vmem:[#allocation2 + $0x18] sm:$0xff] %v597
        %614 = vst [vmem:[#allocation2 + $0x20] sm:$0xff] %v598
        %615 = vst [vmem:[#allocation2 + $0x28] sm:$0xff] %v599
        %616 = vst [vmem:[#allocation2 + $0x30] sm:$0xff] %v600
        %617 = vst [vmem:[#allocation2 + $0x38] sm:$0xff] %v601
        %618 = vst [vmem:[#allocation2 + $0x40] sm:$0xff] %v602
        %619 = vst [vmem:[#allocation2 + $0x48] sm:$0xff] %v603
        %620 = vst [vmem:[#allocation2 + $0x50] sm:$0xff] %v604
        %621 = vst [vmem:[#allocation2 + $0x58] sm:$0xff] %v605
        %622 = vst [vmem:[#allocation2 + $0x60] sm:$0xff] %v606
        %623 = vst [vmem:[#allocation2 + $0x68] sm:$0xff] %v607
        %624 = vst [vmem:[#allocation2 + $0x70] sm:$0xff] %v608
        %625 = vst [vmem:[#allocation2 + $0x78] sm:$0xff] %v609
        %626 = vst [vmem:[#allocation2 + $0x80] sm:$0xff] %v610
        %627 = vst [vmem:[#allocation2 + $0x88] sm:$0xff] %v611
        %v628 = vlaneseq
        %v629 = vshrl.u32 %v628, 7
        %v630 = vadd.s32 %v629, 8
        %v631 = vadd.s32 %v629, 16
        %v632 = vadd.s32 %v629, 24
        %v633 = vadd.s32 %v629, 32
        %v634 = vadd.s32 %v629, 40
        %v635 = vadd.s32 %v629, 48
        %v636 = vadd.s32 %v629, 56
        %v637 = vadd.s32 %v629, 64
        %v638 = vadd.s32 %v629, 72
        %v639 = vadd.s32 %v629, 80
        %v640 = vadd.s32 %v629, 88
        %v641 = vadd.s32 %v629, 96
        %v642 = vadd.s32 %v629, 104
        %v643 = vadd.s32 %v629, 112
        %v644 = vadd.s32 %v629, 120
        %v645 = vadd.s32 %v629, 128
        %v646 = vadd.s32 %v629, 136
        %v647 = vadd.s32 %v629, 144
        %v648 = vadd.s32 %v629, 152
        %v649 = vadd.s32 %v629, 160
        %v650 = vadd.s32 %v629, 168
        %v651 = vadd.s32 %v629, 176
        %v652 = vadd.s32 %v629, 184
        %v653 = vadd.s32 %v629, 192
        %v654 = vadd.s32 %v629, 200
        %v655 = vadd.s32 %v629, 208
        %v656 = vadd.s32 %v629, 216
        %v657 = vadd.s32 %v629, 224
        %v658 = vadd.s32 %v629, 232
        %v659 = vadd.s32 %v629, 240
        %v660 = vadd.s32 %v629, 248
        %vm661 = vcmp.lt.s32.totalorder %v629, 0
        %v662 = vsub.s32 0, %v629
        %v663 = vsel %vm661, %v662, %v629
        %v664 = vshrl.u32 %v663, 4
        %v665 = vand.u32 %v663, 15
        %v666 = vsub.s32 0, %v665
        %v667 = vsel %vm661, %v666, %v665
        %vm668 = vcmp.lt.s32.totalorder %v630, 0
        %v669 = vsub.s32 0, %v630
        %v670 = vsel %vm668, %v669, %v630
        %v671 = vshrl.u32 %v670, 4
        %v672 = vand.u32 %v670, 15
        %v673 = vsub.s32 0, %v672
        %v674 = vsel %vm668, %v673, %v672
        %vm675 = vcmp.lt.s32.totalorder %v631, 0
        %v676 = vsub.s32 0, %v631
        %v677 = vsel %vm675, %v676, %v631
        %v678 = vshrl.u32 %v677, 4
        %v679 = vand.u32 %v677, 15
        %v680 = vsub.s32 0, %v679
        %v681 = vsel %vm675, %v680, %v679
        %vm682 = vcmp.lt.s32.totalorder %v632, 0
        %v683 = vsub.s32 0, %v632
        %v684 = vsel %vm682, %v683, %v632
        %v685 = vshrl.u32 %v684, 4
        %v686 = vand.u32 %v684, 15
        %v687 = vsub.s32 0, %v686
        %v688 = vsel %vm682, %v687, %v686
        %vm689 = vcmp.lt.s32.totalorder %v633, 0
        %v690 = vsub.s32 0, %v633
        %v691 = vsel %vm689, %v690, %v633
        %v692 = vshrl.u32 %v691, 4
        %v693 = vand.u32 %v691, 15
        %v694 = vsub.s32 0, %v693
        %v695 = vsel %vm689, %v694, %v693
        %vm696 = vcmp.lt.s32.totalorder %v634, 0
        %v697 = vsub.s32 0, %v634
        %v698 = vsel %vm696, %v697, %v634
        %v699 = vshrl.u32 %v698, 4
        %v700 = vand.u32 %v698, 15
        %v701 = vsub.s32 0, %v700
        %v702 = vsel %vm696, %v701, %v700
        %vm703 = vcmp.lt.s32.totalorder %v635, 0
        %v704 = vsub.s32 0, %v635
        %v705 = vsel %vm703, %v704, %v635
        %v706 = vshrl.u32 %v705, 4
        %v707 = vand.u32 %v705, 15
        %v708 = vsub.s32 0, %v707
        %v709 = vsel %vm703, %v708, %v707
        %vm710 = vcmp.lt.s32.totalorder %v636, 0
        %v711 = vsub.s32 0, %v636
        %v712 = vsel %vm710, %v711, %v636
        %v713 = vshrl.u32 %v712, 4
        %v714 = vand.u32 %v712, 15
        %v715 = vsub.s32 0, %v714
        %v716 = vsel %vm710, %v715, %v714
        %vm717 = vcmp.lt.s32.totalorder %v637, 0
        %v718 = vsub.s32 0, %v637
        %v719 = vsel %vm717, %v718, %v637
        %v720 = vshrl.u32 %v719, 4
        %v721 = vand.u32 %v719, 15
        %v722 = vsub.s32 0, %v721
        %v723 = vsel %vm717, %v722, %v721
        %vm724 = vcmp.lt.s32.totalorder %v638, 0
        %v725 = vsub.s32 0, %v638
        %v726 = vsel %vm724, %v725, %v638
        %v727 = vshrl.u32 %v726, 4
        %v728 = vand.u32 %v726, 15
        %v729 = vsub.s32 0, %v728
        %v730 = vsel %vm724, %v729, %v728
        %vm731 = vcmp.lt.s32.totalorder %v639, 0
        %v732 = vsub.s32 0, %v639
        %v733 = vsel %vm731, %v732, %v639
        %v734 = vshrl.u32 %v733, 4
        %v735 = vand.u32 %v733, 15
        %v736 = vsub.s32 0, %v735
        %v737 = vsel %vm731, %v736, %v735
        %vm738 = vcmp.lt.s32.totalorder %v640, 0
        %v739 = vsub.s32 0, %v640
        %v740 = vsel %vm738, %v739, %v640
        %v741 = vshrl.u32 %v740, 4
        %v742 = vand.u32 %v740, 15
        %v743 = vsub.s32 0, %v742
        %v744 = vsel %vm738, %v743, %v742
        %vm745 = vcmp.lt.s32.totalorder %v641, 0
        %v746 = vsub.s32 0, %v641
        %v747 = vsel %vm745, %v746, %v641
        %v748 = vshrl.u32 %v747, 4
        %v749 = vand.u32 %v747, 15
        %v750 = vsub.s32 0, %v749
        %v751 = vsel %vm745, %v750, %v749
        %vm752 = vcmp.lt.s32.totalorder %v642, 0
        %v753 = vsub.s32 0, %v642
        %v754 = vsel %vm752, %v753, %v642
        %v755 = vshrl.u32 %v754, 4
        %v756 = vand.u32 %v754, 15
        %v757 = vsub.s32 0, %v756
        %v758 = vsel %vm752, %v757, %v756
        %vm759 = vcmp.lt.s32.totalorder %v643, 0
        %v760 = vsub.s32 0, %v643
        %v761 = vsel %vm759, %v760, %v643
        %v762 = vshrl.u32 %v761, 4
        %v763 = vand.u32 %v761, 15
        %v764 = vsub.s32 0, %v763
        %v765 = vsel %vm759, %v764, %v763
        %vm766 = vcmp.lt.s32.totalorder %v644, 0
        %v767 = vsub.s32 0, %v644
        %v768 = vsel %vm766, %v767, %v644
        %v769 = vshrl.u32 %v768, 4
        %v770 = vand.u32 %v768, 15
        %v771 = vsub.s32 0, %v770
        %v772 = vsel %vm766, %v771, %v770
        %vm773 = vcmp.lt.s32.totalorder %v645, 0
        %v774 = vsub.s32 0, %v645
        %v775 = vsel %vm773, %v774, %v645
        %v776 = vshrl.u32 %v775, 4
        %v777 = vand.u32 %v775, 15
        %v778 = vsub.s32 0, %v777
        %v779 = vsel %vm773, %v778, %v777
        %vm780 = vcmp.lt.s32.totalorder %v646, 0
        %v781 = vsub.s32 0, %v646
        %v782 = vsel %vm780, %v781, %v646
        %v783 = vshrl.u32 %v782, 4
        %v784 = vand.u32 %v782, 15
        %v785 = vsub.s32 0, %v784
        %v786 = vsel %vm780, %v785, %v784
        %vm787 = vcmp.lt.s32.totalorder %v647, 0
        %v788 = vsub.s32 0, %v647
        %v789 = vsel %vm787, %v788, %v647
        %v790 = vshrl.u32 %v789, 4
        %v791 = vand.u32 %v789, 15
        %v792 = vsub.s32 0, %v791
        %v793 = vsel %vm787, %v792, %v791
        %vm794 = vcmp.lt.s32.totalorder %v648, 0
        %v795 = vsub.s32 0, %v648
        %v796 = vsel %vm794, %v795, %v648
        %v797 = vshrl.u32 %v796, 4
        %v798 = vand.u32 %v796, 15
        %v799 = vsub.s32 0, %v798
        %v800 = vsel %vm794, %v799, %v798
        %vm801 = vcmp.lt.s32.totalorder %v649, 0
        %v802 = vsub.s32 0, %v649
        %v803 = vsel %vm801, %v802, %v649
        %v804 = vshrl.u32 %v803, 4
        %v805 = vand.u32 %v803, 15
        %v806 = vsub.s32 0, %v805
        %v807 = vsel %vm801, %v806, %v805
        %vm808 = vcmp.lt.s32.totalorder %v650, 0
        %v809 = vsub.s32 0, %v650
        %v810 = vsel %vm808, %v809, %v650
        %v811 = vshrl.u32 %v810, 4
        %v812 = vand.u32 %v810, 15
        %v813 = vsub.s32 0, %v812
        %v814 = vsel %vm808, %v813, %v812
        %vm815 = vcmp.lt.s32.totalorder %v651, 0
        %v816 = vsub.s32 0, %v651
        %v817 = vsel %vm815, %v816, %v651
        %v818 = vshrl.u32 %v817, 4
        %v819 = vand.u32 %v817, 15
        %v820 = vsub.s32 0, %v819
        %v821 = vsel %vm815, %v820, %v819
        %vm822 = vcmp.lt.s32.totalorder %v652, 0
        %v823 = vsub.s32 0, %v652
        %v824 = vsel %vm822, %v823, %v652
        %v825 = vshrl.u32 %v824, 4
        %v826 = vand.u32 %v824, 15
        %v827 = vsub.s32 0, %v826
        %v828 = vsel %vm822, %v827, %v826
        %vm829 = vcmp.lt.s32.totalorder %v653, 0
        %v830 = vsub.s32 0, %v653
        %v831 = vsel %vm829, %v830, %v653
        %v832 = vshrl.u32 %v831, 4
        %v833 = vand.u32 %v831, 15
        %v834 = vsub.s32 0, %v833
        %v835 = vsel %vm829, %v834, %v833
        %vm836 = vcmp.lt.s32.totalorder %v654, 0
        %v837 = vsub.s32 0, %v654
        %v838 = vsel %vm836, %v837, %v654
        %v839 = vshrl.u32 %v838, 4
        %v840 = vand.u32 %v838, 15
        %v841 = vsub.s32 0, %v840
        %v842 = vsel %vm836, %v841, %v840
        %vm843 = vcmp.lt.s32.totalorder %v655, 0
        %v844 = vsub.s32 0, %v655
        %v845 = vsel %vm843, %v844, %v655
        %v846 = vshrl.u32 %v845, 4
        %v847 = vand.u32 %v845, 15
        %v848 = vsub.s32 0, %v847
        %v849 = vsel %vm843, %v848, %v847
        %vm850 = vcmp.lt.s32.totalorder %v656, 0
        %v851 = vsub.s32 0, %v656
        %v852 = vsel %vm850, %v851, %v656
        %v853 = vshrl.u32 %v852, 4
        %v854 = vand.u32 %v852, 15
        %v855 = vsub.s32 0, %v854
        %v856 = vsel %vm850, %v855, %v854
        %vm857 = vcmp.lt.s32.totalorder %v657, 0
        %v858 = vsub.s32 0, %v657
        %v859 = vsel %vm857, %v858, %v657
        %v860 = vshrl.u32 %v859, 4
        %v861 = vand.u32 %v859, 15
        %v862 = vsub.s32 0, %v861
        %v863 = vsel %vm857, %v862, %v861
        %vm864 = vcmp.lt.s32.totalorder %v658, 0
        %v865 = vsub.s32 0, %v658
        %v866 = vsel %vm864, %v865, %v658
        %v867 = vshrl.u32 %v866, 4
        %v868 = vand.u32 %v866, 15
        %v869 = vsub.s32 0, %v868
        %v870 = vsel %vm864, %v869, %v868
        %vm871 = vcmp.lt.s32.totalorder %v659, 0
        %v872 = vsub.s32 0, %v659
        %v873 = vsel %vm871, %v872, %v659
        %v874 = vshrl.u32 %v873, 4
        %v875 = vand.u32 %v873, 15
        %v876 = vsub.s32 0, %v875
        %v877 = vsel %vm871, %v876, %v875
        %vm878 = vcmp.lt.s32.totalorder %v660, 0
        %v879 = vsub.s32 0, %v660
        %v880 = vsel %vm878, %v879, %v660
        %v881 = vshrl.u32 %v880, 4
        %v882 = vand.u32 %v880, 15
        %v883 = vsub.s32 0, %v882
        %v884 = vsel %vm878, %v883, %v882
        %vm885 = vcmp.ne.s32.totalorder %v667, 0
        %vm886 = vcmp.ne.s32.totalorder %v674, 0
        %vm887 = vcmp.ne.s32.totalorder %v681, 0
        %vm888 = vcmp.ne.s32.totalorder %v688, 0
        %vm889 = vcmp.ne.s32.totalorder %v695, 0
        %vm890 = vcmp.ne.s32.totalorder %v702, 0
        %vm891 = vcmp.ne.s32.totalorder %v709, 0
        %vm892 = vcmp.ne.s32.totalorder %v716, 0
        %vm893 = vcmp.ne.s32.totalorder %v723, 0
        %vm894 = vcmp.ne.s32.totalorder %v730, 0
        %vm895 = vcmp.ne.s32.totalorder %v737, 0
        %vm896 = vcmp.ne.s32.totalorder %v744, 0
        %vm897 = vcmp.ne.s32.totalorder %v751, 0
        %vm898 = vcmp.ne.s32.totalorder %v758, 0
        %vm899 = vcmp.ne.s32.totalorder %v765, 0
        %vm900 = vcmp.ne.s32.totalorder %v772, 0
        %vm901 = vcmp.ne.s32.totalorder %v779, 0
        %vm902 = vcmp.ne.s32.totalorder %v786, 0
        %vm903 = vcmp.ne.s32.totalorder %v793, 0
        %vm904 = vcmp.ne.s32.totalorder %v800, 0
        %vm905 = vcmp.ne.s32.totalorder %v807, 0
        %vm906 = vcmp.ne.s32.totalorder %v814, 0
        %vm907 = vcmp.ne.s32.totalorder %v821, 0
        %vm908 = vcmp.ne.s32.totalorder %v828, 0
        %vm909 = vcmp.ne.s32.totalorder %v835, 0
        %vm910 = vcmp.ne.s32.totalorder %v842, 0
        %vm911 = vcmp.ne.s32.totalorder %v849, 0
        %vm912 = vcmp.ne.s32.totalorder %v856, 0
        %vm913 = vcmp.ne.s32.totalorder %v863, 0
        %vm914 = vcmp.ne.s32.totalorder %v870, 0
        %vm915 = vcmp.ne.s32.totalorder %v877, 0
        %vm916 = vcmp.ne.s32.totalorder %v884, 0
        %vm917 = vcmp.lt.s32.totalorder %v667, 0
        %vm918 = vcmp.lt.s32.totalorder %v674, 0
        %vm919 = vcmp.lt.s32.totalorder %v681, 0
        %vm920 = vcmp.lt.s32.totalorder %v688, 0
        %vm921 = vcmp.lt.s32.totalorder %v695, 0
        %vm922 = vcmp.lt.s32.totalorder %v702, 0
        %vm923 = vcmp.lt.s32.totalorder %v709, 0
        %vm924 = vcmp.lt.s32.totalorder %v716, 0
        %vm925 = vcmp.lt.s32.totalorder %v723, 0
        %vm926 = vcmp.lt.s32.totalorder %v730, 0
        %vm927 = vcmp.lt.s32.totalorder %v737, 0
        %vm928 = vcmp.lt.s32.totalorder %v744, 0
        %vm929 = vcmp.lt.s32.totalorder %v751, 0
        %vm930 = vcmp.lt.s32.totalorder %v758, 0
        %vm931 = vcmp.lt.s32.totalorder %v765, 0
        %vm932 = vcmp.lt.s32.totalorder %v772, 0
        %vm933 = vcmp.lt.s32.totalorder %v779, 0
        %vm934 = vcmp.lt.s32.totalorder %v786, 0
        %vm935 = vcmp.lt.s32.totalorder %v793, 0
        %vm936 = vcmp.lt.s32.totalorder %v800, 0
        %vm937 = vcmp.lt.s32.totalorder %v807, 0
        %vm938 = vcmp.lt.s32.totalorder %v814, 0
        %vm939 = vcmp.lt.s32.totalorder %v821, 0
        %vm940 = vcmp.lt.s32.totalorder %v828, 0
        %vm941 = vcmp.lt.s32.totalorder %v835, 0
        %vm942 = vcmp.lt.s32.totalorder %v842, 0
        %vm943 = vcmp.lt.s32.totalorder %v849, 0
        %vm944 = vcmp.lt.s32.totalorder %v856, 0
        %vm945 = vcmp.lt.s32.totalorder %v863, 0
        %vm946 = vcmp.lt.s32.totalorder %v870, 0
        %vm947 = vcmp.lt.s32.totalorder %v877, 0
        %vm948 = vcmp.lt.s32.totalorder %v884, 0
        %vm949 = vmand %vm917, %vm885
        %vm950 = vmand %vm918, %vm886
        %vm951 = vmand %vm919, %vm887
        %vm952 = vmand %vm920, %vm888
        %vm953 = vmand %vm921, %vm889
        %vm954 = vmand %vm922, %vm890
        %vm955 = vmand %vm923, %vm891
        %vm956 = vmand %vm924, %vm892
        %vm957 = vmand %vm925, %vm893
        %vm958 = vmand %vm926, %vm894
        %vm959 = vmand %vm927, %vm895
        %vm960 = vmand %vm928, %vm896
        %vm961 = vmand %vm929, %vm897
        %vm962 = vmand %vm930, %vm898
        %vm963 = vmand %vm931, %vm899
        %vm964 = vmand %vm932, %vm900
        %vm965 = vmand %vm933, %vm901
        %vm966 = vmand %vm934, %vm902
        %vm967 = vmand %vm935, %vm903
        %vm968 = vmand %vm936, %vm904
        %vm969 = vmand %vm937, %vm905
        %vm970 = vmand %vm938, %vm906
        %vm971 = vmand %vm939, %vm907
        %vm972 = vmand %vm940, %vm908
        %vm973 = vmand %vm941, %vm909
        %vm974 = vmand %vm942, %vm910
        %vm975 = vmand %vm943, %vm911
        %vm976 = vmand %vm944, %vm912
        %vm977 = vmand %vm945, %vm913
        %vm978 = vmand %vm946, %vm914
        %vm979 = vmand %vm947, %vm915
        %vm980 = vmand %vm948, %vm916
        %v981 = vadd.s32 %v667, 16
        %v982 = vadd.s32 %v674, 16
        %v983 = vadd.s32 %v681, 16
        %v984 = vadd.s32 %v688, 16
        %v985 = vadd.s32 %v695, 16
        %v986 = vadd.s32 %v702, 16
        %v987 = vadd.s32 %v709, 16
        %v988 = vadd.s32 %v716, 16
        %v989 = vadd.s32 %v723, 16
        %v990 = vadd.s32 %v730, 16
        %v991 = vadd.s32 %v737, 16
        %v992 = vadd.s32 %v744, 16
        %v993 = vadd.s32 %v751, 16
        %v994 = vadd.s32 %v758, 16
        %v995 = vadd.s32 %v765, 16
        %v996 = vadd.s32 %v772, 16
        %v997 = vadd.s32 %v779, 16
        %v998 = vadd.s32 %v786, 16
        %v999 = vadd.s32 %v793, 16
        %v1000 = vadd.s32 %v800, 16
        %v1001 = vadd.s32 %v807, 16
        %v1002 = vadd.s32 %v814, 16
        %v1003 = vadd.s32 %v821, 16
        %v1004 = vadd.s32 %v828, 16
        %v1005 = vadd.s32 %v835, 16
        %v1006 = vadd.s32 %v842, 16
        %v1007 = vadd.s32 %v849, 16
        %v1008 = vadd.s32 %v856, 16
        %v1009 = vadd.s32 %v863, 16
        %v1010 = vadd.s32 %v870, 16
        %v1011 = vadd.s32 %v877, 16
        %v1012 = vadd.s32 %v884, 16
        %v1013 = vsel %vm949, %v981, %v667
        %v1014 = vsel %vm950, %v982, %v674
        %v1015 = vsel %vm951, %v983, %v681
        %v1016 = vsel %vm952, %v984, %v688
        %v1017 = vsel %vm953, %v985, %v695
        %v1018 = vsel %vm954, %v986, %v702
        %v1019 = vsel %vm955, %v987, %v709
        %v1020 = vsel %vm956, %v988, %v716
        %v1021 = vsel %vm957, %v989, %v723
        %v1022 = vsel %vm958, %v990, %v730
        %v1023 = vsel %vm959, %v991, %v737
        %v1024 = vsel %vm960, %v992, %v744
        %v1025 = vsel %vm961, %v993, %v751
        %v1026 = vsel %vm962, %v994, %v758
        %v1027 = vsel %vm963, %v995, %v765
        %v1028 = vsel %vm964, %v996, %v772
        %v1029 = vsel %vm965, %v997, %v779
        %v1030 = vsel %vm966, %v998, %v786
        %v1031 = vsel %vm967, %v999, %v793
        %v1032 = vsel %vm968, %v1000, %v800
        %v1033 = vsel %vm969, %v1001, %v807
        %v1034 = vsel %vm970, %v1002, %v814
        %v1035 = vsel %vm971, %v1003, %v821
        %v1036 = vsel %vm972, %v1004, %v828
        %v1037 = vsel %vm973, %v1005, %v835
        %v1038 = vsel %vm974, %v1006, %v842
        %v1039 = vsel %vm975, %v1007, %v849
        %v1040 = vsel %vm976, %v1008, %v856
        %v1041 = vsel %vm977, %v1009, %v863
        %v1042 = vsel %vm978, %v1010, %v870
        %v1043 = vsel %vm979, %v1011, %v877
        %v1044 = vsel %vm980, %v1012, %v884
        %vm1045 = vcmp.gt.s32.totalorder %v1013, 0
        %vm1046 = vcmp.gt.s32.totalorder %v1014, 0
        %vm1047 = vcmp.gt.s32.totalorder %v1015, 0
        %vm1048 = vcmp.gt.s32.totalorder %v1016, 0
        %vm1049 = vcmp.gt.s32.totalorder %v1017, 0
        %vm1050 = vcmp.gt.s32.totalorder %v1018, 0
        %vm1051 = vcmp.gt.s32.totalorder %v1019, 0
        %vm1052 = vcmp.gt.s32.totalorder %v1020, 0
        %vm1053 = vcmp.gt.s32.totalorder %v1021, 0
        %vm1054 = vcmp.gt.s32.totalorder %v1022, 0
        %vm1055 = vcmp.gt.s32.totalorder %v1023, 0
        %vm1056 = vcmp.gt.s32.totalorder %v1024, 0
        %vm1057 = vcmp.gt.s32.totalorder %v1025, 0
        %vm1058 = vcmp.gt.s32.totalorder %v1026, 0
        %vm1059 = vcmp.gt.s32.totalorder %v1027, 0
        %vm1060 = vcmp.gt.s32.totalorder %v1028, 0
        %vm1061 = vcmp.gt.s32.totalorder %v1029, 0
        %vm1062 = vcmp.gt.s32.totalorder %v1030, 0
        %vm1063 = vcmp.gt.s32.totalorder %v1031, 0
        %vm1064 = vcmp.gt.s32.totalorder %v1032, 0
        %vm1065 = vcmp.gt.s32.totalorder %v1033, 0
        %vm1066 = vcmp.gt.s32.totalorder %v1034, 0
        %vm1067 = vcmp.gt.s32.totalorder %v1035, 0
        %vm1068 = vcmp.gt.s32.totalorder %v1036, 0
        %vm1069 = vcmp.gt.s32.totalorder %v1037, 0
        %vm1070 = vcmp.gt.s32.totalorder %v1038, 0
        %vm1071 = vcmp.gt.s32.totalorder %v1039, 0
        %vm1072 = vcmp.gt.s32.totalorder %v1040, 0
        %vm1073 = vcmp.gt.s32.totalorder %v1041, 0
        %vm1074 = vcmp.gt.s32.totalorder %v1042, 0
        %vm1075 = vcmp.gt.s32.totalorder %v1043, 0
        %vm1076 = vcmp.gt.s32.totalorder %v1044, 0
        %vm1077 = vcmp.lt.s32.totalorder %v1013, 15
        %vm1078 = vcmp.lt.s32.totalorder %v1014, 15
        %vm1079 = vcmp.lt.s32.totalorder %v1015, 15
        %vm1080 = vcmp.lt.s32.totalorder %v1016, 15
        %vm1081 = vcmp.lt.s32.totalorder %v1017, 15
        %vm1082 = vcmp.lt.s32.totalorder %v1018, 15
        %vm1083 = vcmp.lt.s32.totalorder %v1019, 15
        %vm1084 = vcmp.lt.s32.totalorder %v1020, 15
        %vm1085 = vcmp.lt.s32.totalorder %v1021, 15
        %vm1086 = vcmp.lt.s32.totalorder %v1022, 15
        %vm1087 = vcmp.lt.s32.totalorder %v1023, 15
        %vm1088 = vcmp.lt.s32.totalorder %v1024, 15
        %vm1089 = vcmp.lt.s32.totalorder %v1025, 15
        %vm1090 = vcmp.lt.s32.totalorder %v1026, 15
        %vm1091 = vcmp.lt.s32.totalorder %v1027, 15
        %vm1092 = vcmp.lt.s32.totalorder %v1028, 15
        %vm1093 = vcmp.lt.s32.totalorder %v1029, 15
        %vm1094 = vcmp.lt.s32.totalorder %v1030, 15
        %vm1095 = vcmp.lt.s32.totalorder %v1031, 15
        %vm1096 = vcmp.lt.s32.totalorder %v1032, 15
        %vm1097 = vcmp.lt.s32.totalorder %v1033, 15
        %vm1098 = vcmp.lt.s32.totalorder %v1034, 15
        %vm1099 = vcmp.lt.s32.totalorder %v1035, 15
        %vm1100 = vcmp.lt.s32.totalorder %v1036, 15
        %vm1101 = vcmp.lt.s32.totalorder %v1037, 15
        %vm1102 = vcmp.lt.s32.totalorder %v1038, 15
        %vm1103 = vcmp.lt.s32.totalorder %v1039, 15
        %vm1104 = vcmp.lt.s32.totalorder %v1040, 15
        %vm1105 = vcmp.lt.s32.totalorder %v1041, 15
        %vm1106 = vcmp.lt.s32.totalorder %v1042, 15
        %vm1107 = vcmp.lt.s32.totalorder %v1043, 15
        %vm1108 = vcmp.lt.s32.totalorder %v1044, 15
        %v1109 = vld [vmem:[#allocation2] sm:$0x80]
        %v1110 = vld [vmem:[#allocation2 + $0x8] sm:$0xff]
        %v1111 = vld [vmem:[#allocation2 + $0x10] sm:$0xff]
        %v1112 = vld [vmem:[#allocation2 + $0x18] sm:$0xff]
        %v1113 = vld [vmem:[#allocation2 + $0x20] sm:$0xff]
        %v1114 = vld [vmem:[#allocation2 + $0x28] sm:$0xff]
        %v1115 = vld [vmem:[#allocation2 + $0x30] sm:$0xff]
        %v1116 = vld [vmem:[#allocation2 + $0x38] sm:$0xff]
        %v1117 = vld [vmem:[#allocation2 + $0x40] sm:$0xff]
        %v1118 = vld [vmem:[#allocation2 + $0x48] sm:$0xff]
        %v1119 = vld [vmem:[#allocation2 + $0x50] sm:$0xff]
        %v1120 = vld [vmem:[#allocation2 + $0x58] sm:$0xff]
        %v1121 = vld [vmem:[#allocation2 + $0x60] sm:$0xff]
        %v1122 = vld [vmem:[#allocation2 + $0x68] sm:$0xff]
        %v1123 = vld [vmem:[#allocation2 + $0x70] sm:$0xff]
        %v1124 = vld [vmem:[#allocation2 + $0x78] sm:$0xff]
        %v1125 = vld [vmem:[#allocation2 + $0x80] sm:$0xff]
        %v1126 = vsel %vm1045, 1, 0
        %v1127 = vsel %vm1046, 1, 0
        %v1128 = vsel %vm1047, 1, 0
        %v1129 = vsel %vm1048, 1, 0
        %v1130 = vsel %vm1049, 1, 0
        %v1131 = vsel %vm1050, 1, 0
        %v1132 = vsel %vm1051, 1, 0
        %v1133 = vsel %vm1052, 1, 0
        %v1134 = vsel %vm1053, 1, 0
        %v1135 = vsel %vm1054, 1, 0
        %v1136 = vsel %vm1055, 1, 0
        %v1137 = vsel %vm1056, 1, 0
        %v1138 = vsel %vm1057, 1, 0
        %v1139 = vsel %vm1058, 1, 0
        %v1140 = vsel %vm1059, 1, 0
        %v1141 = vsel %vm1060, 1, 0
        %v1142 = vsel %vm1061, 1, 0
        %v1143 = vsel %vm1062, 1, 0
        %v1144 = vsel %vm1063, 1, 0
        %v1145 = vsel %vm1064, 1, 0
        %v1146 = vsel %vm1065, 1, 0
        %v1147 = vsel %vm1066, 1, 0
        %v1148 = vsel %vm1067, 1, 0
        %v1149 = vsel %vm1068, 1, 0
        %v1150 = vsel %vm1069, 1, 0
        %v1151 = vsel %vm1070, 1, 0
        %v1152 = vsel %vm1071, 1, 0
        %v1153 = vsel %vm1072, 1, 0
        %v1154 = vsel %vm1073, 1, 0
        %v1155 = vsel %vm1074, 1, 0
        %v1156 = vsel %vm1075, 1, 0
        %v1157 = vsel %vm1076, 1, 0
        %vm1158 = vcmp.eq.s32.totalorder %v1126, 1
        %vm1159 = vcmp.eq.s32.totalorder %v1127, 1
        %vm1160 = vcmp.eq.s32.totalorder %v1128, 1
        %vm1161 = vcmp.eq.s32.totalorder %v1129, 1
        %vm1162 = vcmp.eq.s32.totalorder %v1130, 1
        %vm1163 = vcmp.eq.s32.totalorder %v1131, 1
        %vm1164 = vcmp.eq.s32.totalorder %v1132, 1
        %vm1165 = vcmp.eq.s32.totalorder %v1133, 1
        %vm1166 = vcmp.eq.s32.totalorder %v1134, 1
        %vm1167 = vcmp.eq.s32.totalorder %v1135, 1
        %vm1168 = vcmp.eq.s32.totalorder %v1136, 1
        %vm1169 = vcmp.eq.s32.totalorder %v1137, 1
        %vm1170 = vcmp.eq.s32.totalorder %v1138, 1
        %vm1171 = vcmp.eq.s32.totalorder %v1139, 1
        %vm1172 = vcmp.eq.s32.totalorder %v1140, 1
        %vm1173 = vcmp.eq.s32.totalorder %v1141, 1
        %vm1174 = vcmp.eq.s32.totalorder %v1142, 1
        %vm1175 = vcmp.eq.s32.totalorder %v1143, 1
        %vm1176 = vcmp.eq.s32.totalorder %v1144, 1
        %vm1177 = vcmp.eq.s32.totalorder %v1145, 1
        %vm1178 = vcmp.eq.s32.totalorder %v1146, 1
        %vm1179 = vcmp.eq.s32.totalorder %v1147, 1
        %vm1180 = vcmp.eq.s32.totalorder %v1148, 1
        %vm1181 = vcmp.eq.s32.totalorder %v1149, 1
        %vm1182 = vcmp.eq.s32.totalorder %v1150, 1
        %vm1183 = vcmp.eq.s32.totalorder %v1151, 1
        %vm1184 = vcmp.eq.s32.totalorder %v1152, 1
        %vm1185 = vcmp.eq.s32.totalorder %v1153, 1
        %vm1186 = vcmp.eq.s32.totalorder %v1154, 1
        %vm1187 = vcmp.eq.s32.totalorder %v1155, 1
        %vm1188 = vcmp.eq.s32.totalorder %v1156, 1
        %vm1189 = vcmp.eq.s32.totalorder %v1157, 1
        %vm1190 = vmpackc.low %vm1158, %vm1158
        %vm1191 = vmpackc.low %vm1159, %vm1159
        %vm1192 = vmpackc.low %vm1160, %vm1160
        %vm1193 = vmpackc.low %vm1161, %vm1161
        %vm1194 = vmpackc.low %vm1162, %vm1162
        %vm1195 = vmpackc.low %vm1163, %vm1163
        %vm1196 = vmpackc.low %vm1164, %vm1164
        %vm1197 = vmpackc.low %vm1165, %vm1165
        %vm1198 = vmpackc.low %vm1166, %vm1166
        %vm1199 = vmpackc.low %vm1167, %vm1167
        %vm1200 = vmpackc.low %vm1168, %vm1168
        %vm1201 = vmpackc.low %vm1169, %vm1169
        %vm1202 = vmpackc.low %vm1170, %vm1170
        %vm1203 = vmpackc.low %vm1171, %vm1171
        %vm1204 = vmpackc.low %vm1172, %vm1172
        %vm1205 = vmpackc.low %vm1173, %vm1173
        %vm1206 = vmpackc.low %vm1174, %vm1174
        %vm1207 = vmpackc.low %vm1175, %vm1175
        %vm1208 = vmpackc.low %vm1176, %vm1176
        %vm1209 = vmpackc.low %vm1177, %vm1177
        %vm1210 = vmpackc.low %vm1178, %vm1178
        %vm1211 = vmpackc.low %vm1179, %vm1179
        %vm1212 = vmpackc.low %vm1180, %vm1180
        %vm1213 = vmpackc.low %vm1181, %vm1181
        %vm1214 = vmpackc.low %vm1182, %vm1182
        %vm1215 = vmpackc.low %vm1183, %vm1183
        %vm1216 = vmpackc.low %vm1184, %vm1184
        %vm1217 = vmpackc.low %vm1185, %vm1185
        %vm1218 = vmpackc.low %vm1186, %vm1186
        %vm1219 = vmpackc.low %vm1187, %vm1187
        %vm1220 = vmpackc.low %vm1188, %vm1188
        %vm1221 = vmpackc.low %vm1189, %vm1189
        %v1222 = vsel %vm1190, 65537, 0
        %v1223 = vsel %vm1191, 65537, 0
        %v1224 = vsel %vm1192, 65537, 0
        %v1225 = vsel %vm1193, 65537, 0
        %v1226 = vsel %vm1194, 65537, 0
        %v1227 = vsel %vm1195, 65537, 0
        %v1228 = vsel %vm1196, 65537, 0
        %v1229 = vsel %vm1197, 65537, 0
        %v1230 = vsel %vm1198, 65537, 0
        %v1231 = vsel %vm1199, 65537, 0
        %v1232 = vsel %vm1200, 65537, 0
        %v1233 = vsel %vm1201, 65537, 0
        %v1234 = vsel %vm1202, 65537, 0
        %v1235 = vsel %vm1203, 65537, 0
        %v1236 = vsel %vm1204, 65537, 0
        %v1237 = vsel %vm1205, 65537, 0
        %v1238 = vsel %vm1206, 65537, 0
        %v1239 = vsel %vm1207, 65537, 0
        %v1240 = vsel %vm1208, 65537, 0
        %v1241 = vsel %vm1209, 65537, 0
        %v1242 = vsel %vm1210, 65537, 0
        %v1243 = vsel %vm1211, 65537, 0
        %v1244 = vsel %vm1212, 65537, 0
        %v1245 = vsel %vm1213, 65537, 0
        %v1246 = vsel %vm1214, 65537, 0
        %v1247 = vsel %vm1215, 65537, 0
        %v1248 = vsel %vm1216, 65537, 0
        %v1249 = vsel %vm1217, 65537, 0
        %v1250 = vsel %vm1218, 65537, 0
        %v1251 = vsel %vm1219, 65537, 0
        %v1252 = vsel %vm1220, 65537, 0
        %v1253 = vsel %vm1221, 65537, 0
        %v1254 = vunpack.c.l.b16 %v1222
        %v1255 = vunpack.c.l.b16 %v1223
        %v1256 = vunpack.c.l.b16 %v1224
        %v1257 = vunpack.c.l.b16 %v1225
        %v1258 = vunpack.c.l.b16 %v1226
        %v1259 = vunpack.c.l.b16 %v1227
        %v1260 = vunpack.c.l.b16 %v1228
        %v1261 = vunpack.c.l.b16 %v1229
        %v1262 = vunpack.c.l.b16 %v1230
        %v1263 = vunpack.c.l.b16 %v1231
        %v1264 = vunpack.c.l.b16 %v1232
        %v1265 = vunpack.c.l.b16 %v1233
        %v1266 = vunpack.c.l.b16 %v1234
        %v1267 = vunpack.c.l.b16 %v1235
        %v1268 = vunpack.c.l.b16 %v1236
        %v1269 = vunpack.c.l.b16 %v1237
        %v1270 = vunpack.c.l.b16 %v1238
        %v1271 = vunpack.c.l.b16 %v1239
        %v1272 = vunpack.c.l.b16 %v1240
        %v1273 = vunpack.c.l.b16 %v1241
        %v1274 = vunpack.c.l.b16 %v1242
        %v1275 = vunpack.c.l.b16 %v1243
        %v1276 = vunpack.c.l.b16 %v1244
        %v1277 = vunpack.c.l.b16 %v1245
        %v1278 = vunpack.c.l.b16 %v1246
        %v1279 = vunpack.c.l.b16 %v1247
        %v1280 = vunpack.c.l.b16 %v1248
        %v1281 = vunpack.c.l.b16 %v1249
        %v1282 = vunpack.c.l.b16 %v1250
        %v1283 = vunpack.c.l.b16 %v1251
        %v1284 = vunpack.c.l.b16 %v1252
        %v1285 = vunpack.c.l.b16 %v1253
        %v1286 = vpack.c.b16 %v1255, %v1254
        %v1287 = vpack.c.b16 %v1257, %v1256
        %v1288 = vpack.c.b16 %v1259, %v1258
        %v1289 = vpack.c.b16 %v1261, %v1260
        %v1290 = vpack.c.b16 %v1263, %v1262
        %v1291 = vpack.c.b16 %v1265, %v1264
        %v1292 = vpack.c.b16 %v1267, %v1266
        %v1293 = vpack.c.b16 %v1269, %v1268
        %v1294 = vpack.c.b16 %v1271, %v1270
        %v1295 = vpack.c.b16 %v1273, %v1272
        %v1296 = vpack.c.b16 %v1275, %v1274
        %v1297 = vpack.c.b16 %v1277, %v1276
        %v1298 = vpack.c.b16 %v1279, %v1278
        %v1299 = vpack.c.b16 %v1281, %v1280
        %v1300 = vpack.c.b16 %v1283, %v1282
        %v1301 = vpack.c.b16 %v1285, %v1284
        %vm1302 = vsmask.f32 7424
        %v1304 = vshll.u32 %v1286, 16
        %v1306 = vrot.slane %v1304, 1
        %v1307 = vshrl.u32 %v1286, 16
        %v1309 = vor.u32 %v1307, %v1306
        %v1311 = vshll.u32 %v1287, 16
        %v1313 = vrot.slane %v1311, 1
        %v1314 = vsel %vm1302, %v1309, %v1313
        %v1315 = vshrl.u32 %v1287, 16
        %v1317 = vor.u32 %v1315, %v1313
        %v1319 = vshll.u32 %v1288, 16
        %v1321 = vrot.slane %v1319, 1
        %v1322 = vsel %vm1302, %v1317, %v1321
        %v1323 = vshrl.u32 %v1288, 16
        %v1325 = vor.u32 %v1323, %v1321
        %v1327 = vshll.u32 %v1289, 16
        %v1329 = vrot.slane %v1327, 1
        %v1330 = vsel %vm1302, %v1325, %v1329
        %v1331 = vshrl.u32 %v1289, 16
        %v1333 = vor.u32 %v1331, %v1329
        %v1335 = vshll.u32 %v1290, 16
        %v1337 = vrot.slane %v1335, 1
        %v1338 = vsel %vm1302, %v1333, %v1337
        %v1339 = vshrl.u32 %v1290, 16
        %v1341 = vor.u32 %v1339, %v1337
        %v1343 = vshll.u32 %v1291, 16
        %v1345 = vrot.slane %v1343, 1
        %v1346 = vsel %vm1302, %v1341, %v1345
        %v1347 = vshrl.u32 %v1291, 16
        %v1349 = vor.u32 %v1347, %v1345
        %v1351 = vshll.u32 %v1292, 16
        %v1353 = vrot.slane %v1351, 1
        %v1354 = vsel %vm1302, %v1349, %v1353
        %v1355 = vshrl.u32 %v1292, 16
        %v1357 = vor.u32 %v1355, %v1353
        %v1359 = vshll.u32 %v1293, 16
        %v1361 = vrot.slane %v1359, 1
        %v1362 = vsel %vm1302, %v1357, %v1361
        %v1363 = vshrl.u32 %v1293, 16
        %v1365 = vor.u32 %v1363, %v1361
        %v1367 = vshll.u32 %v1294, 16
        %v1369 = vrot.slane %v1367, 1
        %v1370 = vsel %vm1302, %v1365, %v1369
        %v1371 = vshrl.u32 %v1294, 16
        %v1373 = vor.u32 %v1371, %v1369
        %v1375 = vshll.u32 %v1295, 16
        %v1377 = vrot.slane %v1375, 1
        %v1378 = vsel %vm1302, %v1373, %v1377
        %v1379 = vshrl.u32 %v1295, 16
        %v1381 = vor.u32 %v1379, %v1377
        %v1383 = vshll.u32 %v1296, 16
        %v1385 = vrot.slane %v1383, 1
        %v1386 = vsel %vm1302, %v1381, %v1385
        %v1387 = vshrl.u32 %v1296, 16
        %v1389 = vor.u32 %v1387, %v1385
        %v1391 = vshll.u32 %v1297, 16
        %v1393 = vrot.slane %v1391, 1
        %v1394 = vsel %vm1302, %v1389, %v1393
        %v1395 = vshrl.u32 %v1297, 16
        %v1397 = vor.u32 %v1395, %v1393
        %v1399 = vshll.u32 %v1298, 16
        %v1401 = vrot.slane %v1399, 1
        %v1402 = vsel %vm1302, %v1397, %v1401
        %v1403 = vshrl.u32 %v1298, 16
        %v1405 = vor.u32 %v1403, %v1401
        %v1407 = vshll.u32 %v1299, 16
        %v1409 = vrot.slane %v1407, 1
        %v1410 = vsel %vm1302, %v1405, %v1409
        %v1411 = vshrl.u32 %v1299, 16
        %v1413 = vor.u32 %v1411, %v1409
        %v1415 = vshll.u32 %v1300, 16
        %v1417 = vrot.slane %v1415, 1
        %v1418 = vsel %vm1302, %v1413, %v1417
        %v1419 = vshrl.u32 %v1300, 16
        %v1421 = vor.u32 %v1419, %v1417
        %v1423 = vshll.u32 %v1301, 16
        %v1425 = vrot.slane %v1423, 1
        %v1426 = vsel %vm1302, %v1421, %v1425
        %v1427 = vshrl.u32 %v1301, 16
        %v1429 = vor.u32 %v1427, %v1425
        %vm1430 = vcmp.ne.s16.totalorder %v1306, 0
        %vm1431 = vcmp.ne.s16.totalorder %v1314, 0
        %vm1432 = vcmp.ne.s16.totalorder %v1322, 0
        %vm1433 = vcmp.ne.s16.totalorder %v1330, 0
        %vm1434 = vcmp.ne.s16.totalorder %v1338, 0
        %vm1435 = vcmp.ne.s16.totalorder %v1346, 0
        %vm1436 = vcmp.ne.s16.totalorder %v1354, 0
        %vm1437 = vcmp.ne.s16.totalorder %v1362, 0
        %vm1438 = vcmp.ne.s16.totalorder %v1370, 0
        %vm1439 = vcmp.ne.s16.totalorder %v1378, 0
        %vm1440 = vcmp.ne.s16.totalorder %v1386, 0
        %vm1441 = vcmp.ne.s16.totalorder %v1394, 0
        %vm1442 = vcmp.ne.s16.totalorder %v1402, 0
        %vm1443 = vcmp.ne.s16.totalorder %v1410, 0
        %vm1444 = vcmp.ne.s16.totalorder %v1418, 0
        %vm1445 = vcmp.ne.s16.totalorder %v1426, 0
        %vm1446 = vcmp.ne.s16.totalorder %v1429, 0
        %v1447 = vsel %vm1430, %v1109, 0
        %v1448 = vsel %vm1431, %v1110, 0
        %v1449 = vsel %vm1432, %v1111, 0
        %v1450 = vsel %vm1433, %v1112, 0
        %v1451 = vsel %vm1434, %v1113, 0
        %v1452 = vsel %vm1435, %v1114, 0
        %v1453 = vsel %vm1436, %v1115, 0
        %v1454 = vsel %vm1437, %v1116, 0
        %v1455 = vsel %vm1438, %v1117, 0
        %v1456 = vsel %vm1439, %v1118, 0
        %v1457 = vsel %vm1440, %v1119, 0
        %v1458 = vsel %vm1441, %v1120, 0
        %v1459 = vsel %vm1442, %v1121, 0
        %v1460 = vsel %vm1443, %v1122, 0
        %v1461 = vsel %vm1444, %v1123, 0
        %v1462 = vsel %vm1445, %v1124, 0
        %v1463 = vsel %vm1446, %v1125, 0
        %v1464 = vld [vmem:[%s3] sm:$0xf]
        %v1465 = vld [vmem:[%s3 + $0x4] sm:$0xf]
        %v1466 = vld [vmem:[%s3 + $0x8] sm:$0xf]
        %v1467 = vld [vmem:[%s3 + $0xc] sm:$0xf]
        %v1468 = vld [vmem:[%s3 + $0x10] sm:$0xf]
        %v1469 = vld [vmem:[%s3 + $0x14] sm:$0xf]
        %v1470 = vld [vmem:[%s3 + $0x18] sm:$0xf]
        %v1471 = vld [vmem:[%s3 + $0x1c] sm:$0xf]
        %v1472 = vld [vmem:[%s3 + $0x20] sm:$0xf]
        %v1473 = vld [vmem:[%s3 + $0x24] sm:$0xf]
        %v1474 = vld [vmem:[%s3 + $0x28] sm:$0xf]
        %v1475 = vld [vmem:[%s3 + $0x2c] sm:$0xf]
        %v1476 = vld [vmem:[%s3 + $0x30] sm:$0xf]
        %v1477 = vld [vmem:[%s3 + $0x34] sm:$0xf]
        %v1478 = vld [vmem:[%s3 + $0x38] sm:$0xf]
        %v1479 = vld [vmem:[%s3 + $0x3c] sm:$0xf]
        %v1480 = vld [vmem:[%s4] sm:$0x1]
        %v1482 = vlaneseq
        %v1483 = vshrl.u32 %v1482, 7
        %v1484 = vsub.s32 0, %v1483
        %v1485 = vrot.slane %v1480, %v1484
        %vm1487 = vsmask.f32 256
        %v1489 = vshrl.u32 %v1447, 16
        %v1491 = vrot.slane %v1489, 7
        %v1493 = vshrl.u32 %v1448, 16
        %v1495 = vrot.slane %v1493, 7
        %v1496 = vshll.u32 %v1448, 16
        %v1498 = vor.u32 %v1495, %v1496
        %v1499 = vsel %vm1487, %v1491, %v1498
        %v1501 = vshrl.u32 %v1449, 16
        %v1503 = vrot.slane %v1501, 7
        %v1504 = vshll.u32 %v1449, 16
        %v1506 = vor.u32 %v1503, %v1504
        %v1507 = vsel %vm1487, %v1495, %v1506
        %v1509 = vshrl.u32 %v1450, 16
        %v1511 = vrot.slane %v1509, 7
        %v1512 = vshll.u32 %v1450, 16
        %v1514 = vor.u32 %v1511, %v1512
        %v1515 = vsel %vm1487, %v1503, %v1514
        %v1517 = vshrl.u32 %v1451, 16
        %v1519 = vrot.slane %v1517, 7
        %v1520 = vshll.u32 %v1451, 16
        %v1522 = vor.u32 %v1519, %v1520
        %v1523 = vsel %vm1487, %v1511, %v1522
        %v1525 = vshrl.u32 %v1452, 16
        %v1527 = vrot.slane %v1525, 7
        %v1528 = vshll.u32 %v1452, 16
        %v1530 = vor.u32 %v1527, %v1528
        %v1531 = vsel %vm1487, %v1519, %v1530
        %v1533 = vshrl.u32 %v1453, 16
        %v1535 = vrot.slane %v1533, 7
        %v1536 = vshll.u32 %v1453, 16
        %v1538 = vor.u32 %v1535, %v1536
        %v1539 = vsel %vm1487, %v1527, %v1538
        %v1541 = vshrl.u32 %v1454, 16
        %v1543 = vrot.slane %v1541, 7
        %v1544 = vshll.u32 %v1454, 16
        %v1546 = vor.u32 %v1543, %v1544
        %v1547 = vsel %vm1487, %v1535, %v1546
        %v1549 = vshrl.u32 %v1455, 16
        %v1551 = vrot.slane %v1549, 7
        %v1552 = vshll.u32 %v1455, 16
        %v1554 = vor.u32 %v1551, %v1552
        %v1555 = vsel %vm1487, %v1543, %v1554
        %v1557 = vshrl.u32 %v1456, 16
        %v1559 = vrot.slane %v1557, 7
        %v1560 = vshll.u32 %v1456, 16
        %v1562 = vor.u32 %v1559, %v1560
        %v1563 = vsel %vm1487, %v1551, %v1562
        %v1565 = vshrl.u32 %v1457, 16
        %v1567 = vrot.slane %v1565, 7
        %v1568 = vshll.u32 %v1457, 16
        %v1570 = vor.u32 %v1567, %v1568
        %v1571 = vsel %vm1487, %v1559, %v1570
        %v1573 = vshrl.u32 %v1458, 16
        %v1575 = vrot.slane %v1573, 7
        %v1576 = vshll.u32 %v1458, 16
        %v1578 = vor.u32 %v1575, %v1576
        %v1579 = vsel %vm1487, %v1567, %v1578
        %v1581 = vshrl.u32 %v1459, 16
        %v1583 = vrot.slane %v1581, 7
        %v1584 = vshll.u32 %v1459, 16
        %v1586 = vor.u32 %v1583, %v1584
        %v1587 = vsel %vm1487, %v1575, %v1586
        %v1589 = vshrl.u32 %v1460, 16
        %v1591 = vrot.slane %v1589, 7
        %v1592 = vshll.u32 %v1460, 16
        %v1594 = vor.u32 %v1591, %v1592
        %v1595 = vsel %vm1487, %v1583, %v1594
        %v1597 = vshrl.u32 %v1461, 16
        %v1599 = vrot.slane %v1597, 7
        %v1600 = vshll.u32 %v1461, 16
        %v1602 = vor.u32 %v1599, %v1600
        %v1603 = vsel %vm1487, %v1591, %v1602
        %v1605 = vshrl.u32 %v1462, 16
        %v1607 = vrot.slane %v1605, 7
        %v1608 = vshll.u32 %v1462, 16
        %v1610 = vor.u32 %v1607, %v1608
        %v1611 = vsel %vm1487, %v1599, %v1610
        %v1613 = vshrl.u32 %v1463, 16
        %v1615 = vrot.slane %v1613, 7
        %v1616 = vshll.u32 %v1463, 16
        %v1618 = vor.u32 %v1615, %v1616
        %v1619 = vsel %vm1487, %v1607, %v1618
        %v1652 = vunpack.c.l.b16 %v1464
        %v1653 = vunpack.c.l.b16 %v1465
        %v1654 = vunpack.c.l.b16 %v1466
        %v1655 = vunpack.c.l.b16 %v1467
        %v1656 = vunpack.c.l.b16 %v1468
        %v1657 = vunpack.c.l.b16 %v1469
        %v1658 = vunpack.c.l.b16 %v1470
        %v1659 = vunpack.c.l.b16 %v1471
        %v1660 = vunpack.c.l.b16 %v1472
        %v1661 = vunpack.c.l.b16 %v1473
        %v1662 = vunpack.c.l.b16 %v1474
        %v1663 = vunpack.c.l.b16 %v1475
        %v1664 = vunpack.c.l.b16 %v1476
        %v1665 = vunpack.c.l.b16 %v1477
        %v1666 = vunpack.c.l.b16 %v1478
        %v1667 = vunpack.c.l.b16 %v1479
        %v1668 = vpack.c.b16 %v1653, %v1652
        %v1669 = vpack.c.b16 %v1655, %v1654
        %v1670 = vpack.c.b16 %v1657, %v1656
        %v1671 = vpack.c.b16 %v1659, %v1658
        %v1672 = vpack.c.b16 %v1661, %v1660
        %v1673 = vpack.c.b16 %v1663, %v1662
        %v1674 = vpack.c.b16 %v1665, %v1664
        %v1675 = vpack.c.b16 %v1667, %v1666
        %1684 = vmatprep.subr.bf16.mxu0 0
        %1685 = vmatpush1.bf16.msra.mxu0 %v1668
        %1686 = vmatprep.subr.bf16.mxu0 0
        %1687 = vmatpush1.bf16.msra.mxu0 %v1669
        %1688 = vmatprep.subr.bf16.mxu0 0
        %1689 = vmatpush1.bf16.msra.mxu0 %v1670
        %1690 = vmatprep.subr.bf16.mxu0 0
        %1691 = vmatpush1.bf16.msra.mxu0 %v1671
        %1692 = vmatprep.subr.bf16.mxu0 0
        %1693 = vmatpush1.bf16.msra.mxu0 %v1672
        %1694 = vmatprep.subr.bf16.mxu0 0
        %1695 = vmatpush1.bf16.msra.mxu0 %v1673
        %1696 = vmatprep.subr.bf16.mxu0 0
        %1697 = vmatpush1.bf16.msra.mxu0 %v1674
        %1698 = vmatprep.subr.bf16.mxu0 0
        %1699 = vmatpush1.bf16.msra.mxu0 %v1675
        %1700 = vmatprep.subr.bf16.mxu0 0
        %1701 = vmatpush1.bf16.msra.mxu0 0
        %1702 = vmatprep.subr.bf16.mxu0 0
        %1703 = vmatpush1.bf16.msra.mxu0 0
        %1704 = vmatprep.subr.bf16.mxu0 0
        %1705 = vmatpush1.bf16.msra.mxu0 0
        %1706 = vmatprep.subr.bf16.mxu0 0
        %1707 = vmatpush1.bf16.msra.mxu0 0
        %1708 = vmatprep.subr.bf16.mxu0 0
        %1709 = vmatpush1.bf16.msra.mxu0 0
        %1710 = vmatprep.subr.bf16.mxu0 0
        %1711 = vmatpush1.bf16.msra.mxu0 0
        %1712 = vmatprep.subr.bf16.mxu0 0
        %1713 = vmatpush1.bf16.msra.mxu0 0
        %1714 = vmatprep.subr.bf16.mxu0 0
        %1715 = vmatpush1.bf16.msra.mxu0 0
        %1716 = vmatprep.mubr.bf16.mxu0 0
        %1717 = vmatmul.mubr.bf16.gmra.mrb[0].mxu0 %v1499
        %v1718 = vpop.f32.mrb[0].mxu0
        %v1719 = vadd.f32 %v1485, %v1718
        %v1720 = vpop.f32.mrb[0].mxu0
        %v1721 = vpop.f32.mrb[0].mxu0
        %v1722 = vadd.f32 %v1485, %v1721
        %v1723 = vpop.f32.mrb[0].mxu0
        %1724 = vmatprep.mubr.bf16.mxu0 0
        %1725 = vmatmul.mubr.bf16.gmra.mrb[0].mxu0 %v1507
        %v1726 = vpop.f32.mrb[0].mxu0
        %v1727 = vadd.f32 %v1485, %v1726
        %v1728 = vpop.f32.mrb[0].mxu0
        %v1729 = vpop.f32.mrb[0].mxu0
        %v1730 = vadd.f32 %v1485, %v1729
        %v1731 = vpop.f32.mrb[0].mxu0
        %1732 = vmatprep.mubr.bf16.mxu0 0
        %1733 = vmatmul.mubr.bf16.gmra.mrb[0].mxu0 %v1515
        %v1734 = vpop.f32.mrb[0].mxu0
        %v1735 = vadd.f32 %v1485, %v1734
        %v1736 = vpop.f32.mrb[0].mxu0
        %v1737 = vpop.f32.mrb[0].mxu0
        %v1738 = vadd.f32 %v1485, %v1737
        %v1739 = vpop.f32.mrb[0].mxu0
        %1740 = vmatprep.mubr.bf16.mxu0 0
        %1741 = vmatmul.mubr.bf16.gmra.mrb[0].mxu0 %v1523
        %v1742 = vpop.f32.mrb[0].mxu0
        %v1743 = vadd.f32 %v1485, %v1742
        %v1744 = vpop.f32.mrb[0].mxu0
        %v1745 = vpop.f32.mrb[0].mxu0
        %v1746 = vadd.f32 %v1485, %v1745
        %v1747 = vpop.f32.mrb[0].mxu0
        %1748 = vmatprep.mubr.bf16.mxu0 0
        %1749 = vmatmul.mubr.bf16.gmra.mrb[0].mxu0 %v1531
        %v1750 = vpop.f32.mrb[0].mxu0
        %v1751 = vadd.f32 %v1485, %v1750
        %v1752 = vpop.f32.mrb[0].mxu0
        %v1753 = vpop.f32.mrb[0].mxu0
        %v1754 = vadd.f32 %v1485, %v1753
        %v1755 = vpop.f32.mrb[0].mxu0
        %1756 = vmatprep.mubr.bf16.mxu0 0
        %1757 = vmatmul.mubr.bf16.gmra.mrb[0].mxu0 %v1539
        %v1758 = vpop.f32.mrb[0].mxu0
        %v1759 = vadd.f32 %v1485, %v1758
        %v1760 = vpop.f32.mrb[0].mxu0
        %v1761 = vpop.f32.mrb[0].mxu0
        %v1762 = vadd.f32 %v1485, %v1761
        %v1763 = vpop.f32.mrb[0].mxu0
        %1764 = vmatprep.mubr.bf16.mxu0 0
        %1765 = vmatmul.mubr.bf16.gmra.mrb[0].mxu0 %v1547
        %v1766 = vpop.f32.mrb[0].mxu0
        %v1767 = vadd.f32 %v1485, %v1766
        %v1768 = vpop.f32.mrb[0].mxu0
        %v1769 = vpop.f32.mrb[0].mxu0
        %v1770 = vadd.f32 %v1485, %v1769
        %v1771 = vpop.f32.mrb[0].mxu0
        %1772 = vmatprep.mubr.bf16.mxu0 0
        %1773 = vmatmul.mubr.bf16.gmra.mrb[0].mxu0 %v1555
        %v1774 = vpop.f32.mrb[0].mxu0
        %v1775 = vadd.f32 %v1485, %v1774
        %v1776 = vpop.f32.mrb[0].mxu0
        %v1777 = vpop.f32.mrb[0].mxu0
        %v1778 = vadd.f32 %v1485, %v1777
        %v1779 = vpop.f32.mrb[0].mxu0
        %1780 = vmatprep.mubr.bf16.mxu0 0
        %1781 = vmatmul.mubr.bf16.gmra.mrb[0].mxu0 %v1563
        %v1782 = vpop.f32.mrb[0].mxu0
        %v1783 = vadd.f32 %v1485, %v1782
        %v1784 = vpop.f32.mrb[0].mxu0
        %v1785 = vpop.f32.mrb[0].mxu0
        %v1786 = vadd.f32 %v1485, %v1785
        %v1787 = vpop.f32.mrb[0].mxu0
        %1788 = vmatprep.mubr.bf16.mxu0 0
        %1789 = vmatmul.mubr.bf16.gmra.mrb[0].mxu0 %v1571
        %v1790 = vpop.f32.mrb[0].mxu0
        %v1791 = vadd.f32 %v1485, %v1790
        %v1792 = vpop.f32.mrb[0].mxu0
        %v1793 = vpop.f32.mrb[0].mxu0
        %v1794 = vadd.f32 %v1485, %v1793
        %v1795 = vpop.f32.mrb[0].mxu0
        %1796 = vmatprep.mubr.bf16.mxu0 0
        %1797 = vmatmul.mubr.bf16.gmra.mrb[0].mxu0 %v1579
        %v1798 = vpop.f32.mrb[0].mxu0
        %v1799 = vadd.f32 %v1485, %v1798
        %v1800 = vpop.f32.mrb[0].mxu0
        %v1801 = vpop.f32.mrb[0].mxu0
        %v1802 = vadd.f32 %v1485, %v1801
        %v1803 = vpop.f32.mrb[0].mxu0
        %1804 = vmatprep.mubr.bf16.mxu0 0
        %1805 = vmatmul.mubr.bf16.gmra.mrb[0].mxu0 %v1587
        %v1806 = vpop.f32.mrb[0].mxu0
        %v1807 = vadd.f32 %v1485, %v1806
        %v1808 = vpop.f32.mrb[0].mxu0
        %v1809 = vpop.f32.mrb[0].mxu0
        %v1810 = vadd.f32 %v1485, %v1809
        %v1811 = vpop.f32.mrb[0].mxu0
        %1812 = vmatprep.mubr.bf16.mxu0 0
        %1813 = vmatmul.mubr.bf16.gmra.mrb[0].mxu0 %v1595
        %v1814 = vpop.f32.mrb[0].mxu0
        %v1815 = vadd.f32 %v1485, %v1814
        %v1816 = vpop.f32.mrb[0].mxu0
        %v1817 = vpop.f32.mrb[0].mxu0
        %v1818 = vadd.f32 %v1485, %v1817
        %v1819 = vpop.f32.mrb[0].mxu0
        %1820 = vmatprep.mubr.bf16.mxu0 0
        %1821 = vmatmul.mubr.bf16.gmra.mrb[0].mxu0 %v1603
        %v1822 = vpop.f32.mrb[0].mxu0
        %v1823 = vadd.f32 %v1485, %v1822
        %v1824 = vpop.f32.mrb[0].mxu0
        %v1825 = vpop.f32.mrb[0].mxu0
        %v1826 = vadd.f32 %v1485, %v1825
        %v1827 = vpop.f32.mrb[0].mxu0
        %1828 = vmatprep.mubr.bf16.mxu0 0
        %1829 = vmatmul.mubr.bf16.gmra.mrb[0].mxu0 %v1611
        %v1830 = vpop.f32.mrb[0].mxu0
        %v1831 = vadd.f32 %v1485, %v1830
        %v1832 = vpop.f32.mrb[0].mxu0
        %v1833 = vpop.f32.mrb[0].mxu0
        %v1834 = vadd.f32 %v1485, %v1833
        %v1835 = vpop.f32.mrb[0].mxu0
        %1836 = vmatprep.mubr.bf16.mxu0 0
        %1837 = vmatmul.mubr.bf16.gmra.mrb[0].mxu0 %v1619
        %v1838 = vpop.f32.mrb[0].mxu0
        %v1839 = vadd.f32 %v1485, %v1838
        %v1840 = vpop.f32.mrb[0].mxu0
        %v1841 = vpop.f32.mrb[0].mxu0
        %v1842 = vadd.f32 %v1485, %v1841
        %v1843 = vpop.f32.mrb[0].mxu0
        %1844 = vdwg.mxu0
        %1845 = vst [vmem:[#allocation3] sm:$0xff] %v1719
        %1846 = vst [vmem:[#allocation3 + $0x8] sm:$0xff] %v1722
        %1847 = vst [vmem:[#allocation3 + $0x10] sm:$0xff] %v1727
        %1848 = vst [vmem:[#allocation3 + $0x18] sm:$0xff] %v1730
        %1849 = vst [vmem:[#allocation3 + $0x20] sm:$0xff] %v1735
        %1850 = vst [vmem:[#allocation3 + $0x28] sm:$0xff] %v1738
        %1851 = vst [vmem:[#allocation3 + $0x30] sm:$0xff] %v1743
        %1852 = vst [vmem:[#allocation3 + $0x38] sm:$0xff] %v1746
        %1853 = vst [vmem:[#allocation3 + $0x40] sm:$0xff] %v1751
        %1854 = vst [vmem:[#allocation3 + $0x48] sm:$0xff] %v1754
        %1855 = vst [vmem:[#allocation3 + $0x50] sm:$0xff] %v1759
        %1856 = vst [vmem:[#allocation3 + $0x58] sm:$0xff] %v1762
        %1857 = vst [vmem:[#allocation3 + $0x60] sm:$0xff] %v1767
        %1858 = vst [vmem:[#allocation3 + $0x68] sm:$0xff] %v1770
        %1859 = vst [vmem:[#allocation3 + $0x70] sm:$0xff] %v1775
        %1860 = vst [vmem:[#allocation3 + $0x78] sm:$0xff] %v1778
        %1861 = vst [vmem:[#allocation3 + $0x80] sm:$0xff] %v1783
        %1862 = vst [vmem:[#allocation3 + $0x88] sm:$0xff] %v1786
        %1863 = vst [vmem:[#allocation3 + $0x90] sm:$0xff] %v1791
        %1864 = vst [vmem:[#allocation3 + $0x98] sm:$0xff] %v1794
        %1865 = vst [vmem:[#allocation3 + $0xa0] sm:$0xff] %v1799
        %1866 = vst [vmem:[#allocation3 + $0xa8] sm:$0xff] %v1802
        %1867 = vst [vmem:[#allocation3 + $0xb0] sm:$0xff] %v1807
        %1868 = vst [vmem:[#allocation3 + $0xb8] sm:$0xff] %v1810
        %1869 = vst [vmem:[#allocation3 + $0xc0] sm:$0xff] %v1815
        %1870 = vst [vmem:[#allocation3 + $0xc8] sm:$0xff] %v1818
        %1871 = vst [vmem:[#allocation3 + $0xd0] sm:$0xff] %v1823
        %1872 = vst [vmem:[#allocation3 + $0xd8] sm:$0xff] %v1826
        %1873 = vst [vmem:[#allocation3 + $0xe0] sm:$0xff] %v1831
        %1874 = vst [vmem:[#allocation3 + $0xe8] sm:$0xff] %v1834
        %1875 = vst [vmem:[#allocation3 + $0xf0] sm:$0xff] %v1839
        %1876 = vst [vmem:[#allocation3 + $0xf8] sm:$0xff] %v1842
        %v1877 = vld [vmem:[#allocation2 + $0x8] sm:$0xff]
        %v1878 = vld [vmem:[#allocation2 + $0x10] sm:$0xff]
        %v1879 = vld [vmem:[#allocation2 + $0x18] sm:$0xff]
        %v1880 = vld [vmem:[#allocation2 + $0x20] sm:$0xff]
        %v1881 = vld [vmem:[#allocation2 + $0x28] sm:$0xff]
        %v1882 = vld [vmem:[#allocation2 + $0x30] sm:$0xff]
        %v1883 = vld [vmem:[#allocation2 + $0x38] sm:$0xff]
        %v1884 = vld [vmem:[#allocation2 + $0x40] sm:$0xff]
        %v1885 = vld [vmem:[#allocation2 + $0x48] sm:$0xff]
        %v1886 = vld [vmem:[#allocation2 + $0x50] sm:$0xff]
        %v1887 = vld [vmem:[#allocation2 + $0x58] sm:$0xff]
        %v1888 = vld [vmem:[#allocation2 + $0x60] sm:$0xff]
        %v1889 = vld [vmem:[#allocation2 + $0x68] sm:$0xff]
        %v1890 = vld [vmem:[#allocation2 + $0x70] sm:$0xff]
        %v1891 = vld [vmem:[#allocation2 + $0x78] sm:$0xff]
        %v1892 = vld [vmem:[#allocation2 + $0x80] sm:$0xff]
        %s1893 = scalar_lea.vmem %s3, 64
        %v1894 = vld [vmem:[%s1893] sm:$0xf]
        %v1895 = vld [vmem:[%s1893 + $0x4] sm:$0xf]
        %v1896 = vld [vmem:[%s1893 + $0x8] sm:$0xf]
        %v1897 = vld [vmem:[%s1893 + $0xc] sm:$0xf]
        %v1898 = vld [vmem:[%s1893 + $0x10] sm:$0xf]
        %v1899 = vld [vmem:[%s1893 + $0x14] sm:$0xf]
        %v1900 = vld [vmem:[%s1893 + $0x18] sm:$0xf]
        %v1901 = vld [vmem:[%s1893 + $0x1c] sm:$0xf]
        %v1902 = vld [vmem:[%s1893 + $0x20] sm:$0xf]
        %v1903 = vld [vmem:[%s1893 + $0x24] sm:$0xf]
        %v1904 = vld [vmem:[%s1893 + $0x28] sm:$0xf]
        %v1905 = vld [vmem:[%s1893 + $0x2c] sm:$0xf]
        %v1906 = vld [vmem:[%s1893 + $0x30] sm:$0xf]
        %v1907 = vld [vmem:[%s1893 + $0x34] sm:$0xf]
        %v1908 = vld [vmem:[%s1893 + $0x38] sm:$0xf]
        %v1909 = vld [vmem:[%s1893 + $0x3c] sm:$0xf]
        %v1926 = vunpack.c.l.b16 %v1894
        %v1927 = vunpack.c.l.b16 %v1895
        %v1928 = vunpack.c.l.b16 %v1896
        %v1929 = vunpack.c.l.b16 %v1897
        %v1930 = vunpack.c.l.b16 %v1898
        %v1931 = vunpack.c.l.b16 %v1899
        %v1932 = vunpack.c.l.b16 %v1900
        %v1933 = vunpack.c.l.b16 %v1901
        %v1934 = vunpack.c.l.b16 %v1902
        %v1935 = vunpack.c.l.b16 %v1903
        %v1936 = vunpack.c.l.b16 %v1904
        %v1937 = vunpack.c.l.b16 %v1905
        %v1938 = vunpack.c.l.b16 %v1906
        %v1939 = vunpack.c.l.b16 %v1907
        %v1940 = vunpack.c.l.b16 %v1908
        %v1941 = vunpack.c.l.b16 %v1909
        %v1942 = vpack.c.b16 %v1927, %v1926
        %v1943 = vpack.c.b16 %v1929, %v1928
        %v1944 = vpack.c.b16 %v1931, %v1930
        %v1945 = vpack.c.b16 %v1933, %v1932
        %v1946 = vpack.c.b16 %v1935, %v1934
        %v1947 = vpack.c.b16 %v1937, %v1936
        %v1948 = vpack.c.b16 %v1939, %v1938
        %v1949 = vpack.c.b16 %v1941, %v1940
        %1958 = vmatprep.subr.bf16.mxu0 0
        %1959 = vmatpush1.bf16.msra.mxu0 %v1942
        %1960 = vmatprep.subr.bf16.mxu0 0
        %1961 = vmatpush1.bf16.msra.mxu0 %v1943
        %1962 = vmatprep.subr.bf16.mxu0 0
        %1963 = vmatpush1.bf16.msra.mxu0 %v1944
        %1964 = vmatprep.subr.bf16.mxu0 0
        %1965 = vmatpush1.bf16.msra.mxu0 %v1945
        %1966 = vmatprep.subr.bf16.mxu0 0
        %1967 = vmatpush1.bf16.msra.mxu0 %v1946
        %1968 = vmatprep.subr.bf16.mxu0 0
        %1969 = vmatpush1.bf16.msra.mxu0 %v1947
        %1970 = vmatprep.subr.bf16.mxu0 0
        %1971 = vmatpush1.bf16.msra.mxu0 %v1948
        %1972 = vmatprep.subr.bf16.mxu0 0
        %1973 = vmatpush1.bf16.msra.mxu0 %v1949
        %1974 = vmatprep.subr.bf16.mxu0 0
        %1975 = vmatpush1.bf16.msra.mxu0 0
        %1976 = vmatprep.subr.bf16.mxu0 0
        %1977 = vmatpush1.bf16.msra.mxu0 0
        %1978 = vmatprep.subr.bf16.mxu0 0
        %1979 = vmatpush1.bf16.msra.mxu0 0
        %1980 = vmatprep.subr.bf16.mxu0 0
        %1981 = vmatpush1.bf16.msra.mxu0 0
        %1982 = vmatprep.subr.bf16.mxu0 0
        %1983 = vmatpush1.bf16.msra.mxu0 0
        %1984 = vmatprep.subr.bf16.mxu0 0
        %1985 = vmatpush1.bf16.msra.mxu0 0
        %1986 = vmatprep.subr.bf16.mxu0 0
        %1987 = vmatpush1.bf16.msra.mxu0 0
        %1988 = vmatprep.subr.bf16.mxu0 0
        %1989 = vmatpush1.bf16.msra.mxu0 0
        %1990 = vmatprep.mubr.bf16.mxu0 0
        %1991 = vmatmul.mubr.bf16.gmra.mrb[0].mxu0 %v1877
        %v1992 = vpop.f32.mrb[0].mxu0
        %v1993 = vadd.f32 0.0, %v1992
        %v1994 = vpop.f32.mrb[0].mxu0
        %v1995 = vpop.f32.mrb[0].mxu0
        %v1996 = vadd.f32 0.0, %v1995
        %v1997 = vpop.f32.mrb[0].mxu0
        %1998 = vmatprep.mubr.bf16.mxu0 0
        %1999 = vmatmul.mubr.bf16.gmra.mrb[0].mxu0 %v1878
        %v2000 = vpop.f32.mrb[0].mxu0
        %v2001 = vadd.f32 0.0, %v2000
        %v2002 = vpop.f32.mrb[0].mxu0
        %v2003 = vpop.f32.mrb[0].mxu0
        %v2004 = vadd.f32 0.0, %v2003
        %v2005 = vpop.f32.mrb[0].mxu0
        %2006 = vmatprep.mubr.bf16.mxu0 0
        %2007 = vmatmul.mubr.bf16.gmra.mrb[0].mxu0 %v1879
        %v2008 = vpop.f32.mrb[0].mxu0
        %v2009 = vadd.f32 0.0, %v2008
        %v2010 = vpop.f32.mrb[0].mxu0
        %v2011 = vpop.f32.mrb[0].mxu0
        %v2012 = vadd.f32 0.0, %v2011
        %v2013 = vpop.f32.mrb[0].mxu0
        %2014 = vmatprep.mubr.bf16.mxu0 0
        %2015 = vmatmul.mubr.bf16.gmra.mrb[0].mxu0 %v1880
        %v2016 = vpop.f32.mrb[0].mxu0
        %v2017 = vadd.f32 0.0, %v2016
        %v2018 = vpop.f32.mrb[0].mxu0
        %v2019 = vpop.f32.mrb[0].mxu0
        %v2020 = vadd.f32 0.0, %v2019
        %v2021 = vpop.f32.mrb[0].mxu0
        %2022 = vmatprep.mubr.bf16.mxu0 0
        %2023 = vmatmul.mubr.bf16.gmra.mrb[0].mxu0 %v1881
        %v2024 = vpop.f32.mrb[0].mxu0
        %v2025 = vadd.f32 0.0, %v2024
        %v2026 = vpop.f32.mrb[0].mxu0
        %v2027 = vpop.f32.mrb[0].mxu0
        %v2028 = vadd.f32 0.0, %v2027
        %v2029 = vpop.f32.mrb[0].mxu0
        %2030 = vmatprep.mubr.bf16.mxu0 0
        %2031 = vmatmul.mubr.bf16.gmra.mrb[0].mxu0 %v1882
        %v2032 = vpop.f32.mrb[0].mxu0
        %v2033 = vadd.f32 0.0, %v2032
        %v2034 = vpop.f32.mrb[0].mxu0
        %v2035 = vpop.f32.mrb[0].mxu0
        %v2036 = vadd.f32 0.0, %v2035
        %v2037 = vpop.f32.mrb[0].mxu0
        %2038 = vmatprep.mubr.bf16.mxu0 0
        %2039 = vmatmul.mubr.bf16.gmra.mrb[0].mxu0 %v1883
        %v2040 = vpop.f32.mrb[0].mxu0
        %v2041 = vadd.f32 0.0, %v2040
        %v2042 = vpop.f32.mrb[0].mxu0
        %v2043 = vpop.f32.mrb[0].mxu0
        %v2044 = vadd.f32 0.0, %v2043
        %v2045 = vpop.f32.mrb[0].mxu0
        %2046 = vmatprep.mubr.bf16.mxu0 0
        %2047 = vmatmul.mubr.bf16.gmra.mrb[0].mxu0 %v1884
        %v2048 = vpop.f32.mrb[0].mxu0
        %v2049 = vadd.f32 0.0, %v2048
        %v2050 = vpop.f32.mrb[0].mxu0
        %v2051 = vpop.f32.mrb[0].mxu0
        %v2052 = vadd.f32 0.0, %v2051
        %v2053 = vpop.f32.mrb[0].mxu0
        %2054 = vmatprep.mubr.bf16.mxu0 0
        %2055 = vmatmul.mubr.bf16.gmra.mrb[0].mxu0 %v1885
        %v2056 = vpop.f32.mrb[0].mxu0
        %v2057 = vadd.f32 0.0, %v2056
        %v2058 = vpop.f32.mrb[0].mxu0
        %v2059 = vpop.f32.mrb[0].mxu0
        %v2060 = vadd.f32 0.0, %v2059
        %v2061 = vpop.f32.mrb[0].mxu0
        %2062 = vmatprep.mubr.bf16.mxu0 0
        %2063 = vmatmul.mubr.bf16.gmra.mrb[0].mxu0 %v1886
        %v2064 = vpop.f32.mrb[0].mxu0
        %v2065 = vadd.f32 0.0, %v2064
        %v2066 = vpop.f32.mrb[0].mxu0
        %v2067 = vpop.f32.mrb[0].mxu0
        %v2068 = vadd.f32 0.0, %v2067
        %v2069 = vpop.f32.mrb[0].mxu0
        %2070 = vmatprep.mubr.bf16.mxu0 0
        %2071 = vmatmul.mubr.bf16.gmra.mrb[0].mxu0 %v1887
        %v2072 = vpop.f32.mrb[0].mxu0
        %v2073 = vadd.f32 0.0, %v2072
        %v2074 = vpop.f32.mrb[0].mxu0
        %v2075 = vpop.f32.mrb[0].mxu0
        %v2076 = vadd.f32 0.0, %v2075
        %v2077 = vpop.f32.mrb[0].mxu0
        %2078 = vmatprep.mubr.bf16.mxu0 0
        %2079 = vmatmul.mubr.bf16.gmra.mrb[0].mxu0 %v1888
        %v2080 = vpop.f32.mrb[0].mxu0
        %v2081 = vadd.f32 0.0, %v2080
        %v2082 = vpop.f32.mrb[0].mxu0
        %v2083 = vpop.f32.mrb[0].mxu0
        %v2084 = vadd.f32 0.0, %v2083
        %v2085 = vpop.f32.mrb[0].mxu0
        %2086 = vmatprep.mubr.bf16.mxu0 0
        %2087 = vmatmul.mubr.bf16.gmra.mrb[0].mxu0 %v1889
        %v2088 = vpop.f32.mrb[0].mxu0
        %v2089 = vadd.f32 0.0, %v2088
        %v2090 = vpop.f32.mrb[0].mxu0
        %v2091 = vpop.f32.mrb[0].mxu0
        %v2092 = vadd.f32 0.0, %v2091
        %v2093 = vpop.f32.mrb[0].mxu0
        %2094 = vmatprep.mubr.bf16.mxu0 0
        %2095 = vmatmul.mubr.bf16.gmra.mrb[0].mxu0 %v1890
        %v2096 = vpop.f32.mrb[0].mxu0
        %v2097 = vadd.f32 0.0, %v2096
        %v2098 = vpop.f32.mrb[0].mxu0
        %v2099 = vpop.f32.mrb[0].mxu0
        %v2100 = vadd.f32 0.0, %v2099
        %v2101 = vpop.f32.mrb[0].mxu0
        %2102 = vmatprep.mubr.bf16.mxu0 0
        %2103 = vmatmul.mubr.bf16.gmra.mrb[0].mxu0 %v1891
        %v2104 = vpop.f32.mrb[0].mxu0
        %v2105 = vadd.f32 0.0, %v2104
        %v2106 = vpop.f32.mrb[0].mxu0
        %v2107 = vpop.f32.mrb[0].mxu0
        %v2108 = vadd.f32 0.0, %v2107
        %v2109 = vpop.f32.mrb[0].mxu0
        %2110 = vmatprep.mubr.bf16.mxu0 0
        %2111 = vmatmul.mubr.bf16.gmra.mrb[0].mxu0 %v1892
        %v2112 = vpop.f32.mrb[0].mxu0
        %v2113 = vadd.f32 0.0, %v2112
        %v2114 = vpop.f32.mrb[0].mxu0
        %v2115 = vpop.f32.mrb[0].mxu0
        %v2116 = vadd.f32 0.0, %v2115
        %v2117 = vpop.f32.mrb[0].mxu0
        %2118 = vdwg.mxu0
        %v2119 = vld [vmem:[#allocation3] sm:$0xff]
        %v2120 = vld [vmem:[#allocation3 + $0x8] sm:$0xff]
        %v2121 = vld [vmem:[#allocation3 + $0x10] sm:$0xff]
        %v2122 = vld [vmem:[#allocation3 + $0x18] sm:$0xff]
        %v2123 = vld [vmem:[#allocation3 + $0x20] sm:$0xff]
        %v2124 = vld [vmem:[#allocation3 + $0x28] sm:$0xff]
        %v2125 = vld [vmem:[#allocation3 + $0x30] sm:$0xff]
        %v2126 = vld [vmem:[#allocation3 + $0x38] sm:$0xff]
        %v2127 = vld [vmem:[#allocation3 + $0x40] sm:$0xff]
        %v2128 = vld [vmem:[#allocation3 + $0x48] sm:$0xff]
        %v2129 = vld [vmem:[#allocation3 + $0x50] sm:$0xff]
        %v2130 = vld [vmem:[#allocation3 + $0x58] sm:$0xff]
        %v2131 = vld [vmem:[#allocation3 + $0x60] sm:$0xff]
        %v2132 = vld [vmem:[#allocation3 + $0x68] sm:$0xff]
        %v2133 = vld [vmem:[#allocation3 + $0x70] sm:$0xff]
        %v2134 = vld [vmem:[#allocation3 + $0x78] sm:$0xff]
        %v2135 = vld [vmem:[#allocation3 + $0x80] sm:$0xff]
        %v2136 = vld [vmem:[#allocation3 + $0x88] sm:$0xff]
        %v2137 = vld [vmem:[#allocation3 + $0x90] sm:$0xff]
        %v2138 = vld [vmem:[#allocation3 + $0x98] sm:$0xff]
        %v2139 = vld [vmem:[#allocation3 + $0xa0] sm:$0xff]
        %v2140 = vld [vmem:[#allocation3 + $0xa8] sm:$0xff]
        %v2141 = vld [vmem:[#allocation3 + $0xb0] sm:$0xff]
        %v2142 = vld [vmem:[#allocation3 + $0xb8] sm:$0xff]
        %v2143 = vld [vmem:[#allocation3 + $0xc0] sm:$0xff]
        %v2144 = vld [vmem:[#allocation3 + $0xc8] sm:$0xff]
        %v2145 = vld [vmem:[#allocation3 + $0xd0] sm:$0xff]
        %v2146 = vld [vmem:[#allocation3 + $0xd8] sm:$0xff]
        %v2147 = vld [vmem:[#allocation3 + $0xe0] sm:$0xff]
        %v2148 = vld [vmem:[#allocation3 + $0xe8] sm:$0xff]
        %v2149 = vld [vmem:[#allocation3 + $0xf0] sm:$0xff]
        %v2150 = vld [vmem:[#allocation3 + $0xf8] sm:$0xff]
        %v2151 = vadd.f32 %v2119, %v1993
        %v2152 = vadd.f32 %v2120, %v1996
        %v2153 = vadd.f32 %v2121, %v2001
        %v2154 = vadd.f32 %v2122, %v2004
        %v2155 = vadd.f32 %v2123, %v2009
        %v2156 = vadd.f32 %v2124, %v2012
        %v2157 = vadd.f32 %v2125, %v2017
        %v2158 = vadd.f32 %v2126, %v2020
        %v2159 = vadd.f32 %v2127, %v2025
        %v2160 = vadd.f32 %v2128, %v2028
        %v2161 = vadd.f32 %v2129, %v2033
        %v2162 = vadd.f32 %v2130, %v2036
        %v2163 = vadd.f32 %v2131, %v2041
        %v2164 = vadd.f32 %v2132, %v2044
        %v2165 = vadd.f32 %v2133, %v2049
        %v2166 = vadd.f32 %v2134, %v2052
        %v2167 = vadd.f32 %v2135, %v2057
        %v2168 = vadd.f32 %v2136, %v2060
        %v2169 = vadd.f32 %v2137, %v2065
        %v2170 = vadd.f32 %v2138, %v2068
        %v2171 = vadd.f32 %v2139, %v2073
        %v2172 = vadd.f32 %v2140, %v2076
        %v2173 = vadd.f32 %v2141, %v2081
        %v2174 = vadd.f32 %v2142, %v2084
        %v2175 = vadd.f32 %v2143, %v2089
        %v2176 = vadd.f32 %v2144, %v2092
        %v2177 = vadd.f32 %v2145, %v2097
        %v2178 = vadd.f32 %v2146, %v2100
        %v2179 = vadd.f32 %v2147, %v2105
        %v2180 = vadd.f32 %v2148, %v2108
        %v2181 = vadd.f32 %v2149, %v2113
        %v2182 = vadd.f32 %v2150, %v2116
        %2183 = vst [vmem:[#allocation3] sm:$0xff] %v2151
        %2184 = vst [vmem:[#allocation3 + $0x8] sm:$0xff] %v2152
        %2185 = vst [vmem:[#allocation3 + $0x10] sm:$0xff] %v2153
        %2186 = vst [vmem:[#allocation3 + $0x18] sm:$0xff] %v2154
        %2187 = vst [vmem:[#allocation3 + $0x20] sm:$0xff] %v2155
        %2188 = vst [vmem:[#allocation3 + $0x28] sm:$0xff] %v2156
        %2189 = vst [vmem:[#allocation3 + $0x30] sm:$0xff] %v2157
        %2190 = vst [vmem:[#allocation3 + $0x38] sm:$0xff] %v2158
        %2191 = vst [vmem:[#allocation3 + $0x40] sm:$0xff] %v2159
        %2192 = vst [vmem:[#allocation3 + $0x48] sm:$0xff] %v2160
        %2193 = vst [vmem:[#allocation3 + $0x50] sm:$0xff] %v2161
        %2194 = vst [vmem:[#allocation3 + $0x58] sm:$0xff] %v2162
        %2195 = vst [vmem:[#allocation3 + $0x60] sm:$0xff] %v2163
        %2196 = vst [vmem:[#allocation3 + $0x68] sm:$0xff] %v2164
        %2197 = vst [vmem:[#allocation3 + $0x70] sm:$0xff] %v2165
        %2198 = vst [vmem:[#allocation3 + $0x78] sm:$0xff] %v2166
        %2199 = vst [vmem:[#allocation3 + $0x80] sm:$0xff] %v2167
        %2200 = vst [vmem:[#allocation3 + $0x88] sm:$0xff] %v2168
        %2201 = vst [vmem:[#allocation3 + $0x90] sm:$0xff] %v2169
        %2202 = vst [vmem:[#allocation3 + $0x98] sm:$0xff] %v2170
        %2203 = vst [vmem:[#allocation3 + $0xa0] sm:$0xff] %v2171
        %2204 = vst [vmem:[#allocation3 + $0xa8] sm:$0xff] %v2172
        %2205 = vst [vmem:[#allocation3 + $0xb0] sm:$0xff] %v2173
        %2206 = vst [vmem:[#allocation3 + $0xb8] sm:$0xff] %v2174
        %2207 = vst [vmem:[#allocation3 + $0xc0] sm:$0xff] %v2175
        %2208 = vst [vmem:[#allocation3 + $0xc8] sm:$0xff] %v2176
        %2209 = vst [vmem:[#allocation3 + $0xd0] sm:$0xff] %v2177
        %2210 = vst [vmem:[#allocation3 + $0xd8] sm:$0xff] %v2178
        %2211 = vst [vmem:[#allocation3 + $0xe0] sm:$0xff] %v2179
        %2212 = vst [vmem:[#allocation3 + $0xe8] sm:$0xff] %v2180
        %2213 = vst [vmem:[#allocation3 + $0xf0] sm:$0xff] %v2181
        %2214 = vst [vmem:[#allocation3 + $0xf8] sm:$0xff] %v2182
        %v2215 = vld [vmem:[#allocation2 + $0x8] sm:$0xff]
        %v2216 = vld [vmem:[#allocation2 + $0x10] sm:$0xff]
        %v2217 = vld [vmem:[#allocation2 + $0x18] sm:$0xff]
        %v2218 = vld [vmem:[#allocation2 + $0x20] sm:$0xff]
        %v2219 = vld [vmem:[#allocation2 + $0x28] sm:$0xff]
        %v2220 = vld [vmem:[#allocation2 + $0x30] sm:$0xff]
        %v2221 = vld [vmem:[#allocation2 + $0x38] sm:$0xff]
        %v2222 = vld [vmem:[#allocation2 + $0x40] sm:$0xff]
        %v2223 = vld [vmem:[#allocation2 + $0x48] sm:$0xff]
        %v2224 = vld [vmem:[#allocation2 + $0x50] sm:$0xff]
        %v2225 = vld [vmem:[#allocation2 + $0x58] sm:$0xff]
        %v2226 = vld [vmem:[#allocation2 + $0x60] sm:$0xff]
        %v2227 = vld [vmem:[#allocation2 + $0x68] sm:$0xff]
        %v2228 = vld [vmem:[#allocation2 + $0x70] sm:$0xff]
        %v2229 = vld [vmem:[#allocation2 + $0x78] sm:$0xff]
        %v2230 = vld [vmem:[#allocation2 + $0x80] sm:$0xff]
        %v2231 = vld [vmem:[#allocation2 + $0x88] sm:$0x1]
        %v2232 = vsel %vm1077, 1, 0
        %v2233 = vsel %vm1078, 1, 0
        %v2234 = vsel %vm1079, 1, 0
        %v2235 = vsel %vm1080, 1, 0
        %v2236 = vsel %vm1081, 1, 0
        %v2237 = vsel %vm1082, 1, 0
        %v2238 = vsel %vm1083, 1, 0
        %v2239 = vsel %vm1084, 1, 0
        %v2240 = vsel %vm1085, 1, 0
        %v2241 = vsel %vm1086, 1, 0
        %v2242 = vsel %vm1087, 1, 0
        %v2243 = vsel %vm1088, 1, 0
        %v2244 = vsel %vm1089, 1, 0
        %v2245 = vsel %vm1090, 1, 0
        %v2246 = vsel %vm1091, 1, 0
        %v2247 = vsel %vm1092, 1, 0
        %v2248 = vsel %vm1093, 1, 0
        %v2249 = vsel %vm1094, 1, 0
        %v2250 = vsel %vm1095, 1, 0
        %v2251 = vsel %vm1096, 1, 0
        %v2252 = vsel %vm1097, 1, 0
        %v2253 = vsel %vm1098, 1, 0
        %v2254 = vsel %vm1099, 1, 0
        %v2255 = vsel %vm1100, 1, 0
        %v2256 = vsel %vm1101, 1, 0
        %v2257 = vsel %vm1102, 1, 0
        %v2258 = vsel %vm1103, 1, 0
        %v2259 = vsel %vm1104, 1, 0
        %v2260 = vsel %vm1105, 1, 0
        %v2261 = vsel %vm1106, 1, 0
        %v2262 = vsel %vm1107, 1, 0
        %v2263 = vsel %vm1108, 1, 0
        %vm2264 = vcmp.eq.s32.totalorder %v2232, 1
        %vm2265 = vcmp.eq.s32.totalorder %v2233, 1
        %vm2266 = vcmp.eq.s32.totalorder %v2234, 1
        %vm2267 = vcmp.eq.s32.totalorder %v2235, 1
        %vm2268 = vcmp.eq.s32.totalorder %v2236, 1
        %vm2269 = vcmp.eq.s32.totalorder %v2237, 1
        %vm2270 = vcmp.eq.s32.totalorder %v2238, 1
        %vm2271 = vcmp.eq.s32.totalorder %v2239, 1
        %vm2272 = vcmp.eq.s32.totalorder %v2240, 1
        %vm2273 = vcmp.eq.s32.totalorder %v2241, 1
        %vm2274 = vcmp.eq.s32.totalorder %v2242, 1
        %vm2275 = vcmp.eq.s32.totalorder %v2243, 1
        %vm2276 = vcmp.eq.s32.totalorder %v2244, 1
        %vm2277 = vcmp.eq.s32.totalorder %v2245, 1
        %vm2278 = vcmp.eq.s32.totalorder %v2246, 1
        %vm2279 = vcmp.eq.s32.totalorder %v2247, 1
        %vm2280 = vcmp.eq.s32.totalorder %v2248, 1
        %vm2281 = vcmp.eq.s32.totalorder %v2249, 1
        %vm2282 = vcmp.eq.s32.totalorder %v2250, 1
        %vm2283 = vcmp.eq.s32.totalorder %v2251, 1
        %vm2284 = vcmp.eq.s32.totalorder %v2252, 1
        %vm2285 = vcmp.eq.s32.totalorder %v2253, 1
        %vm2286 = vcmp.eq.s32.totalorder %v2254, 1
        %vm2287 = vcmp.eq.s32.totalorder %v2255, 1
        %vm2288 = vcmp.eq.s32.totalorder %v2256, 1
        %vm2289 = vcmp.eq.s32.totalorder %v2257, 1
        %vm2290 = vcmp.eq.s32.totalorder %v2258, 1
        %vm2291 = vcmp.eq.s32.totalorder %v2259, 1
        %vm2292 = vcmp.eq.s32.totalorder %v2260, 1
        %vm2293 = vcmp.eq.s32.totalorder %v2261, 1
        %vm2294 = vcmp.eq.s32.totalorder %v2262, 1
        %vm2295 = vcmp.eq.s32.totalorder %v2263, 1
        %vm2296 = vmpackc.low %vm2264, %vm2264
        %vm2297 = vmpackc.low %vm2265, %vm2265
        %vm2298 = vmpackc.low %vm2266, %vm2266
        %vm2299 = vmpackc.low %vm2267, %vm2267
        %vm2300 = vmpackc.low %vm2268, %vm2268
        %vm2301 = vmpackc.low %vm2269, %vm2269
        %vm2302 = vmpackc.low %vm2270, %vm2270
        %vm2303 = vmpackc.low %vm2271, %vm2271
        %vm2304 = vmpackc.low %vm2272, %vm2272
        %vm2305 = vmpackc.low %vm2273, %vm2273
        %vm2306 = vmpackc.low %vm2274, %vm2274
        %vm2307 = vmpackc.low %vm2275, %vm2275
        %vm2308 = vmpackc.low %vm2276, %vm2276
        %vm2309 = vmpackc.low %vm2277, %vm2277
        %vm2310 = vmpackc.low %vm2278, %vm2278
        %vm2311 = vmpackc.low %vm2279, %vm2279
        %vm2312 = vmpackc.low %vm2280, %vm2280
        %vm2313 = vmpackc.low %vm2281, %vm2281
        %vm2314 = vmpackc.low %vm2282, %vm2282
        %vm2315 = vmpackc.low %vm2283, %vm2283
        %vm2316 = vmpackc.low %vm2284, %vm2284
        %vm2317 = vmpackc.low %vm2285, %vm2285
        %vm2318 = vmpackc.low %vm2286, %vm2286
        %vm2319 = vmpackc.low %vm2287, %vm2287
        %vm2320 = vmpackc.low %vm2288, %vm2288
        %vm2321 = vmpackc.low %vm2289, %vm2289
        %vm2322 = vmpackc.low %vm2290, %vm2290
        %vm2323 = vmpackc.low %vm2291, %vm2291
        %vm2324 = vmpackc.low %vm2292, %vm2292
        %vm2325 = vmpackc.low %vm2293, %vm2293
        %vm2326 = vmpackc.low %vm2294, %vm2294
        %vm2327 = vmpackc.low %vm2295, %vm2295
        %v2328 = vsel %vm2296, 65537, 0
        %v2329 = vsel %vm2297, 65537, 0
        %v2330 = vsel %vm2298, 65537, 0
        %v2331 = vsel %vm2299, 65537, 0
        %v2332 = vsel %vm2300, 65537, 0
        %v2333 = vsel %vm2301, 65537, 0
        %v2334 = vsel %vm2302, 65537, 0
        %v2335 = vsel %vm2303, 65537, 0
        %v2336 = vsel %vm2304, 65537, 0
        %v2337 = vsel %vm2305, 65537, 0
        %v2338 = vsel %vm2306, 65537, 0
        %v2339 = vsel %vm2307, 65537, 0
        %v2340 = vsel %vm2308, 65537, 0
        %v2341 = vsel %vm2309, 65537, 0
        %v2342 = vsel %vm2310, 65537, 0
        %v2343 = vsel %vm2311, 65537, 0
        %v2344 = vsel %vm2312, 65537, 0
        %v2345 = vsel %vm2313, 65537, 0
        %v2346 = vsel %vm2314, 65537, 0
        %v2347 = vsel %vm2315, 65537, 0
        %v2348 = vsel %vm2316, 65537, 0
        %v2349 = vsel %vm2317, 65537, 0
        %v2350 = vsel %vm2318, 65537, 0
        %v2351 = vsel %vm2319, 65537, 0
        %v2352 = vsel %vm2320, 65537, 0
        %v2353 = vsel %vm2321, 65537, 0
        %v2354 = vsel %vm2322, 65537, 0
        %v2355 = vsel %vm2323, 65537, 0
        %v2356 = vsel %vm2324, 65537, 0
        %v2357 = vsel %vm2325, 65537, 0
        %v2358 = vsel %vm2326, 65537, 0
        %v2359 = vsel %vm2327, 65537, 0
        %v2360 = vunpack.c.l.b16 %v2328
        %v2361 = vunpack.c.l.b16 %v2329
        %v2362 = vunpack.c.l.b16 %v2330
        %v2363 = vunpack.c.l.b16 %v2331
        %v2364 = vunpack.c.l.b16 %v2332
        %v2365 = vunpack.c.l.b16 %v2333
        %v2366 = vunpack.c.l.b16 %v2334
        %v2367 = vunpack.c.l.b16 %v2335
        %v2368 = vunpack.c.l.b16 %v2336
        %v2369 = vunpack.c.l.b16 %v2337
        %v2370 = vunpack.c.l.b16 %v2338
        %v2371 = vunpack.c.l.b16 %v2339
        %v2372 = vunpack.c.l.b16 %v2340
        %v2373 = vunpack.c.l.b16 %v2341
        %v2374 = vunpack.c.l.b16 %v2342
        %v2375 = vunpack.c.l.b16 %v2343
        %v2376 = vunpack.c.l.b16 %v2344
        %v2377 = vunpack.c.l.b16 %v2345
        %v2378 = vunpack.c.l.b16 %v2346
        %v2379 = vunpack.c.l.b16 %v2347
        %v2380 = vunpack.c.l.b16 %v2348
        %v2381 = vunpack.c.l.b16 %v2349
        %v2382 = vunpack.c.l.b16 %v2350
        %v2383 = vunpack.c.l.b16 %v2351
        %v2384 = vunpack.c.l.b16 %v2352
        %v2385 = vunpack.c.l.b16 %v2353
        %v2386 = vunpack.c.l.b16 %v2354
        %v2387 = vunpack.c.l.b16 %v2355
        %v2388 = vunpack.c.l.b16 %v2356
        %v2389 = vunpack.c.l.b16 %v2357
        %v2390 = vunpack.c.l.b16 %v2358
        %v2391 = vunpack.c.l.b16 %v2359
        %v2392 = vpack.c.b16 %v2361, %v2360
        %v2393 = vpack.c.b16 %v2363, %v2362
        %v2394 = vpack.c.b16 %v2365, %v2364
        %v2395 = vpack.c.b16 %v2367, %v2366
        %v2396 = vpack.c.b16 %v2369, %v2368
        %v2397 = vpack.c.b16 %v2371, %v2370
        %v2398 = vpack.c.b16 %v2373, %v2372
        %v2399 = vpack.c.b16 %v2375, %v2374
        %v2400 = vpack.c.b16 %v2377, %v2376
        %v2401 = vpack.c.b16 %v2379, %v2378
        %v2402 = vpack.c.b16 %v2381, %v2380
        %v2403 = vpack.c.b16 %v2383, %v2382
        %v2404 = vpack.c.b16 %v2385, %v2384
        %v2405 = vpack.c.b16 %v2387, %v2386
        %v2406 = vpack.c.b16 %v2389, %v2388
        %v2407 = vpack.c.b16 %v2391, %v2390
        %v2409 = vshrl.u32 %v2392, 16
        %v2411 = vrot.slane %v2409, 7
        %v2412 = vshll.u32 %v2392, 16
        %v2414 = vor.u32 %v2411, %v2412
        %v2416 = vshrl.u32 %v2393, 16
        %v2418 = vrot.slane %v2416, 7
        %v2419 = vshll.u32 %v2393, 16
        %v2421 = vor.u32 %v2418, %v2419
        %v2422 = vsel %vm1487, %v2411, %v2421
        %v2424 = vshrl.u32 %v2394, 16
        %v2426 = vrot.slane %v2424, 7
        %v2427 = vshll.u32 %v2394, 16
        %v2429 = vor.u32 %v2426, %v2427
        %v2430 = vsel %vm1487, %v2418, %v2429
        %v2432 = vshrl.u32 %v2395, 16
        %v2434 = vrot.slane %v2432, 7
        %v2435 = vshll.u32 %v2395, 16
        %v2437 = vor.u32 %v2434, %v2435
        %v2438 = vsel %vm1487, %v2426, %v2437
        %v2440 = vshrl.u32 %v2396, 16
        %v2442 = vrot.slane %v2440, 7
        %v2443 = vshll.u32 %v2396, 16
        %v2445 = vor.u32 %v2442, %v2443
        %v2446 = vsel %vm1487, %v2434, %v2445
        %v2448 = vshrl.u32 %v2397, 16
        %v2450 = vrot.slane %v2448, 7
        %v2451 = vshll.u32 %v2397, 16
        %v2453 = vor.u32 %v2450, %v2451
        %v2454 = vsel %vm1487, %v2442, %v2453
        %v2456 = vshrl.u32 %v2398, 16
        %v2458 = vrot.slane %v2456, 7
        %v2459 = vshll.u32 %v2398, 16
        %v2461 = vor.u32 %v2458, %v2459
        %v2462 = vsel %vm1487, %v2450, %v2461
        %v2464 = vshrl.u32 %v2399, 16
        %v2466 = vrot.slane %v2464, 7
        %v2467 = vshll.u32 %v2399, 16
        %v2469 = vor.u32 %v2466, %v2467
        %v2470 = vsel %vm1487, %v2458, %v2469
        %v2472 = vshrl.u32 %v2400, 16
        %v2474 = vrot.slane %v2472, 7
        %v2475 = vshll.u32 %v2400, 16
        %v2477 = vor.u32 %v2474, %v2475
        %v2478 = vsel %vm1487, %v2466, %v2477
        %v2480 = vshrl.u32 %v2401, 16
        %v2482 = vrot.slane %v2480, 7
        %v2483 = vshll.u32 %v2401, 16
        %v2485 = vor.u32 %v2482, %v2483
        %v2486 = vsel %vm1487, %v2474, %v2485
        %v2488 = vshrl.u32 %v2402, 16
        %v2490 = vrot.slane %v2488, 7
        %v2491 = vshll.u32 %v2402, 16
        %v2493 = vor.u32 %v2490, %v2491
        %v2494 = vsel %vm1487, %v2482, %v2493
        %v2496 = vshrl.u32 %v2403, 16
        %v2498 = vrot.slane %v2496, 7
        %v2499 = vshll.u32 %v2403, 16
        %v2501 = vor.u32 %v2498, %v2499
        %v2502 = vsel %vm1487, %v2490, %v2501
        %v2504 = vshrl.u32 %v2404, 16
        %v2506 = vrot.slane %v2504, 7
        %v2507 = vshll.u32 %v2404, 16
        %v2509 = vor.u32 %v2506, %v2507
        %v2510 = vsel %vm1487, %v2498, %v2509
        %v2512 = vshrl.u32 %v2405, 16
        %v2514 = vrot.slane %v2512, 7
        %v2515 = vshll.u32 %v2405, 16
        %v2517 = vor.u32 %v2514, %v2515
        %v2518 = vsel %vm1487, %v2506, %v2517
        %v2520 = vshrl.u32 %v2406, 16
        %v2522 = vrot.slane %v2520, 7
        %v2523 = vshll.u32 %v2406, 16
        %v2525 = vor.u32 %v2522, %v2523
        %v2526 = vsel %vm1487, %v2514, %v2525
        %v2528 = vshrl.u32 %v2407, 16
        %v2530 = vrot.slane %v2528, 7
        %v2531 = vshll.u32 %v2407, 16
        %v2533 = vor.u32 %v2530, %v2531
        %v2534 = vsel %vm1487, %v2522, %v2533
        %vm2535 = vcmp.ne.s16.totalorder %v2414, 0
        %vm2536 = vcmp.ne.s16.totalorder %v2422, 0
        %vm2537 = vcmp.ne.s16.totalorder %v2430, 0
        %vm2538 = vcmp.ne.s16.totalorder %v2438, 0
        %vm2539 = vcmp.ne.s16.totalorder %v2446, 0
        %vm2540 = vcmp.ne.s16.totalorder %v2454, 0
        %vm2541 = vcmp.ne.s16.totalorder %v2462, 0
        %vm2542 = vcmp.ne.s16.totalorder %v2470, 0
        %vm2543 = vcmp.ne.s16.totalorder %v2478, 0
        %vm2544 = vcmp.ne.s16.totalorder %v2486, 0
        %vm2545 = vcmp.ne.s16.totalorder %v2494, 0
        %vm2546 = vcmp.ne.s16.totalorder %v2502, 0
        %vm2547 = vcmp.ne.s16.totalorder %v2510, 0
        %vm2548 = vcmp.ne.s16.totalorder %v2518, 0
        %vm2549 = vcmp.ne.s16.totalorder %v2526, 0
        %vm2550 = vcmp.ne.s16.totalorder %v2534, 0
        %vm2551 = vcmp.ne.s16.totalorder %v2530, 0
        %v2552 = vsel %vm2535, %v2215, 0
        %v2553 = vsel %vm2536, %v2216, 0
        %v2554 = vsel %vm2537, %v2217, 0
        %v2555 = vsel %vm2538, %v2218, 0
        %v2556 = vsel %vm2539, %v2219, 0
        %v2557 = vsel %vm2540, %v2220, 0
        %v2558 = vsel %vm2541, %v2221, 0
        %v2559 = vsel %vm2542, %v2222, 0
        %v2560 = vsel %vm2543, %v2223, 0
        %v2561 = vsel %vm2544, %v2224, 0
        %v2562 = vsel %vm2545, %v2225, 0
        %v2563 = vsel %vm2546, %v2226, 0
        %v2564 = vsel %vm2547, %v2227, 0
        %v2565 = vsel %vm2548, %v2228, 0
        %v2566 = vsel %vm2549, %v2229, 0
        %v2567 = vsel %vm2550, %v2230, 0
        %v2568 = vsel %vm2551, %v2231, 0
        %s2569 = scalar_lea.vmem %s3, 128
        %v2570 = vld [vmem:[%s2569] sm:$0xf]
        %v2571 = vld [vmem:[%s2569 + $0x4] sm:$0xf]
        %v2572 = vld [vmem:[%s2569 + $0x8] sm:$0xf]
        %v2573 = vld [vmem:[%s2569 + $0xc] sm:$0xf]
        %v2574 = vld [vmem:[%s2569 + $0x10] sm:$0xf]
        %v2575 = vld [vmem:[%s2569 + $0x14] sm:$0xf]
        %v2576 = vld [vmem:[%s2569 + $0x18] sm:$0xf]
        %v2577 = vld [vmem:[%s2569 + $0x1c] sm:$0xf]
        %v2578 = vld [vmem:[%s2569 + $0x20] sm:$0xf]
        %v2579 = vld [vmem:[%s2569 + $0x24] sm:$0xf]
        %v2580 = vld [vmem:[%s2569 + $0x28] sm:$0xf]
        %v2581 = vld [vmem:[%s2569 + $0x2c] sm:$0xf]
        %v2582 = vld [vmem:[%s2569 + $0x30] sm:$0xf]
        %v2583 = vld [vmem:[%s2569 + $0x34] sm:$0xf]
        %v2584 = vld [vmem:[%s2569 + $0x38] sm:$0xf]
        %v2585 = vld [vmem:[%s2569 + $0x3c] sm:$0xf]
        %v2587 = vshrl.u32 %v2552, 16
        %v2589 = vshll.u32 %v2552, 16
        %v2591 = vrot.slane %v2589, 1
        %v2592 = vor.u32 %v2587, %v2591
        %v2594 = vshll.u32 %v2553, 16
        %v2596 = vrot.slane %v2594, 1
        %v2597 = vsel %vm1302, %v2592, %v2596
        %v2598 = vshrl.u32 %v2553, 16
        %v2600 = vor.u32 %v2598, %v2596
        %v2602 = vshll.u32 %v2554, 16
        %v2604 = vrot.slane %v2602, 1
        %v2605 = vsel %vm1302, %v2600, %v2604
        %v2606 = vshrl.u32 %v2554, 16
        %v2608 = vor.u32 %v2606, %v2604
        %v2610 = vshll.u32 %v2555, 16
        %v2612 = vrot.slane %v2610, 1
        %v2613 = vsel %vm1302, %v2608, %v2612
        %v2614 = vshrl.u32 %v2555, 16
        %v2616 = vor.u32 %v2614, %v2612
        %v2618 = vshll.u32 %v2556, 16
        %v2620 = vrot.slane %v2618, 1
        %v2621 = vsel %vm1302, %v2616, %v2620
        %v2622 = vshrl.u32 %v2556, 16
        %v2624 = vor.u32 %v2622, %v2620
        %v2626 = vshll.u32 %v2557, 16
        %v2628 = vrot.slane %v2626, 1
        %v2629 = vsel %vm1302, %v2624, %v2628
        %v2630 = vshrl.u32 %v2557, 16
        %v2632 = vor.u32 %v2630, %v2628
        %v2634 = vshll.u32 %v2558, 16
        %v2636 = vrot.slane %v2634, 1
        %v2637 = vsel %vm1302, %v2632, %v2636
        %v2638 = vshrl.u32 %v2558, 16
        %v2640 = vor.u32 %v2638, %v2636
        %v2642 = vshll.u32 %v2559, 16
        %v2644 = vrot.slane %v2642, 1
        %v2645 = vsel %vm1302, %v2640, %v2644
        %v2646 = vshrl.u32 %v2559, 16
        %v2648 = vor.u32 %v2646, %v2644
        %v2650 = vshll.u32 %v2560, 16
        %v2652 = vrot.slane %v2650, 1
        %v2653 = vsel %vm1302, %v2648, %v2652
        %v2654 = vshrl.u32 %v2560, 16
        %v2656 = vor.u32 %v2654, %v2652
        %v2658 = vshll.u32 %v2561, 16
        %v2660 = vrot.slane %v2658, 1
        %v2661 = vsel %vm1302, %v2656, %v2660
        %v2662 = vshrl.u32 %v2561, 16
        %v2664 = vor.u32 %v2662, %v2660
        %v2666 = vshll.u32 %v2562, 16
        %v2668 = vrot.slane %v2666, 1
        %v2669 = vsel %vm1302, %v2664, %v2668
        %v2670 = vshrl.u32 %v2562, 16
        %v2672 = vor.u32 %v2670, %v2668
        %v2674 = vshll.u32 %v2563, 16
        %v2676 = vrot.slane %v2674, 1
        %v2677 = vsel %vm1302, %v2672, %v2676
        %v2678 = vshrl.u32 %v2563, 16
        %v2680 = vor.u32 %v2678, %v2676
        %v2682 = vshll.u32 %v2564, 16
        %v2684 = vrot.slane %v2682, 1
        %v2685 = vsel %vm1302, %v2680, %v2684
        %v2686 = vshrl.u32 %v2564, 16
        %v2688 = vor.u32 %v2686, %v2684
        %v2690 = vshll.u32 %v2565, 16
        %v2692 = vrot.slane %v2690, 1
        %v2693 = vsel %vm1302, %v2688, %v2692
        %v2694 = vshrl.u32 %v2565, 16
        %v2696 = vor.u32 %v2694, %v2692
        %v2698 = vshll.u32 %v2566, 16
        %v2700 = vrot.slane %v2698, 1
        %v2701 = vsel %vm1302, %v2696, %v2700
        %v2702 = vshrl.u32 %v2566, 16
        %v2704 = vor.u32 %v2702, %v2700
        %v2706 = vshll.u32 %v2567, 16
        %v2708 = vrot.slane %v2706, 1
        %v2709 = vsel %vm1302, %v2704, %v2708
        %v2710 = vshrl.u32 %v2567, 16
        %v2712 = vor.u32 %v2710, %v2708
        %v2714 = vshll.u32 %v2568, 16
        %v2716 = vrot.slane %v2714, 1
        %v2717 = vsel %vm1302, %v2712, %v2716
        %v2750 = vunpack.c.l.b16 %v2570
        %v2751 = vunpack.c.l.b16 %v2571
        %v2752 = vunpack.c.l.b16 %v2572
        %v2753 = vunpack.c.l.b16 %v2573
        %v2754 = vunpack.c.l.b16 %v2574
        %v2755 = vunpack.c.l.b16 %v2575
        %v2756 = vunpack.c.l.b16 %v2576
        %v2757 = vunpack.c.l.b16 %v2577
        %v2758 = vunpack.c.l.b16 %v2578
        %v2759 = vunpack.c.l.b16 %v2579
        %v2760 = vunpack.c.l.b16 %v2580
        %v2761 = vunpack.c.l.b16 %v2581
        %v2762 = vunpack.c.l.b16 %v2582
        %v2763 = vunpack.c.l.b16 %v2583
        %v2764 = vunpack.c.l.b16 %v2584
        %v2765 = vunpack.c.l.b16 %v2585
        %v2766 = vpack.c.b16 %v2751, %v2750
        %v2767 = vpack.c.b16 %v2753, %v2752
        %v2768 = vpack.c.b16 %v2755, %v2754
        %v2769 = vpack.c.b16 %v2757, %v2756
        %v2770 = vpack.c.b16 %v2759, %v2758
        %v2771 = vpack.c.b16 %v2761, %v2760
        %v2772 = vpack.c.b16 %v2763, %v2762
        %v2773 = vpack.c.b16 %v2765, %v2764
        %2782 = vmatprep.subr.bf16.mxu0 0
        %2783 = vmatpush1.bf16.msra.mxu0 %v2766
        %2784 = vmatprep.subr.bf16.mxu0 0
        %2785 = vmatpush1.bf16.msra.mxu0 %v2767
        %2786 = vmatprep.subr.bf16.mxu0 0
        %2787 = vmatpush1.bf16.msra.mxu0 %v2768
        %2788 = vmatprep.subr.bf16.mxu0 0
        %2789 = vmatpush1.bf16.msra.mxu0 %v2769
        %2790 = vmatprep.subr.bf16.mxu0 0
        %2791 = vmatpush1.bf16.msra.mxu0 %v2770
        %2792 = vmatprep.subr.bf16.mxu0 0
        %2793 = vmatpush1.bf16.msra.mxu0 %v2771
        %2794 = vmatprep.subr.bf16.mxu0 0
        %2795 = vmatpush1.bf16.msra.mxu0 %v2772
        %2796 = vmatprep.subr.bf16.mxu0 0
        %2797 = vmatpush1.bf16.msra.mxu0 %v2773
        %2798 = vmatprep.subr.bf16.mxu0 0
        %2799 = vmatpush1.bf16.msra.mxu0 0
        %2800 = vmatprep.subr.bf16.mxu0 0
        %2801 = vmatpush1.bf16.msra.mxu0 0
        %2802 = vmatprep.subr.bf16.mxu0 0
        %2803 = vmatpush1.bf16.msra.mxu0 0
        %2804 = vmatprep.subr.bf16.mxu0 0
        %2805 = vmatpush1.bf16.msra.mxu0 0
        %2806 = vmatprep.subr.bf16.mxu0 0
        %2807 = vmatpush1.bf16.msra.mxu0 0
        %2808 = vmatprep.subr.bf16.mxu0 0
        %2809 = vmatpush1.bf16.msra.mxu0 0
        %2810 = vmatprep.subr.bf16.mxu0 0
        %2811 = vmatpush1.bf16.msra.mxu0 0
        %2812 = vmatprep.subr.bf16.mxu0 0
        %2813 = vmatpush1.bf16.msra.mxu0 0
        %2814 = vmatprep.mubr.bf16.mxu0 0
        %2815 = vmatmul.mubr.bf16.gmra.mrb[0].mxu0 %v2597
        %v2816 = vpop.f32.mrb[0].mxu0
        %v2817 = vadd.f32 0.0, %v2816
        %v2818 = vpop.f32.mrb[0].mxu0
        %v2819 = vpop.f32.mrb[0].mxu0
        %v2820 = vadd.f32 0.0, %v2819
        %v2821 = vpop.f32.mrb[0].mxu0
        %2822 = vmatprep.mubr.bf16.mxu0 0
        %2823 = vmatmul.mubr.bf16.gmra.mrb[0].mxu0 %v2605
        %v2824 = vpop.f32.mrb[0].mxu0
        %v2825 = vadd.f32 0.0, %v2824
        %v2826 = vpop.f32.mrb[0].mxu0
        %v2827 = vpop.f32.mrb[0].mxu0
        %v2828 = vadd.f32 0.0, %v2827
        %v2829 = vpop.f32.mrb[0].mxu0
        %2830 = vmatprep.mubr.bf16.mxu0 0
        %2831 = vmatmul.mubr.bf16.gmra.mrb[0].mxu0 %v2613
        %v2832 = vpop.f32.mrb[0].mxu0
        %v2833 = vadd.f32 0.0, %v2832
        %v2834 = vpop.f32.mrb[0].mxu0
        %v2835 = vpop.f32.mrb[0].mxu0
        %v2836 = vadd.f32 0.0, %v2835
        %v2837 = vpop.f32.mrb[0].mxu0
        %2838 = vmatprep.mubr.bf16.mxu0 0
        %2839 = vmatmul.mubr.bf16.gmra.mrb[0].mxu0 %v2621
        %v2840 = vpop.f32.mrb[0].mxu0
        %v2841 = vadd.f32 0.0, %v2840
        %v2842 = vpop.f32.mrb[0].mxu0
        %v2843 = vpop.f32.mrb[0].mxu0
        %v2844 = vadd.f32 0.0, %v2843
        %v2845 = vpop.f32.mrb[0].mxu0
        %2846 = vmatprep.mubr.bf16.mxu0 0
        %2847 = vmatmul.mubr.bf16.gmra.mrb[0].mxu0 %v2629
        %v2848 = vpop.f32.mrb[0].mxu0
        %v2849 = vadd.f32 0.0, %v2848
        %v2850 = vpop.f32.mrb[0].mxu0
        %v2851 = vpop.f32.mrb[0].mxu0
        %v2852 = vadd.f32 0.0, %v2851
        %v2853 = vpop.f32.mrb[0].mxu0
        %2854 = vmatprep.mubr.bf16.mxu0 0
        %2855 = vmatmul.mubr.bf16.gmra.mrb[0].mxu0 %v2637
        %v2856 = vpop.f32.mrb[0].mxu0
        %v2857 = vadd.f32 0.0, %v2856
        %v2858 = vpop.f32.mrb[0].mxu0
        %v2859 = vpop.f32.mrb[0].mxu0
        %v2860 = vadd.f32 0.0, %v2859
        %v2861 = vpop.f32.mrb[0].mxu0
        %2862 = vmatprep.mubr.bf16.mxu0 0
        %2863 = vmatmul.mubr.bf16.gmra.mrb[0].mxu0 %v2645
        %v2864 = vpop.f32.mrb[0].mxu0
        %v2865 = vadd.f32 0.0, %v2864
        %v2866 = vpop.f32.mrb[0].mxu0
        %v2867 = vpop.f32.mrb[0].mxu0
        %v2868 = vadd.f32 0.0, %v2867
        %v2869 = vpop.f32.mrb[0].mxu0
        %2870 = vmatprep.mubr.bf16.mxu0 0
        %2871 = vmatmul.mubr.bf16.gmra.mrb[0].mxu0 %v2653
        %v2872 = vpop.f32.mrb[0].mxu0
        %v2873 = vadd.f32 0.0, %v2872
        %v2874 = vpop.f32.mrb[0].mxu0
        %v2875 = vpop.f32.mrb[0].mxu0
        %v2876 = vadd.f32 0.0, %v2875
        %v2877 = vpop.f32.mrb[0].mxu0
        %2878 = vmatprep.mubr.bf16.mxu0 0
        %2879 = vmatmul.mubr.bf16.gmra.mrb[0].mxu0 %v2661
        %v2880 = vpop.f32.mrb[0].mxu0
        %v2881 = vadd.f32 0.0, %v2880
        %v2882 = vpop.f32.mrb[0].mxu0
        %v2883 = vpop.f32.mrb[0].mxu0
        %v2884 = vadd.f32 0.0, %v2883
        %v2885 = vpop.f32.mrb[0].mxu0
        %2886 = vmatprep.mubr.bf16.mxu0 0
        %2887 = vmatmul.mubr.bf16.gmra.mrb[0].mxu0 %v2669
        %v2888 = vpop.f32.mrb[0].mxu0
        %v2889 = vadd.f32 0.0, %v2888
        %v2890 = vpop.f32.mrb[0].mxu0
        %v2891 = vpop.f32.mrb[0].mxu0
        %v2892 = vadd.f32 0.0, %v2891
        %v2893 = vpop.f32.mrb[0].mxu0
        %2894 = vmatprep.mubr.bf16.mxu0 0
        %2895 = vmatmul.mubr.bf16.gmra.mrb[0].mxu0 %v2677
        %v2896 = vpop.f32.mrb[0].mxu0
        %v2897 = vadd.f32 0.0, %v2896
        %v2898 = vpop.f32.mrb[0].mxu0
        %v2899 = vpop.f32.mrb[0].mxu0
        %v2900 = vadd.f32 0.0, %v2899
        %v2901 = vpop.f32.mrb[0].mxu0
        %2902 = vmatprep.mubr.bf16.mxu0 0
        %2903 = vmatmul.mubr.bf16.gmra.mrb[0].mxu0 %v2685
        %v2904 = vpop.f32.mrb[0].mxu0
        %v2905 = vadd.f32 0.0, %v2904
        %v2906 = vpop.f32.mrb[0].mxu0
        %v2907 = vpop.f32.mrb[0].mxu0
        %v2908 = vadd.f32 0.0, %v2907
        %v2909 = vpop.f32.mrb[0].mxu0
        %2910 = vmatprep.mubr.bf16.mxu0 0
        %2911 = vmatmul.mubr.bf16.gmra.mrb[0].mxu0 %v2693
        %v2912 = vpop.f32.mrb[0].mxu0
        %v2913 = vadd.f32 0.0, %v2912
        %v2914 = vpop.f32.mrb[0].mxu0
        %v2915 = vpop.f32.mrb[0].mxu0
        %v2916 = vadd.f32 0.0, %v2915
        %v2917 = vpop.f32.mrb[0].mxu0
        %2918 = vmatprep.mubr.bf16.mxu0 0
        %2919 = vmatmul.mubr.bf16.gmra.mrb[0].mxu0 %v2701
        %v2920 = vpop.f32.mrb[0].mxu0
        %v2921 = vadd.f32 0.0, %v2920
        %v2922 = vpop.f32.mrb[0].mxu0
        %v2923 = vpop.f32.mrb[0].mxu0
        %v2924 = vadd.f32 0.0, %v2923
        %v2925 = vpop.f32.mrb[0].mxu0
        %2926 = vmatprep.mubr.bf16.mxu0 0
        %2927 = vmatmul.mubr.bf16.gmra.mrb[0].mxu0 %v2709
        %v2928 = vpop.f32.mrb[0].mxu0
        %v2929 = vadd.f32 0.0, %v2928
        %v2930 = vpop.f32.mrb[0].mxu0
        %v2931 = vpop.f32.mrb[0].mxu0
        %v2932 = vadd.f32 0.0, %v2931
        %v2933 = vpop.f32.mrb[0].mxu0
        %2934 = vmatprep.mubr.bf16.mxu0 0
        %2935 = vmatmul.mubr.bf16.gmra.mrb[0].mxu0 %v2717
        %v2936 = vpop.f32.mrb[0].mxu0
        %v2937 = vadd.f32 0.0, %v2936
        %v2938 = vpop.f32.mrb[0].mxu0
        %v2939 = vpop.f32.mrb[0].mxu0
        %v2940 = vadd.f32 0.0, %v2939
        %v2941 = vpop.f32.mrb[0].mxu0
        %2942 = vdwg.mxu0
        %v2943 = vld [vmem:[#allocation3] sm:$0xff]
        %v2944 = vld [vmem:[#allocation3 + $0x8] sm:$0xff]
        %v2945 = vld [vmem:[#allocation3 + $0x10] sm:$0xff]
        %v2946 = vld [vmem:[#allocation3 + $0x18] sm:$0xff]
        %v2947 = vld [vmem:[#allocation3 + $0x20] sm:$0xff]
        %v2948 = vld [vmem:[#allocation3 + $0x28] sm:$0xff]
        %v2949 = vld [vmem:[#allocation3 + $0x30] sm:$0xff]
        %v2950 = vld [vmem:[#allocation3 + $0x38] sm:$0xff]
        %v2951 = vld [vmem:[#allocation3 + $0x40] sm:$0xff]
        %v2952 = vld [vmem:[#allocation3 + $0x48] sm:$0xff]
        %v2953 = vld [vmem:[#allocation3 + $0x50] sm:$0xff]
        %v2954 = vld [vmem:[#allocation3 + $0x58] sm:$0xff]
        %v2955 = vld [vmem:[#allocation3 + $0x60] sm:$0xff]
        %v2956 = vld [vmem:[#allocation3 + $0x68] sm:$0xff]
        %v2957 = vld [vmem:[#allocation3 + $0x70] sm:$0xff]
        %v2958 = vld [vmem:[#allocation3 + $0x78] sm:$0xff]
        %v2959 = vld [vmem:[#allocation3 + $0x80] sm:$0xff]
        %v2960 = vld [vmem:[#allocation3 + $0x88] sm:$0xff]
        %v2961 = vld [vmem:[#allocation3 + $0x90] sm:$0xff]
        %v2962 = vld [vmem:[#allocation3 + $0x98] sm:$0xff]
        %v2963 = vld [vmem:[#allocation3 + $0xa0] sm:$0xff]
        %v2964 = vld [vmem:[#allocation3 + $0xa8] sm:$0xff]
        %v2965 = vld [vmem:[#allocation3 + $0xb0] sm:$0xff]
        %v2966 = vld [vmem:[#allocation3 + $0xb8] sm:$0xff]
        %v2967 = vld [vmem:[#allocation3 + $0xc0] sm:$0xff]
        %v2968 = vld [vmem:[#allocation3 + $0xc8] sm:$0xff]
        %v2969 = vld [vmem:[#allocation3 + $0xd0] sm:$0xff]
        %v2970 = vld [vmem:[#allocation3 + $0xd8] sm:$0xff]
        %v2971 = vld [vmem:[#allocation3 + $0xe0] sm:$0xff]
        %v2972 = vld [vmem:[#allocation3 + $0xe8] sm:$0xff]
        %v2973 = vld [vmem:[#allocation3 + $0xf0] sm:$0xff]
        %v2974 = vld [vmem:[#allocation3 + $0xf8] sm:$0xff]
        %v2975 = vadd.f32 %v2943, %v2817
        %v2976 = vadd.f32 %v2944, %v2820
        %v2977 = vadd.f32 %v2945, %v2825
        %v2978 = vadd.f32 %v2946, %v2828
        %v2979 = vadd.f32 %v2947, %v2833
        %v2980 = vadd.f32 %v2948, %v2836
        %v2981 = vadd.f32 %v2949, %v2841
        %v2982 = vadd.f32 %v2950, %v2844
        %v2983 = vadd.f32 %v2951, %v2849
        %v2984 = vadd.f32 %v2952, %v2852
        %v2985 = vadd.f32 %v2953, %v2857
        %v2986 = vadd.f32 %v2954, %v2860
        %v2987 = vadd.f32 %v2955, %v2865
        %v2988 = vadd.f32 %v2956, %v2868
        %v2989 = vadd.f32 %v2957, %v2873
        %v2990 = vadd.f32 %v2958, %v2876
        %v2991 = vadd.f32 %v2959, %v2881
        %v2992 = vadd.f32 %v2960, %v2884
        %v2993 = vadd.f32 %v2961, %v2889
        %v2994 = vadd.f32 %v2962, %v2892
        %v2995 = vadd.f32 %v2963, %v2897
        %v2996 = vadd.f32 %v2964, %v2900
        %v2997 = vadd.f32 %v2965, %v2905
        %v2998 = vadd.f32 %v2966, %v2908
        %v2999 = vadd.f32 %v2967, %v2913
        %v3000 = vadd.f32 %v2968, %v2916
        %v3001 = vadd.f32 %v2969, %v2921
        %v3002 = vadd.f32 %v2970, %v2924
        %v3003 = vadd.f32 %v2971, %v2929
        %v3004 = vadd.f32 %v2972, %v2932
        %v3005 = vadd.f32 %v2973, %v2937
        %v3006 = vadd.f32 %v2974, %v2940
        %3007 = vst [vmem:[#allocation3] sm:$0xff] %v2975
        %3008 = vst [vmem:[#allocation3 + $0x8] sm:$0xff] %v2976
        %3009 = vst [vmem:[#allocation3 + $0x10] sm:$0xff] %v2977
        %3010 = vst [vmem:[#allocation3 + $0x18] sm:$0xff] %v2978
        %3011 = vst [vmem:[#allocation3 + $0x20] sm:$0xff] %v2979
        %3012 = vst [vmem:[#allocation3 + $0x28] sm:$0xff] %v2980
        %3013 = vst [vmem:[#allocation3 + $0x30] sm:$0xff] %v2981
        %3014 = vst [vmem:[#allocation3 + $0x38] sm:$0xff] %v2982
        %3015 = vst [vmem:[#allocation3 + $0x40] sm:$0xff] %v2983
        %3016 = vst [vmem:[#allocation3 + $0x48] sm:$0xff] %v2984
        %3017 = vst [vmem:[#allocation3 + $0x50] sm:$0xff] %v2985
        %3018 = vst [vmem:[#allocation3 + $0x58] sm:$0xff] %v2986
        %3019 = vst [vmem:[#allocation3 + $0x60] sm:$0xff] %v2987
        %3020 = vst [vmem:[#allocation3 + $0x68] sm:$0xff] %v2988
        %3021 = vst [vmem:[#allocation3 + $0x70] sm:$0xff] %v2989
        %3022 = vst [vmem:[#allocation3 + $0x78] sm:$0xff] %v2990
        %3023 = vst [vmem:[#allocation3 + $0x80] sm:$0xff] %v2991
        %3024 = vst [vmem:[#allocation3 + $0x88] sm:$0xff] %v2992
        %3025 = vst [vmem:[#allocation3 + $0x90] sm:$0xff] %v2993
        %3026 = vst [vmem:[#allocation3 + $0x98] sm:$0xff] %v2994
        %3027 = vst [vmem:[#allocation3 + $0xa0] sm:$0xff] %v2995
        %3028 = vst [vmem:[#allocation3 + $0xa8] sm:$0xff] %v2996
        %3029 = vst [vmem:[#allocation3 + $0xb0] sm:$0xff] %v2997
        %3030 = vst [vmem:[#allocation3 + $0xb8] sm:$0xff] %v2998
        %3031 = vst [vmem:[#allocation3 + $0xc0] sm:$0xff] %v2999
        %3032 = vst [vmem:[#allocation3 + $0xc8] sm:$0xff] %v3000
        %3033 = vst [vmem:[#allocation3 + $0xd0] sm:$0xff] %v3001
        %3034 = vst [vmem:[#allocation3 + $0xd8] sm:$0xff] %v3002
        %3035 = vst [vmem:[#allocation3 + $0xe0] sm:$0xff] %v3003
        %3036 = vst [vmem:[#allocation3 + $0xe8] sm:$0xff] %v3004
        %3037 = vst [vmem:[#allocation3 + $0xf0] sm:$0xff] %v3005
        %3038 = vst [vmem:[#allocation3 + $0xf8] sm:$0xff] %v3006
        %v3039 = vld [vmem:[#allocation2 + $0x8] sm:$0x80]
        %v3040 = vld [vmem:[#allocation2 + $0x10] sm:$0xff]
        %v3041 = vld [vmem:[#allocation2 + $0x18] sm:$0xff]
        %v3042 = vld [vmem:[#allocation2 + $0x20] sm:$0xff]
        %v3043 = vld [vmem:[#allocation2 + $0x28] sm:$0xff]
        %v3044 = vld [vmem:[#allocation2 + $0x30] sm:$0xff]
        %v3045 = vld [vmem:[#allocation2 + $0x38] sm:$0xff]
        %v3046 = vld [vmem:[#allocation2 + $0x40] sm:$0xff]
        %v3047 = vld [vmem:[#allocation2 + $0x48] sm:$0xff]
        %v3048 = vld [vmem:[#allocation2 + $0x50] sm:$0xff]
        %v3049 = vld [vmem:[#allocation2 + $0x58] sm:$0xff]
        %v3050 = vld [vmem:[#allocation2 + $0x60] sm:$0xff]
        %v3051 = vld [vmem:[#allocation2 + $0x68] sm:$0xff]
        %v3052 = vld [vmem:[#allocation2 + $0x70] sm:$0xff]
        %v3053 = vld [vmem:[#allocation2 + $0x78] sm:$0xff]
        %v3054 = vld [vmem:[#allocation2 + $0x80] sm:$0xff]
        %v3055 = vld [vmem:[#allocation2 + $0x88] sm:$0xff]
        %v3056 = vsel %vm1430, %v3039, 0
        %v3057 = vsel %vm1431, %v3040, 0
        %v3058 = vsel %vm1432, %v3041, 0
        %v3059 = vsel %vm1433, %v3042, 0
        %v3060 = vsel %vm1434, %v3043, 0
        %v3061 = vsel %vm1435, %v3044, 0
        %v3062 = vsel %vm1436, %v3045, 0
        %v3063 = vsel %vm1437, %v3046, 0
        %v3064 = vsel %vm1438, %v3047, 0
        %v3065 = vsel %vm1439, %v3048, 0
        %v3066 = vsel %vm1440, %v3049, 0
        %v3067 = vsel %vm1441, %v3050, 0
        %v3068 = vsel %vm1442, %v3051, 0
        %v3069 = vsel %vm1443, %v3052, 0
        %v3070 = vsel %vm1444, %v3053, 0
        %v3071 = vsel %vm1445, %v3054, 0
        %v3072 = vsel %vm1446, %v3055, 0
        %s3073 = scalar_lea.vmem %s3, 192
        %v3074 = vld [vmem:[%s3073] sm:$0xf]
        %v3075 = vld [vmem:[%s3073 + $0x4] sm:$0xf]
        %v3076 = vld [vmem:[%s3073 + $0x8] sm:$0xf]
        %v3077 = vld [vmem:[%s3073 + $0xc] sm:$0xf]
        %v3078 = vld [vmem:[%s3073 + $0x10] sm:$0xf]
        %v3079 = vld [vmem:[%s3073 + $0x14] sm:$0xf]
        %v3080 = vld [vmem:[%s3073 + $0x18] sm:$0xf]
        %v3081 = vld [vmem:[%s3073 + $0x1c] sm:$0xf]
        %v3082 = vld [vmem:[%s3073 + $0x20] sm:$0xf]
        %v3083 = vld [vmem:[%s3073 + $0x24] sm:$0xf]
        %v3084 = vld [vmem:[%s3073 + $0x28] sm:$0xf]
        %v3085 = vld [vmem:[%s3073 + $0x2c] sm:$0xf]
        %v3086 = vld [vmem:[%s3073 + $0x30] sm:$0xf]
        %v3087 = vld [vmem:[%s3073 + $0x34] sm:$0xf]
        %v3088 = vld [vmem:[%s3073 + $0x38] sm:$0xf]
        %v3089 = vld [vmem:[%s3073 + $0x3c] sm:$0xf]
        %v3091 = vshrl.u32 %v3056, 16
        %v3093 = vrot.slane %v3091, 7
        %v3095 = vshrl.u32 %v3057, 16
        %v3097 = vrot.slane %v3095, 7
        %v3098 = vshll.u32 %v3057, 16
        %v3100 = vor.u32 %v3097, %v3098
        %v3101 = vsel %vm1487, %v3093, %v3100
        %v3103 = vshrl.u32 %v3058, 16
        %v3105 = vrot.slane %v3103, 7
        %v3106 = vshll.u32 %v3058, 16
        %v3108 = vor.u32 %v3105, %v3106
        %v3109 = vsel %vm1487, %v3097, %v3108
        %v3111 = vshrl.u32 %v3059, 16
        %v3113 = vrot.slane %v3111, 7
        %v3114 = vshll.u32 %v3059, 16
        %v3116 = vor.u32 %v3113, %v3114
        %v3117 = vsel %vm1487, %v3105, %v3116
        %v3119 = vshrl.u32 %v3060, 16
        %v3121 = vrot.slane %v3119, 7
        %v3122 = vshll.u32 %v3060, 16
        %v3124 = vor.u32 %v3121, %v3122
        %v3125 = vsel %vm1487, %v3113, %v3124
        %v3127 = vshrl.u32 %v3061, 16
        %v3129 = vrot.slane %v3127, 7
        %v3130 = vshll.u32 %v3061, 16
        %v3132 = vor.u32 %v3129, %v3130
        %v3133 = vsel %vm1487, %v3121, %v3132
        %v3135 = vshrl.u32 %v3062, 16
        %v3137 = vrot.slane %v3135, 7
        %v3138 = vshll.u32 %v3062, 16
        %v3140 = vor.u32 %v3137, %v3138
        %v3141 = vsel %vm1487, %v3129, %v3140
        %v3143 = vshrl.u32 %v3063, 16
        %v3145 = vrot.slane %v3143, 7
        %v3146 = vshll.u32 %v3063, 16
        %v3148 = vor.u32 %v3145, %v3146
        %v3149 = vsel %vm1487, %v3137, %v3148
        %v3151 = vshrl.u32 %v3064, 16
        %v3153 = vrot.slane %v3151, 7
        %v3154 = vshll.u32 %v3064, 16
        %v3156 = vor.u32 %v3153, %v3154
        %v3157 = vsel %vm1487, %v3145, %v3156
        %v3159 = vshrl.u32 %v3065, 16
        %v3161 = vrot.slane %v3159, 7
        %v3162 = vshll.u32 %v3065, 16
        %v3164 = vor.u32 %v3161, %v3162
        %v3165 = vsel %vm1487, %v3153, %v3164
        %v3167 = vshrl.u32 %v3066, 16
        %v3169 = vrot.slane %v3167, 7
        %v3170 = vshll.u32 %v3066, 16
        %v3172 = vor.u32 %v3169, %v3170
        %v3173 = vsel %vm1487, %v3161, %v3172
        %v3175 = vshrl.u32 %v3067, 16
        %v3177 = vrot.slane %v3175, 7
        %v3178 = vshll.u32 %v3067, 16
        %v3180 = vor.u32 %v3177, %v3178
        %v3181 = vsel %vm1487, %v3169, %v3180
        %v3183 = vshrl.u32 %v3068, 16
        %v3185 = vrot.slane %v3183, 7
        %v3186 = vshll.u32 %v3068, 16
        %v3188 = vor.u32 %v3185, %v3186
        %v3189 = vsel %vm1487, %v3177, %v3188
        %v3191 = vshrl.u32 %v3069, 16
        %v3193 = vrot.slane %v3191, 7
        %v3194 = vshll.u32 %v3069, 16
        %v3196 = vor.u32 %v3193, %v3194
        %v3197 = vsel %vm1487, %v3185, %v3196
        %v3199 = vshrl.u32 %v3070, 16
        %v3201 = vrot.slane %v3199, 7
        %v3202 = vshll.u32 %v3070, 16
        %v3204 = vor.u32 %v3201, %v3202
        %v3205 = vsel %vm1487, %v3193, %v3204
        %v3207 = vshrl.u32 %v3071, 16
        %v3209 = vrot.slane %v3207, 7
        %v3210 = vshll.u32 %v3071, 16
        %v3212 = vor.u32 %v3209, %v3210
        %v3213 = vsel %vm1487, %v3201, %v3212
        %v3215 = vshrl.u32 %v3072, 16
        %v3217 = vrot.slane %v3215, 7
        %v3218 = vshll.u32 %v3072, 16
        %v3220 = vor.u32 %v3217, %v3218
        %v3221 = vsel %vm1487, %v3209, %v3220
        %v3254 = vunpack.c.l.b16 %v3074
        %v3255 = vunpack.c.l.b16 %v3075
        %v3256 = vunpack.c.l.b16 %v3076
        %v3257 = vunpack.c.l.b16 %v3077
        %v3258 = vunpack.c.l.b16 %v3078
        %v3259 = vunpack.c.l.b16 %v3079
        %v3260 = vunpack.c.l.b16 %v3080
        %v3261 = vunpack.c.l.b16 %v3081
        %v3262 = vunpack.c.l.b16 %v3082
        %v3263 = vunpack.c.l.b16 %v3083
        %v3264 = vunpack.c.l.b16 %v3084
        %v3265 = vunpack.c.l.b16 %v3085
        %v3266 = vunpack.c.l.b16 %v3086
        %v3267 = vunpack.c.l.b16 %v3087
        %v3268 = vunpack.c.l.b16 %v3088
        %v3269 = vunpack.c.l.b16 %v3089
        %v3270 = vpack.c.b16 %v3255, %v3254
        %v3271 = vpack.c.b16 %v3257, %v3256
        %v3272 = vpack.c.b16 %v3259, %v3258
        %v3273 = vpack.c.b16 %v3261, %v3260
        %v3274 = vpack.c.b16 %v3263, %v3262
        %v3275 = vpack.c.b16 %v3265, %v3264
        %v3276 = vpack.c.b16 %v3267, %v3266
        %v3277 = vpack.c.b16 %v3269, %v3268
        %3286 = vmatprep.subr.bf16.mxu0 0
        %3287 = vmatpush1.bf16.msra.mxu0 %v3270
        %3288 = vmatprep.subr.bf16.mxu0 0
        %3289 = vmatpush1.bf16.msra.mxu0 %v3271
        %3290 = vmatprep.subr.bf16.mxu0 0
        %3291 = vmatpush1.bf16.msra.mxu0 %v3272
        %3292 = vmatprep.subr.bf16.mxu0 0
        %3293 = vmatpush1.bf16.msra.mxu0 %v3273
        %3294 = vmatprep.subr.bf16.mxu0 0
        %3295 = vmatpush1.bf16.msra.mxu0 %v3274
        %3296 = vmatprep.subr.bf16.mxu0 0
        %3297 = vmatpush1.bf16.msra.mxu0 %v3275
        %3298 = vmatprep.subr.bf16.mxu0 0
        %3299 = vmatpush1.bf16.msra.mxu0 %v3276
        %3300 = vmatprep.subr.bf16.mxu0 0
        %3301 = vmatpush1.bf16.msra.mxu0 %v3277
        %3302 = vmatprep.subr.bf16.mxu0 0
        %3303 = vmatpush1.bf16.msra.mxu0 0
        %3304 = vmatprep.subr.bf16.mxu0 0
        %3305 = vmatpush1.bf16.msra.mxu0 0
        %3306 = vmatprep.subr.bf16.mxu0 0
        %3307 = vmatpush1.bf16.msra.mxu0 0
        %3308 = vmatprep.subr.bf16.mxu0 0
        %3309 = vmatpush1.bf16.msra.mxu0 0
        %3310 = vmatprep.subr.bf16.mxu0 0
        %3311 = vmatpush1.bf16.msra.mxu0 0
        %3312 = vmatprep.subr.bf16.mxu0 0
        %3313 = vmatpush1.bf16.msra.mxu0 0
        %3314 = vmatprep.subr.bf16.mxu0 0
        %3315 = vmatpush1.bf16.msra.mxu0 0
        %3316 = vmatprep.subr.bf16.mxu0 0
        %3317 = vmatpush1.bf16.msra.mxu0 0
        %3318 = vmatprep.mubr.bf16.mxu0 0
        %3319 = vmatmul.mubr.bf16.gmra.mrb[0].mxu0 %v3101
        %v3320 = vpop.f32.mrb[0].mxu0
        %v3321 = vadd.f32 0.0, %v3320
        %v3322 = vpop.f32.mrb[0].mxu0
        %v3323 = vpop.f32.mrb[0].mxu0
        %v3324 = vadd.f32 0.0, %v3323
        %v3325 = vpop.f32.mrb[0].mxu0
        %3326 = vmatprep.mubr.bf16.mxu0 0
        %3327 = vmatmul.mubr.bf16.gmra.mrb[0].mxu0 %v3109
        %v3328 = vpop.f32.mrb[0].mxu0
        %v3329 = vadd.f32 0.0, %v3328
        %v3330 = vpop.f32.mrb[0].mxu0
        %v3331 = vpop.f32.mrb[0].mxu0
        %v3332 = vadd.f32 0.0, %v3331
        %v3333 = vpop.f32.mrb[0].mxu0
        %3334 = vmatprep.mubr.bf16.mxu0 0
        %3335 = vmatmul.mubr.bf16.gmra.mrb[0].mxu0 %v3117
        %v3336 = vpop.f32.mrb[0].mxu0
        %v3337 = vadd.f32 0.0, %v3336
        %v3338 = vpop.f32.mrb[0].mxu0
        %v3339 = vpop.f32.mrb[0].mxu0
        %v3340 = vadd.f32 0.0, %v3339
        %v3341 = vpop.f32.mrb[0].mxu0
        %3342 = vmatprep.mubr.bf16.mxu0 0
        %3343 = vmatmul.mubr.bf16.gmra.mrb[0].mxu0 %v3125
        %v3344 = vpop.f32.mrb[0].mxu0
        %v3345 = vadd.f32 0.0, %v3344
        %v3346 = vpop.f32.mrb[0].mxu0
        %v3347 = vpop.f32.mrb[0].mxu0
        %v3348 = vadd.f32 0.0, %v3347
        %v3349 = vpop.f32.mrb[0].mxu0
        %3350 = vmatprep.mubr.bf16.mxu0 0
        %3351 = vmatmul.mubr.bf16.gmra.mrb[0].mxu0 %v3133
        %v3352 = vpop.f32.mrb[0].mxu0
        %v3353 = vadd.f32 0.0, %v3352
        %v3354 = vpop.f32.mrb[0].mxu0
        %v3355 = vpop.f32.mrb[0].mxu0
        %v3356 = vadd.f32 0.0, %v3355
        %v3357 = vpop.f32.mrb[0].mxu0
        %3358 = vmatprep.mubr.bf16.mxu0 0
        %3359 = vmatmul.mubr.bf16.gmra.mrb[0].mxu0 %v3141
        %v3360 = vpop.f32.mrb[0].mxu0
        %v3361 = vadd.f32 0.0, %v3360
        %v3362 = vpop.f32.mrb[0].mxu0
        %v3363 = vpop.f32.mrb[0].mxu0
        %v3364 = vadd.f32 0.0, %v3363
        %v3365 = vpop.f32.mrb[0].mxu0
        %3366 = vmatprep.mubr.bf16.mxu0 0
        %3367 = vmatmul.mubr.bf16.gmra.mrb[0].mxu0 %v3149
        %v3368 = vpop.f32.mrb[0].mxu0
        %v3369 = vadd.f32 0.0, %v3368
        %v3370 = vpop.f32.mrb[0].mxu0
        %v3371 = vpop.f32.mrb[0].mxu0
        %v3372 = vadd.f32 0.0, %v3371
        %v3373 = vpop.f32.mrb[0].mxu0
        %3374 = vmatprep.mubr.bf16.mxu0 0
        %3375 = vmatmul.mubr.bf16.gmra.mrb[0].mxu0 %v3157
        %v3376 = vpop.f32.mrb[0].mxu0
        %v3377 = vadd.f32 0.0, %v3376
        %v3378 = vpop.f32.mrb[0].mxu0
        %v3379 = vpop.f32.mrb[0].mxu0
        %v3380 = vadd.f32 0.0, %v3379
        %v3381 = vpop.f32.mrb[0].mxu0
        %3382 = vmatprep.mubr.bf16.mxu0 0
        %3383 = vmatmul.mubr.bf16.gmra.mrb[0].mxu0 %v3165
        %v3384 = vpop.f32.mrb[0].mxu0
        %v3385 = vadd.f32 0.0, %v3384
        %v3386 = vpop.f32.mrb[0].mxu0
        %v3387 = vpop.f32.mrb[0].mxu0
        %v3388 = vadd.f32 0.0, %v3387
        %v3389 = vpop.f32.mrb[0].mxu0
        %3390 = vmatprep.mubr.bf16.mxu0 0
        %3391 = vmatmul.mubr.bf16.gmra.mrb[0].mxu0 %v3173
        %v3392 = vpop.f32.mrb[0].mxu0
        %v3393 = vadd.f32 0.0, %v3392
        %v3394 = vpop.f32.mrb[0].mxu0
        %v3395 = vpop.f32.mrb[0].mxu0
        %v3396 = vadd.f32 0.0, %v3395
        %v3397 = vpop.f32.mrb[0].mxu0
        %3398 = vmatprep.mubr.bf16.mxu0 0
        %3399 = vmatmul.mubr.bf16.gmra.mrb[0].mxu0 %v3181
        %v3400 = vpop.f32.mrb[0].mxu0
        %v3401 = vadd.f32 0.0, %v3400
        %v3402 = vpop.f32.mrb[0].mxu0
        %v3403 = vpop.f32.mrb[0].mxu0
        %v3404 = vadd.f32 0.0, %v3403
        %v3405 = vpop.f32.mrb[0].mxu0
        %3406 = vmatprep.mubr.bf16.mxu0 0
        %3407 = vmatmul.mubr.bf16.gmra.mrb[0].mxu0 %v3189
        %v3408 = vpop.f32.mrb[0].mxu0
        %v3409 = vadd.f32 0.0, %v3408
        %v3410 = vpop.f32.mrb[0].mxu0
        %v3411 = vpop.f32.mrb[0].mxu0
        %v3412 = vadd.f32 0.0, %v3411
        %v3413 = vpop.f32.mrb[0].mxu0
        %3414 = vmatprep.mubr.bf16.mxu0 0
        %3415 = vmatmul.mubr.bf16.gmra.mrb[0].mxu0 %v3197
        %v3416 = vpop.f32.mrb[0].mxu0
        %v3417 = vadd.f32 0.0, %v3416
        %v3418 = vpop.f32.mrb[0].mxu0
        %v3419 = vpop.f32.mrb[0].mxu0
        %v3420 = vadd.f32 0.0, %v3419
        %v3421 = vpop.f32.mrb[0].mxu0
        %3422 = vmatprep.mubr.bf16.mxu0 0
        %3423 = vmatmul.mubr.bf16.gmra.mrb[0].mxu0 %v3205
        %v3424 = vpop.f32.mrb[0].mxu0
        %v3425 = vadd.f32 0.0, %v3424
        %v3426 = vpop.f32.mrb[0].mxu0
        %v3427 = vpop.f32.mrb[0].mxu0
        %v3428 = vadd.f32 0.0, %v3427
        %v3429 = vpop.f32.mrb[0].mxu0
        %3430 = vmatprep.mubr.bf16.mxu0 0
        %3431 = vmatmul.mubr.bf16.gmra.mrb[0].mxu0 %v3213
        %v3432 = vpop.f32.mrb[0].mxu0
        %v3433 = vadd.f32 0.0, %v3432
        %v3434 = vpop.f32.mrb[0].mxu0
        %v3435 = vpop.f32.mrb[0].mxu0
        %v3436 = vadd.f32 0.0, %v3435
        %v3437 = vpop.f32.mrb[0].mxu0
        %3438 = vmatprep.mubr.bf16.mxu0 0
        %3439 = vmatmul.mubr.bf16.gmra.mrb[0].mxu0 %v3221
        %v3440 = vpop.f32.mrb[0].mxu0
        %v3441 = vadd.f32 0.0, %v3440
        %v3442 = vpop.f32.mrb[0].mxu0
        %v3443 = vpop.f32.mrb[0].mxu0
        %v3444 = vadd.f32 0.0, %v3443
        %v3445 = vpop.f32.mrb[0].mxu0
        %3446 = vdwg.mxu0
        %v3447 = vld [vmem:[#allocation3] sm:$0xff]
        %v3448 = vld [vmem:[#allocation3 + $0x8] sm:$0xff]
        %v3449 = vld [vmem:[#allocation3 + $0x10] sm:$0xff]
        %v3450 = vld [vmem:[#allocation3 + $0x18] sm:$0xff]
        %v3451 = vld [vmem:[#allocation3 + $0x20] sm:$0xff]
        %v3452 = vld [vmem:[#allocation3 + $0x28] sm:$0xff]
        %v3453 = vld [vmem:[#allocation3 + $0x30] sm:$0xff]
        %v3454 = vld [vmem:[#allocation3 + $0x38] sm:$0xff]
        %v3455 = vld [vmem:[#allocation3 + $0x40] sm:$0xff]
        %v3456 = vld [vmem:[#allocation3 + $0x48] sm:$0xff]
        %v3457 = vld [vmem:[#allocation3 + $0x50] sm:$0xff]
        %v3458 = vld [vmem:[#allocation3 + $0x58] sm:$0xff]
        %v3459 = vld [vmem:[#allocation3 + $0x60] sm:$0xff]
        %v3460 = vld [vmem:[#allocation3 + $0x68] sm:$0xff]
        %v3461 = vld [vmem:[#allocation3 + $0x70] sm:$0xff]
        %v3462 = vld [vmem:[#allocation3 + $0x78] sm:$0xff]
        %v3463 = vld [vmem:[#allocation3 + $0x80] sm:$0xff]
        %v3464 = vld [vmem:[#allocation3 + $0x88] sm:$0xff]
        %v3465 = vld [vmem:[#allocation3 + $0x90] sm:$0xff]
        %v3466 = vld [vmem:[#allocation3 + $0x98] sm:$0xff]
        %v3467 = vld [vmem:[#allocation3 + $0xa0] sm:$0xff]
        %v3468 = vld [vmem:[#allocation3 + $0xa8] sm:$0xff]
        %v3469 = vld [vmem:[#allocation3 + $0xb0] sm:$0xff]
        %v3470 = vld [vmem:[#allocation3 + $0xb8] sm:$0xff]
        %v3471 = vld [vmem:[#allocation3 + $0xc0] sm:$0xff]
        %v3472 = vld [vmem:[#allocation3 + $0xc8] sm:$0xff]
        %v3473 = vld [vmem:[#allocation3 + $0xd0] sm:$0xff]
        %v3474 = vld [vmem:[#allocation3 + $0xd8] sm:$0xff]
        %v3475 = vld [vmem:[#allocation3 + $0xe0] sm:$0xff]
        %v3476 = vld [vmem:[#allocation3 + $0xe8] sm:$0xff]
        %v3477 = vld [vmem:[#allocation3 + $0xf0] sm:$0xff]
        %v3478 = vld [vmem:[#allocation3 + $0xf8] sm:$0xff]
        %v3479 = vadd.f32 %v3447, %v3321
        %v3480 = vadd.f32 %v3448, %v3324
        %v3481 = vadd.f32 %v3449, %v3329
        %v3482 = vadd.f32 %v3450, %v3332
        %v3483 = vadd.f32 %v3451, %v3337
        %v3484 = vadd.f32 %v3452, %v3340
        %v3485 = vadd.f32 %v3453, %v3345
        %v3486 = vadd.f32 %v3454, %v3348
        %v3487 = vadd.f32 %v3455, %v3353
        %v3488 = vadd.f32 %v3456, %v3356
        %v3489 = vadd.f32 %v3457, %v3361
        %v3490 = vadd.f32 %v3458, %v3364
        %v3491 = vadd.f32 %v3459, %v3369
        %v3492 = vadd.f32 %v3460, %v3372
        %v3493 = vadd.f32 %v3461, %v3377
        %v3494 = vadd.f32 %v3462, %v3380
        %v3495 = vadd.f32 %v3463, %v3385
        %v3496 = vadd.f32 %v3464, %v3388
        %v3497 = vadd.f32 %v3465, %v3393
        %v3498 = vadd.f32 %v3466, %v3396
        %v3499 = vadd.f32 %v3467, %v3401
        %v3500 = vadd.f32 %v3468, %v3404
        %v3501 = vadd.f32 %v3469, %v3409
        %v3502 = vadd.f32 %v3470, %v3412
        %v3503 = vadd.f32 %v3471, %v3417
        %v3504 = vadd.f32 %v3472, %v3420
        %v3505 = vadd.f32 %v3473, %v3425
        %v3506 = vadd.f32 %v3474, %v3428
        %v3507 = vadd.f32 %v3475, %v3433
        %v3508 = vadd.f32 %v3476, %v3436
        %v3509 = vadd.f32 %v3477, %v3441
        %v3510 = vadd.f32 %v3478, %v3444
        %3511 = vst [vmem:[#allocation3] sm:$0xff] %v3479
        %3512 = vst [vmem:[#allocation3 + $0x8] sm:$0xff] %v3480
        %3513 = vst [vmem:[#allocation3 + $0x10] sm:$0xff] %v3481
        %3514 = vst [vmem:[#allocation3 + $0x18] sm:$0xff] %v3482
        %3515 = vst [vmem:[#allocation3 + $0x20] sm:$0xff] %v3483
        %3516 = vst [vmem:[#allocation3 + $0x28] sm:$0xff] %v3484
        %3517 = vst [vmem:[#allocation3 + $0x30] sm:$0xff] %v3485
        %3518 = vst [vmem:[#allocation3 + $0x38] sm:$0xff] %v3486
        %3519 = vst [vmem:[#allocation3 + $0x40] sm:$0xff] %v3487
        %3520 = vst [vmem:[#allocation3 + $0x48] sm:$0xff] %v3488
        %3521 = vst [vmem:[#allocation3 + $0x50] sm:$0xff] %v3489
        %3522 = vst [vmem:[#allocation3 + $0x58] sm:$0xff] %v3490
        %3523 = vst [vmem:[#allocation3 + $0x60] sm:$0xff] %v3491
        %3524 = vst [vmem:[#allocation3 + $0x68] sm:$0xff] %v3492
        %3525 = vst [vmem:[#allocation3 + $0x70] sm:$0xff] %v3493
        %3526 = vst [vmem:[#allocation3 + $0x78] sm:$0xff] %v3494
        %3527 = vst [vmem:[#allocation3 + $0x80] sm:$0xff] %v3495
        %3528 = vst [vmem:[#allocation3 + $0x88] sm:$0xff] %v3496
        %3529 = vst [vmem:[#allocation3 + $0x90] sm:$0xff] %v3497
        %3530 = vst [vmem:[#allocation3 + $0x98] sm:$0xff] %v3498
        %3531 = vst [vmem:[#allocation3 + $0xa0] sm:$0xff] %v3499
        %3532 = vst [vmem:[#allocation3 + $0xa8] sm:$0xff] %v3500
        %3533 = vst [vmem:[#allocation3 + $0xb0] sm:$0xff] %v3501
        %3534 = vst [vmem:[#allocation3 + $0xb8] sm:$0xff] %v3502
        %3535 = vst [vmem:[#allocation3 + $0xc0] sm:$0xff] %v3503
        %3536 = vst [vmem:[#allocation3 + $0xc8] sm:$0xff] %v3504
        %3537 = vst [vmem:[#allocation3 + $0xd0] sm:$0xff] %v3505
        %3538 = vst [vmem:[#allocation3 + $0xd8] sm:$0xff] %v3506
        %3539 = vst [vmem:[#allocation3 + $0xe0] sm:$0xff] %v3507
        %3540 = vst [vmem:[#allocation3 + $0xe8] sm:$0xff] %v3508
        %3541 = vst [vmem:[#allocation3 + $0xf0] sm:$0xff] %v3509
        %3542 = vst [vmem:[#allocation3 + $0xf8] sm:$0xff] %v3510
        %v3543 = vld [vmem:[#allocation2 + $0x10] sm:$0xff]
        %v3544 = vld [vmem:[#allocation2 + $0x18] sm:$0xff]
        %v3545 = vld [vmem:[#allocation2 + $0x20] sm:$0xff]
        %v3546 = vld [vmem:[#allocation2 + $0x28] sm:$0xff]
        %v3547 = vld [vmem:[#allocation2 + $0x30] sm:$0xff]
        %v3548 = vld [vmem:[#allocation2 + $0x38] sm:$0xff]
        %v3549 = vld [vmem:[#allocation2 + $0x40] sm:$0xff]
        %v3550 = vld [vmem:[#allocation2 + $0x48] sm:$0xff]
        %v3551 = vld [vmem:[#allocation2 + $0x50] sm:$0xff]
        %v3552 = vld [vmem:[#allocation2 + $0x58] sm:$0xff]
        %v3553 = vld [vmem:[#allocation2 + $0x60] sm:$0xff]
        %v3554 = vld [vmem:[#allocation2 + $0x68] sm:$0xff]
        %v3555 = vld [vmem:[#allocation2 + $0x70] sm:$0xff]
        %v3556 = vld [vmem:[#allocation2 + $0x78] sm:$0xff]
        %v3557 = vld [vmem:[#allocation2 + $0x80] sm:$0xff]
        %v3558 = vld [vmem:[#allocation2 + $0x88] sm:$0xff]
        %s3559 = scalar_lea.vmem %s3, 256
        %v3560 = vld [vmem:[%s3559] sm:$0xf]
        %v3561 = vld [vmem:[%s3559 + $0x4] sm:$0xf]
        %v3562 = vld [vmem:[%s3559 + $0x8] sm:$0xf]
        %v3563 = vld [vmem:[%s3559 + $0xc] sm:$0xf]
        %v3564 = vld [vmem:[%s3559 + $0x10] sm:$0xf]
        %v3565 = vld [vmem:[%s3559 + $0x14] sm:$0xf]
        %v3566 = vld [vmem:[%s3559 + $0x18] sm:$0xf]
        %v3567 = vld [vmem:[%s3559 + $0x1c] sm:$0xf]
        %v3568 = vld [vmem:[%s3559 + $0x20] sm:$0xf]
        %v3569 = vld [vmem:[%s3559 + $0x24] sm:$0xf]
        %v3570 = vld [vmem:[%s3559 + $0x28] sm:$0xf]
        %v3571 = vld [vmem:[%s3559 + $0x2c] sm:$0xf]
        %v3572 = vld [vmem:[%s3559 + $0x30] sm:$0xf]
        %v3573 = vld [vmem:[%s3559 + $0x34] sm:$0xf]
        %v3574 = vld [vmem:[%s3559 + $0x38] sm:$0xf]
        %v3575 = vld [vmem:[%s3559 + $0x3c] sm:$0xf]
        %v3592 = vunpack.c.l.b16 %v3560
        %v3593 = vunpack.c.l.b16 %v3561
        %v3594 = vunpack.c.l.b16 %v3562
        %v3595 = vunpack.c.l.b16 %v3563
        %v3596 = vunpack.c.l.b16 %v3564
        %v3597 = vunpack.c.l.b16 %v3565
        %v3598 = vunpack.c.l.b16 %v3566
        %v3599 = vunpack.c.l.b16 %v3567
        %v3600 = vunpack.c.l.b16 %v3568
        %v3601 = vunpack.c.l.b16 %v3569
        %v3602 = vunpack.c.l.b16 %v3570
        %v3603 = vunpack.c.l.b16 %v3571
        %v3604 = vunpack.c.l.b16 %v3572
        %v3605 = vunpack.c.l.b16 %v3573
        %v3606 = vunpack.c.l.b16 %v3574
        %v3607 = vunpack.c.l.b16 %v3575
        %v3608 = vpack.c.b16 %v3593, %v3592
        %v3609 = vpack.c.b16 %v3595, %v3594
        %v3610 = vpack.c.b16 %v3597, %v3596
        %v3611 = vpack.c.b16 %v3599, %v3598
        %v3612 = vpack.c.b16 %v3601, %v3600
        %v3613 = vpack.c.b16 %v3603, %v3602
        %v3614 = vpack.c.b16 %v3605, %v3604
        %v3615 = vpack.c.b16 %v3607, %v3606
        %3624 = vmatprep.subr.bf16.mxu0 0
        %3625 = vmatpush1.bf16.msra.mxu0 %v3608
        %3626 = vmatprep.subr.bf16.mxu0 0
        %3627 = vmatpush1.bf16.msra.mxu0 %v3609
        %3628 = vmatprep.subr.bf16.mxu0 0
        %3629 = vmatpush1.bf16.msra.mxu0 %v3610
        %3630 = vmatprep.subr.bf16.mxu0 0
        %3631 = vmatpush1.bf16.msra.mxu0 %v3611
        %3632 = vmatprep.subr.bf16.mxu0 0
        %3633 = vmatpush1.bf16.msra.mxu0 %v3612
        %3634 = vmatprep.subr.bf16.mxu0 0
        %3635 = vmatpush1.bf16.msra.mxu0 %v3613
        %3636 = vmatprep.subr.bf16.mxu0 0
        %3637 = vmatpush1.bf16.msra.mxu0 %v3614
        %3638 = vmatprep.subr.bf16.mxu0 0
        %3639 = vmatpush1.bf16.msra.mxu0 %v3615
        %3640 = vmatprep.subr.bf16.mxu0 0
        %3641 = vmatpush1.bf16.msra.mxu0 0
        %3642 = vmatprep.subr.bf16.mxu0 0
        %3643 = vmatpush1.bf16.msra.mxu0 0
        %3644 = vmatprep.subr.bf16.mxu0 0
        %3645 = vmatpush1.bf16.msra.mxu0 0
        %3646 = vmatprep.subr.bf16.mxu0 0
        %3647 = vmatpush1.bf16.msra.mxu0 0
        %3648 = vmatprep.subr.bf16.mxu0 0
        %3649 = vmatpush1.bf16.msra.mxu0 0
        %3650 = vmatprep.subr.bf16.mxu0 0
        %3651 = vmatpush1.bf16.msra.mxu0 0
        %3652 = vmatprep.subr.bf16.mxu0 0
        %3653 = vmatpush1.bf16.msra.mxu0 0
        %3654 = vmatprep.subr.bf16.mxu0 0
        %3655 = vmatpush1.bf16.msra.mxu0 0
        %3656 = vmatprep.mubr.bf16.mxu0 0
        %3657 = vmatmul.mubr.bf16.gmra.mrb[0].mxu0 %v3543
        %v3658 = vpop.f32.mrb[0].mxu0
        %v3659 = vadd.f32 0.0, %v3658
        %v3660 = vpop.f32.mrb[0].mxu0
        %v3661 = vpop.f32.mrb[0].mxu0
        %v3662 = vadd.f32 0.0, %v3661
        %v3663 = vpop.f32.mrb[0].mxu0
        %3664 = vmatprep.mubr.bf16.mxu0 0
        %3665 = vmatmul.mubr.bf16.gmra.mrb[0].mxu0 %v3544
        %v3666 = vpop.f32.mrb[0].mxu0
        %v3667 = vadd.f32 0.0, %v3666
        %v3668 = vpop.f32.mrb[0].mxu0
        %v3669 = vpop.f32.mrb[0].mxu0
        %v3670 = vadd.f32 0.0, %v3669
        %v3671 = vpop.f32.mrb[0].mxu0
        %3672 = vmatprep.mubr.bf16.mxu0 0
        %3673 = vmatmul.mubr.bf16.gmra.mrb[0].mxu0 %v3545
        %v3674 = vpop.f32.mrb[0].mxu0
        %v3675 = vadd.f32 0.0, %v3674
        %v3676 = vpop.f32.mrb[0].mxu0
        %v3677 = vpop.f32.mrb[0].mxu0
        %v3678 = vadd.f32 0.0, %v3677
        %v3679 = vpop.f32.mrb[0].mxu0
        %3680 = vmatprep.mubr.bf16.mxu0 0
        %3681 = vmatmul.mubr.bf16.gmra.mrb[0].mxu0 %v3546
        %v3682 = vpop.f32.mrb[0].mxu0
        %v3683 = vadd.f32 0.0, %v3682
        %v3684 = vpop.f32.mrb[0].mxu0
        %v3685 = vpop.f32.mrb[0].mxu0
        %v3686 = vadd.f32 0.0, %v3685
        %v3687 = vpop.f32.mrb[0].mxu0
        %3688 = vmatprep.mubr.bf16.mxu0 0
        %3689 = vmatmul.mubr.bf16.gmra.mrb[0].mxu0 %v3547
        %v3690 = vpop.f32.mrb[0].mxu0
        %v3691 = vadd.f32 0.0, %v3690
        %v3692 = vpop.f32.mrb[0].mxu0
        %v3693 = vpop.f32.mrb[0].mxu0
        %v3694 = vadd.f32 0.0, %v3693
        %v3695 = vpop.f32.mrb[0].mxu0
        %3696 = vmatprep.mubr.bf16.mxu0 0
        %3697 = vmatmul.mubr.bf16.gmra.mrb[0].mxu0 %v3548
        %v3698 = vpop.f32.mrb[0].mxu0
        %v3699 = vadd.f32 0.0, %v3698
        %v3700 = vpop.f32.mrb[0].mxu0
        %v3701 = vpop.f32.mrb[0].mxu0
        %v3702 = vadd.f32 0.0, %v3701
        %v3703 = vpop.f32.mrb[0].mxu0
        %3704 = vmatprep.mubr.bf16.mxu0 0
        %3705 = vmatmul.mubr.bf16.gmra.mrb[0].mxu0 %v3549
        %v3706 = vpop.f32.mrb[0].mxu0
        %v3707 = vadd.f32 0.0, %v3706
        %v3708 = vpop.f32.mrb[0].mxu0
        %v3709 = vpop.f32.mrb[0].mxu0
        %v3710 = vadd.f32 0.0, %v3709
        %v3711 = vpop.f32.mrb[0].mxu0
        %3712 = vmatprep.mubr.bf16.mxu0 0
        %3713 = vmatmul.mubr.bf16.gmra.mrb[0].mxu0 %v3550
        %v3714 = vpop.f32.mrb[0].mxu0
        %v3715 = vadd.f32 0.0, %v3714
        %v3716 = vpop.f32.mrb[0].mxu0
        %v3717 = vpop.f32.mrb[0].mxu0
        %v3718 = vadd.f32 0.0, %v3717
        %v3719 = vpop.f32.mrb[0].mxu0
        %3720 = vmatprep.mubr.bf16.mxu0 0
        %3721 = vmatmul.mubr.bf16.gmra.mrb[0].mxu0 %v3551
        %v3722 = vpop.f32.mrb[0].mxu0
        %v3723 = vadd.f32 0.0, %v3722
        %v3724 = vpop.f32.mrb[0].mxu0
        %v3725 = vpop.f32.mrb[0].mxu0
        %v3726 = vadd.f32 0.0, %v3725
        %v3727 = vpop.f32.mrb[0].mxu0
        %3728 = vmatprep.mubr.bf16.mxu0 0
        %3729 = vmatmul.mubr.bf16.gmra.mrb[0].mxu0 %v3552
        %v3730 = vpop.f32.mrb[0].mxu0
        %v3731 = vadd.f32 0.0, %v3730
        %v3732 = vpop.f32.mrb[0].mxu0
        %v3733 = vpop.f32.mrb[0].mxu0
        %v3734 = vadd.f32 0.0, %v3733
        %v3735 = vpop.f32.mrb[0].mxu0
        %3736 = vmatprep.mubr.bf16.mxu0 0
        %3737 = vmatmul.mubr.bf16.gmra.mrb[0].mxu0 %v3553
        %v3738 = vpop.f32.mrb[0].mxu0
        %v3739 = vadd.f32 0.0, %v3738
        %v3740 = vpop.f32.mrb[0].mxu0
        %v3741 = vpop.f32.mrb[0].mxu0
        %v3742 = vadd.f32 0.0, %v3741
        %v3743 = vpop.f32.mrb[0].mxu0
        %3744 = vmatprep.mubr.bf16.mxu0 0
        %3745 = vmatmul.mubr.bf16.gmra.mrb[0].mxu0 %v3554
        %v3746 = vpop.f32.mrb[0].mxu0
        %v3747 = vadd.f32 0.0, %v3746
        %v3748 = vpop.f32.mrb[0].mxu0
        %v3749 = vpop.f32.mrb[0].mxu0
        %v3750 = vadd.f32 0.0, %v3749
        %v3751 = vpop.f32.mrb[0].mxu0
        %3752 = vmatprep.mubr.bf16.mxu0 0
        %3753 = vmatmul.mubr.bf16.gmra.mrb[0].mxu0 %v3555
        %v3754 = vpop.f32.mrb[0].mxu0
        %v3755 = vadd.f32 0.0, %v3754
        %v3756 = vpop.f32.mrb[0].mxu0
        %v3757 = vpop.f32.mrb[0].mxu0
        %v3758 = vadd.f32 0.0, %v3757
        %v3759 = vpop.f32.mrb[0].mxu0
        %3760 = vmatprep.mubr.bf16.mxu0 0
        %3761 = vmatmul.mubr.bf16.gmra.mrb[0].mxu0 %v3556
        %v3762 = vpop.f32.mrb[0].mxu0
        %v3763 = vadd.f32 0.0, %v3762
        %v3764 = vpop.f32.mrb[0].mxu0
        %v3765 = vpop.f32.mrb[0].mxu0
        %v3766 = vadd.f32 0.0, %v3765
        %v3767 = vpop.f32.mrb[0].mxu0
        %3768 = vmatprep.mubr.bf16.mxu0 0
        %3769 = vmatmul.mubr.bf16.gmra.mrb[0].mxu0 %v3557
        %v3770 = vpop.f32.mrb[0].mxu0
        %v3771 = vadd.f32 0.0, %v3770
        %v3772 = vpop.f32.mrb[0].mxu0
        %v3773 = vpop.f32.mrb[0].mxu0
        %v3774 = vadd.f32 0.0, %v3773
        %v3775 = vpop.f32.mrb[0].mxu0
        %3776 = vmatprep.mubr.bf16.mxu0 0
        %3777 = vmatmul.mubr.bf16.gmra.mrb[0].mxu0 %v3558
        %v3778 = vpop.f32.mrb[0].mxu0
        %v3779 = vadd.f32 0.0, %v3778
        %v3780 = vpop.f32.mrb[0].mxu0
        %v3781 = vpop.f32.mrb[0].mxu0
        %v3782 = vadd.f32 0.0, %v3781
        %v3783 = vpop.f32.mrb[0].mxu0
        %3784 = vdwg.mxu0
        %v3785 = vld [vmem:[#allocation3] sm:$0xff]
        %v3786 = vld [vmem:[#allocation3 + $0x8] sm:$0xff]
        %v3787 = vld [vmem:[#allocation3 + $0x10] sm:$0xff]
        %v3788 = vld [vmem:[#allocation3 + $0x18] sm:$0xff]
        %v3789 = vld [vmem:[#allocation3 + $0x20] sm:$0xff]
        %v3790 = vld [vmem:[#allocation3 + $0x28] sm:$0xff]
        %v3791 = vld [vmem:[#allocation3 + $0x30] sm:$0xff]
        %v3792 = vld [vmem:[#allocation3 + $0x38] sm:$0xff]
        %v3793 = vld [vmem:[#allocation3 + $0x40] sm:$0xff]
        %v3794 = vld [vmem:[#allocation3 + $0x48] sm:$0xff]
        %v3795 = vld [vmem:[#allocation3 + $0x50] sm:$0xff]
        %v3796 = vld [vmem:[#allocation3 + $0x58] sm:$0xff]
        %v3797 = vld [vmem:[#allocation3 + $0x60] sm:$0xff]
        %v3798 = vld [vmem:[#allocation3 + $0x68] sm:$0xff]
        %v3799 = vld [vmem:[#allocation3 + $0x70] sm:$0xff]
        %v3800 = vld [vmem:[#allocation3 + $0x78] sm:$0xff]
        %v3801 = vld [vmem:[#allocation3 + $0x80] sm:$0xff]
        %v3802 = vld [vmem:[#allocation3 + $0x88] sm:$0xff]
        %v3803 = vld [vmem:[#allocation3 + $0x90] sm:$0xff]
        %v3804 = vld [vmem:[#allocation3 + $0x98] sm:$0xff]
        %v3805 = vld [vmem:[#allocation3 + $0xa0] sm:$0xff]
        %v3806 = vld [vmem:[#allocation3 + $0xa8] sm:$0xff]
        %v3807 = vld [vmem:[#allocation3 + $0xb0] sm:$0xff]
        %v3808 = vld [vmem:[#allocation3 + $0xb8] sm:$0xff]
        %v3809 = vld [vmem:[#allocation3 + $0xc0] sm:$0xff]
        %v3810 = vld [vmem:[#allocation3 + $0xc8] sm:$0xff]
        %v3811 = vld [vmem:[#allocation3 + $0xd0] sm:$0xff]
        %v3812 = vld [vmem:[#allocation3 + $0xd8] sm:$0xff]
        %v3813 = vld [vmem:[#allocation3 + $0xe0] sm:$0xff]
        %v3814 = vld [vmem:[#allocation3 + $0xe8] sm:$0xff]
        %v3815 = vld [vmem:[#allocation3 + $0xf0] sm:$0xff]
        %v3816 = vld [vmem:[#allocation3 + $0xf8] sm:$0xff]
        %v3817 = vadd.f32 %v3785, %v3659
        %v3818 = vadd.f32 %v3786, %v3662
        %v3819 = vadd.f32 %v3787, %v3667
        %v3820 = vadd.f32 %v3788, %v3670
        %v3821 = vadd.f32 %v3789, %v3675
        %v3822 = vadd.f32 %v3790, %v3678
        %v3823 = vadd.f32 %v3791, %v3683
        %v3824 = vadd.f32 %v3792, %v3686
        %v3825 = vadd.f32 %v3793, %v3691
        %v3826 = vadd.f32 %v3794, %v3694
        %v3827 = vadd.f32 %v3795, %v3699
        %v3828 = vadd.f32 %v3796, %v3702
        %v3829 = vadd.f32 %v3797, %v3707
        %v3830 = vadd.f32 %v3798, %v3710
        %v3831 = vadd.f32 %v3799, %v3715
        %v3832 = vadd.f32 %v3800, %v3718
        %v3833 = vadd.f32 %v3801, %v3723
        %v3834 = vadd.f32 %v3802, %v3726
        %v3835 = vadd.f32 %v3803, %v3731
        %v3836 = vadd.f32 %v3804, %v3734
        %v3837 = vadd.f32 %v3805, %v3739
        %v3838 = vadd.f32 %v3806, %v3742
        %v3839 = vadd.f32 %v3807, %v3747
        %v3840 = vadd.f32 %v3808, %v3750
        %v3841 = vadd.f32 %v3809, %v3755
        %v3842 = vadd.f32 %v3810, %v3758
        %v3843 = vadd.f32 %v3811, %v3763
        %v3844 = vadd.f32 %v3812, %v3766
        %v3845 = vadd.f32 %v3813, %v3771
        %v3846 = vadd.f32 %v3814, %v3774
        %v3847 = vadd.f32 %v3815, %v3779
        %v3848 = vadd.f32 %v3816, %v3782
        %3849 = vst [vmem:[#allocation3] sm:$0xff] %v3817
        %3850 = vst [vmem:[#allocation3 + $0x8] sm:$0xff] %v3818
        %3851 = vst [vmem:[#allocation3 + $0x10] sm:$0xff] %v3819
        %3852 = vst [vmem:[#allocation3 + $0x18] sm:$0xff] %v3820
        %3853 = vst [vmem:[#allocation3 + $0x20] sm:$0xff] %v3821
        %3854 = vst [vmem:[#allocation3 + $0x28] sm:$0xff] %v3822
        %3855 = vst [vmem:[#allocation3 + $0x30] sm:$0xff] %v3823
        %3856 = vst [vmem:[#allocation3 + $0x38] sm:$0xff] %v3824
        %3857 = vst [vmem:[#allocation3 + $0x40] sm:$0xff] %v3825
        %3858 = vst [vmem:[#allocation3 + $0x48] sm:$0xff] %v3826
        %3859 = vst [vmem:[#allocation3 + $0x50] sm:$0xff] %v3827
        %3860 = vst [vmem:[#allocation3 + $0x58] sm:$0xff] %v3828
        %3861 = vst [vmem:[#allocation3 + $0x60] sm:$0xff] %v3829
        %3862 = vst [vmem:[#allocation3 + $0x68] sm:$0xff] %v3830
        %3863 = vst [vmem:[#allocation3 + $0x70] sm:$0xff] %v3831
        %3864 = vst [vmem:[#allocation3 + $0x78] sm:$0xff] %v3832
        %3865 = vst [vmem:[#allocation3 + $0x80] sm:$0xff] %v3833
        %3866 = vst [vmem:[#allocation3 + $0x88] sm:$0xff] %v3834
        %3867 = vst [vmem:[#allocation3 + $0x90] sm:$0xff] %v3835
        %3868 = vst [vmem:[#allocation3 + $0x98] sm:$0xff] %v3836
        %3869 = vst [vmem:[#allocation3 + $0xa0] sm:$0xff] %v3837
        %3870 = vst [vmem:[#allocation3 + $0xa8] sm:$0xff] %v3838
        %3871 = vst [vmem:[#allocation3 + $0xb0] sm:$0xff] %v3839
        %3872 = vst [vmem:[#allocation3 + $0xb8] sm:$0xff] %v3840
        %3873 = vst [vmem:[#allocation3 + $0xc0] sm:$0xff] %v3841
        %3874 = vst [vmem:[#allocation3 + $0xc8] sm:$0xff] %v3842
        %3875 = vst [vmem:[#allocation3 + $0xd0] sm:$0xff] %v3843
        %3876 = vst [vmem:[#allocation3 + $0xd8] sm:$0xff] %v3844
        %3877 = vst [vmem:[#allocation3 + $0xe0] sm:$0xff] %v3845
        %3878 = vst [vmem:[#allocation3 + $0xe8] sm:$0xff] %v3846
        %3879 = vst [vmem:[#allocation3 + $0xf0] sm:$0xff] %v3847
        %3880 = vst [vmem:[#allocation3 + $0xf8] sm:$0xff] %v3848
        %v3881 = vld [vmem:[#allocation2 + $0x10] sm:$0xff]
        %v3882 = vld [vmem:[#allocation2 + $0x18] sm:$0xff]
        %v3883 = vld [vmem:[#allocation2 + $0x20] sm:$0xff]
        %v3884 = vld [vmem:[#allocation2 + $0x28] sm:$0xff]
        %v3885 = vld [vmem:[#allocation2 + $0x30] sm:$0xff]
        %v3886 = vld [vmem:[#allocation2 + $0x38] sm:$0xff]
        %v3887 = vld [vmem:[#allocation2 + $0x40] sm:$0xff]
        %v3888 = vld [vmem:[#allocation2 + $0x48] sm:$0xff]
        %v3889 = vld [vmem:[#allocation2 + $0x50] sm:$0xff]
        %v3890 = vld [vmem:[#allocation2 + $0x58] sm:$0xff]
        %v3891 = vld [vmem:[#allocation2 + $0x60] sm:$0xff]
        %v3892 = vld [vmem:[#allocation2 + $0x68] sm:$0xff]
        %v3893 = vld [vmem:[#allocation2 + $0x70] sm:$0xff]
        %v3894 = vld [vmem:[#allocation2 + $0x78] sm:$0xff]
        %v3895 = vld [vmem:[#allocation2 + $0x80] sm:$0xff]
        %v3896 = vld [vmem:[#allocation2 + $0x88] sm:$0xff]
        %v3897 = vld [vmem:[#allocation2 + $0x90] sm:$0x1]
        %v3898 = vsel %vm2535, %v3881, 0
        %v3899 = vsel %vm2536, %v3882, 0
        %v3900 = vsel %vm2537, %v3883, 0
        %v3901 = vsel %vm2538, %v3884, 0
        %v3902 = vsel %vm2539, %v3885, 0
        %v3903 = vsel %vm2540, %v3886, 0
        %v3904 = vsel %vm2541, %v3887, 0
        %v3905 = vsel %vm2542, %v3888, 0
        %v3906 = vsel %vm2543, %v3889, 0
        %v3907 = vsel %vm2544, %v3890, 0
        %v3908 = vsel %vm2545, %v3891, 0
        %v3909 = vsel %vm2546, %v3892, 0
        %v3910 = vsel %vm2547, %v3893, 0
        %v3911 = vsel %vm2548, %v3894, 0
        %v3912 = vsel %vm2549, %v3895, 0
        %v3913 = vsel %vm2550, %v3896, 0
        %v3914 = vsel %vm2551, %v3897, 0
        %s3915 = scalar_lea.vmem %s3, 320
        %v3916 = vld [vmem:[%s3915] sm:$0xf]
        %v3917 = vld [vmem:[%s3915 + $0x4] sm:$0xf]
        %v3918 = vld [vmem:[%s3915 + $0x8] sm:$0xf]
        %v3919 = vld [vmem:[%s3915 + $0xc] sm:$0xf]
        %v3920 = vld [vmem:[%s3915 + $0x10] sm:$0xf]
        %v3921 = vld [vmem:[%s3915 + $0x14] sm:$0xf]
        %v3922 = vld [vmem:[%s3915 + $0x18] sm:$0xf]
        %v3923 = vld [vmem:[%s3915 + $0x1c] sm:$0xf]
        %v3924 = vld [vmem:[%s3915 + $0x20] sm:$0xf]
        %v3925 = vld [vmem:[%s3915 + $0x24] sm:$0xf]
        %v3926 = vld [vmem:[%s3915 + $0x28] sm:$0xf]
        %v3927 = vld [vmem:[%s3915 + $0x2c] sm:$0xf]
        %v3928 = vld [vmem:[%s3915 + $0x30] sm:$0xf]
        %v3929 = vld [vmem:[%s3915 + $0x34] sm:$0xf]
        %v3930 = vld [vmem:[%s3915 + $0x38] sm:$0xf]
        %v3931 = vld [vmem:[%s3915 + $0x3c] sm:$0xf]
        %v3933 = vshrl.u32 %v3898, 16
        %v3935 = vshll.u32 %v3898, 16
        %v3937 = vrot.slane %v3935, 1
        %v3938 = vor.u32 %v3933, %v3937
        %v3940 = vshll.u32 %v3899, 16
        %v3942 = vrot.slane %v3940, 1
        %v3943 = vsel %vm1302, %v3938, %v3942
        %v3944 = vshrl.u32 %v3899, 16
        %v3946 = vor.u32 %v3944, %v3942
        %v3948 = vshll.u32 %v3900, 16
        %v3950 = vrot.slane %v3948, 1
        %v3951 = vsel %vm1302, %v3946, %v3950
        %v3952 = vshrl.u32 %v3900, 16
        %v3954 = vor.u32 %v3952, %v3950
        %v3956 = vshll.u32 %v3901, 16
        %v3958 = vrot.slane %v3956, 1
        %v3959 = vsel %vm1302, %v3954, %v3958
        %v3960 = vshrl.u32 %v3901, 16
        %v3962 = vor.u32 %v3960, %v3958
        %v3964 = vshll.u32 %v3902, 16
        %v3966 = vrot.slane %v3964, 1
        %v3967 = vsel %vm1302, %v3962, %v3966
        %v3968 = vshrl.u32 %v3902, 16
        %v3970 = vor.u32 %v3968, %v3966
        %v3972 = vshll.u32 %v3903, 16
        %v3974 = vrot.slane %v3972, 1
        %v3975 = vsel %vm1302, %v3970, %v3974
        %v3976 = vshrl.u32 %v3903, 16
        %v3978 = vor.u32 %v3976, %v3974
        %v3980 = vshll.u32 %v3904, 16
        %v3982 = vrot.slane %v3980, 1
        %v3983 = vsel %vm1302, %v3978, %v3982
        %v3984 = vshrl.u32 %v3904, 16
        %v3986 = vor.u32 %v3984, %v3982
        %v3988 = vshll.u32 %v3905, 16
        %v3990 = vrot.slane %v3988, 1
        %v3991 = vsel %vm1302, %v3986, %v3990
        %v3992 = vshrl.u32 %v3905, 16
        %v3994 = vor.u32 %v3992, %v3990
        %v3996 = vshll.u32 %v3906, 16
        %v3998 = vrot.slane %v3996, 1
        %v3999 = vsel %vm1302, %v3994, %v3998
        %v4000 = vshrl.u32 %v3906, 16
        %v4002 = vor.u32 %v4000, %v3998
        %v4004 = vshll.u32 %v3907, 16
        %v4006 = vrot.slane %v4004, 1
        %v4007 = vsel %vm1302, %v4002, %v4006
        %v4008 = vshrl.u32 %v3907, 16
        %v4010 = vor.u32 %v4008, %v4006
        %v4012 = vshll.u32 %v3908, 16
        %v4014 = vrot.slane %v4012, 1
        %v4015 = vsel %vm1302, %v4010, %v4014
        %v4016 = vshrl.u32 %v3908, 16
        %v4018 = vor.u32 %v4016, %v4014
        %v4020 = vshll.u32 %v3909, 16
        %v4022 = vrot.slane %v4020, 1
        %v4023 = vsel %vm1302, %v4018, %v4022
        %v4024 = vshrl.u32 %v3909, 16
        %v4026 = vor.u32 %v4024, %v4022
        %v4028 = vshll.u32 %v3910, 16
        %v4030 = vrot.slane %v4028, 1
        %v4031 = vsel %vm1302, %v4026, %v4030
        %v4032 = vshrl.u32 %v3910, 16
        %v4034 = vor.u32 %v4032, %v4030
        %v4036 = vshll.u32 %v3911, 16
        %v4038 = vrot.slane %v4036, 1
        %v4039 = vsel %vm1302, %v4034, %v4038
        %v4040 = vshrl.u32 %v3911, 16
        %v4042 = vor.u32 %v4040, %v4038
        %v4044 = vshll.u32 %v3912, 16
        %v4046 = vrot.slane %v4044, 1
        %v4047 = vsel %vm1302, %v4042, %v4046
        %v4048 = vshrl.u32 %v3912, 16
        %v4050 = vor.u32 %v4048, %v4046
        %v4052 = vshll.u32 %v3913, 16
        %v4054 = vrot.slane %v4052, 1
        %v4055 = vsel %vm1302, %v4050, %v4054
        %v4056 = vshrl.u32 %v3913, 16
        %v4058 = vor.u32 %v4056, %v4054
        %v4060 = vshll.u32 %v3914, 16
        %v4062 = vrot.slane %v4060, 1
        %v4063 = vsel %vm1302, %v4058, %v4062
        %v4096 = vunpack.c.l.b16 %v3916
        %v4097 = vunpack.c.l.b16 %v3917
        %v4098 = vunpack.c.l.b16 %v3918
        %v4099 = vunpack.c.l.b16 %v3919
        %v4100 = vunpack.c.l.b16 %v3920
        %v4101 = vunpack.c.l.b16 %v3921
        %v4102 = vunpack.c.l.b16 %v3922
        %v4103 = vunpack.c.l.b16 %v3923
        %v4104 = vunpack.c.l.b16 %v3924
        %v4105 = vunpack.c.l.b16 %v3925
        %v4106 = vunpack.c.l.b16 %v3926
        %v4107 = vunpack.c.l.b16 %v3927
        %v4108 = vunpack.c.l.b16 %v3928
        %v4109 = vunpack.c.l.b16 %v3929
        %v4110 = vunpack.c.l.b16 %v3930
        %v4111 = vunpack.c.l.b16 %v3931
        %v4112 = vpack.c.b16 %v4097, %v4096
        %v4113 = vpack.c.b16 %v4099, %v4098
        %v4114 = vpack.c.b16 %v4101, %v4100
        %v4115 = vpack.c.b16 %v4103, %v4102
        %v4116 = vpack.c.b16 %v4105, %v4104
        %v4117 = vpack.c.b16 %v4107, %v4106
        %v4118 = vpack.c.b16 %v4109, %v4108
        %v4119 = vpack.c.b16 %v4111, %v4110
        %4128 = vmatprep.subr.bf16.mxu0 0
        %4129 = vmatpush1.bf16.msra.mxu0 %v4112
        %4130 = vmatprep.subr.bf16.mxu0 0
        %4131 = vmatpush1.bf16.msra.mxu0 %v4113
        %4132 = vmatprep.subr.bf16.mxu0 0
        %4133 = vmatpush1.bf16.msra.mxu0 %v4114
        %4134 = vmatprep.subr.bf16.mxu0 0
        %4135 = vmatpush1.bf16.msra.mxu0 %v4115
        %4136 = vmatprep.subr.bf16.mxu0 0
        %4137 = vmatpush1.bf16.msra.mxu0 %v4116
        %4138 = vmatprep.subr.bf16.mxu0 0
        %4139 = vmatpush1.bf16.msra.mxu0 %v4117
        %4140 = vmatprep.subr.bf16.mxu0 0
        %4141 = vmatpush1.bf16.msra.mxu0 %v4118
        %4142 = vmatprep.subr.bf16.mxu0 0
        %4143 = vmatpush1.bf16.msra.mxu0 %v4119
        %4144 = vmatprep.subr.bf16.mxu0 0
        %4145 = vmatpush1.bf16.msra.mxu0 0
        %4146 = vmatprep.subr.bf16.mxu0 0
        %4147 = vmatpush1.bf16.msra.mxu0 0
        %4148 = vmatprep.subr.bf16.mxu0 0
        %4149 = vmatpush1.bf16.msra.mxu0 0
        %4150 = vmatprep.subr.bf16.mxu0 0
        %4151 = vmatpush1.bf16.msra.mxu0 0
        %4152 = vmatprep.subr.bf16.mxu0 0
        %4153 = vmatpush1.bf16.msra.mxu0 0
        %4154 = vmatprep.subr.bf16.mxu0 0
        %4155 = vmatpush1.bf16.msra.mxu0 0
        %4156 = vmatprep.subr.bf16.mxu0 0
        %4157 = vmatpush1.bf16.msra.mxu0 0
        %4158 = vmatprep.subr.bf16.mxu0 0
        %4159 = vmatpush1.bf16.msra.mxu0 0
        %4160 = vmatprep.mubr.bf16.mxu0 0
        %4161 = vmatmul.mubr.bf16.gmra.mrb[0].mxu0 %v3943
        %v4162 = vpop.f32.mrb[0].mxu0
        %v4163 = vadd.f32 0.0, %v4162
        %v4164 = vpop.f32.mrb[0].mxu0
        %v4165 = vpop.f32.mrb[0].mxu0
        %v4166 = vadd.f32 0.0, %v4165
        %v4167 = vpop.f32.mrb[0].mxu0
        %4168 = vmatprep.mubr.bf16.mxu0 0
        %4169 = vmatmul.mubr.bf16.gmra.mrb[0].mxu0 %v3951
        %v4170 = vpop.f32.mrb[0].mxu0
        %v4171 = vadd.f32 0.0, %v4170
        %v4172 = vpop.f32.mrb[0].mxu0
        %v4173 = vpop.f32.mrb[0].mxu0
        %v4174 = vadd.f32 0.0, %v4173
        %v4175 = vpop.f32.mrb[0].mxu0
        %4176 = vmatprep.mubr.bf16.mxu0 0
        %4177 = vmatmul.mubr.bf16.gmra.mrb[0].mxu0 %v3959
        %v4178 = vpop.f32.mrb[0].mxu0
        %v4179 = vadd.f32 0.0, %v4178
        %v4180 = vpop.f32.mrb[0].mxu0
        %v4181 = vpop.f32.mrb[0].mxu0
        %v4182 = vadd.f32 0.0, %v4181
        %v4183 = vpop.f32.mrb[0].mxu0
        %4184 = vmatprep.mubr.bf16.mxu0 0
        %4185 = vmatmul.mubr.bf16.gmra.mrb[0].mxu0 %v3967
        %v4186 = vpop.f32.mrb[0].mxu0
        %v4187 = vadd.f32 0.0, %v4186
        %v4188 = vpop.f32.mrb[0].mxu0
        %v4189 = vpop.f32.mrb[0].mxu0
        %v4190 = vadd.f32 0.0, %v4189
        %v4191 = vpop.f32.mrb[0].mxu0
        %4192 = vmatprep.mubr.bf16.mxu0 0
        %4193 = vmatmul.mubr.bf16.gmra.mrb[0].mxu0 %v3975
        %v4194 = vpop.f32.mrb[0].mxu0
        %v4195 = vadd.f32 0.0, %v4194
        %v4196 = vpop.f32.mrb[0].mxu0
        %v4197 = vpop.f32.mrb[0].mxu0
        %v4198 = vadd.f32 0.0, %v4197
        %v4199 = vpop.f32.mrb[0].mxu0
        %4200 = vmatprep.mubr.bf16.mxu0 0
        %4201 = vmatmul.mubr.bf16.gmra.mrb[0].mxu0 %v3983
        %v4202 = vpop.f32.mrb[0].mxu0
        %v4203 = vadd.f32 0.0, %v4202
        %v4204 = vpop.f32.mrb[0].mxu0
        %v4205 = vpop.f32.mrb[0].mxu0
        %v4206 = vadd.f32 0.0, %v4205
        %v4207 = vpop.f32.mrb[0].mxu0
        %4208 = vmatprep.mubr.bf16.mxu0 0
        %4209 = vmatmul.mubr.bf16.gmra.mrb[0].mxu0 %v3991
        %v4210 = vpop.f32.mrb[0].mxu0
        %v4211 = vadd.f32 0.0, %v4210
        %v4212 = vpop.f32.mrb[0].mxu0
        %v4213 = vpop.f32.mrb[0].mxu0
        %v4214 = vadd.f32 0.0, %v4213
        %v4215 = vpop.f32.mrb[0].mxu0
        %4216 = vmatprep.mubr.bf16.mxu0 0
        %4217 = vmatmul.mubr.bf16.gmra.mrb[0].mxu0 %v3999
        %v4218 = vpop.f32.mrb[0].mxu0
        %v4219 = vadd.f32 0.0, %v4218
        %v4220 = vpop.f32.mrb[0].mxu0
        %v4221 = vpop.f32.mrb[0].mxu0
        %v4222 = vadd.f32 0.0, %v4221
        %v4223 = vpop.f32.mrb[0].mxu0
        %4224 = vmatprep.mubr.bf16.mxu0 0
        %4225 = vmatmul.mubr.bf16.gmra.mrb[0].mxu0 %v4007
        %v4226 = vpop.f32.mrb[0].mxu0
        %v4227 = vadd.f32 0.0, %v4226
        %v4228 = vpop.f32.mrb[0].mxu0
        %v4229 = vpop.f32.mrb[0].mxu0
        %v4230 = vadd.f32 0.0, %v4229
        %v4231 = vpop.f32.mrb[0].mxu0
        %4232 = vmatprep.mubr.bf16.mxu0 0
        %4233 = vmatmul.mubr.bf16.gmra.mrb[0].mxu0 %v4015
        %v4234 = vpop.f32.mrb[0].mxu0
        %v4235 = vadd.f32 0.0, %v4234
        %v4236 = vpop.f32.mrb[0].mxu0
        %v4237 = vpop.f32.mrb[0].mxu0
        %v4238 = vadd.f32 0.0, %v4237
        %v4239 = vpop.f32.mrb[0].mxu0
        %4240 = vmatprep.mubr.bf16.mxu0 0
        %4241 = vmatmul.mubr.bf16.gmra.mrb[0].mxu0 %v4023
        %v4242 = vpop.f32.mrb[0].mxu0
        %v4243 = vadd.f32 0.0, %v4242
        %v4244 = vpop.f32.mrb[0].mxu0
        %v4245 = vpop.f32.mrb[0].mxu0
        %v4246 = vadd.f32 0.0, %v4245
        %v4247 = vpop.f32.mrb[0].mxu0
        %4248 = vmatprep.mubr.bf16.mxu0 0
        %4249 = vmatmul.mubr.bf16.gmra.mrb[0].mxu0 %v4031
        %v4250 = vpop.f32.mrb[0].mxu0
        %v4251 = vadd.f32 0.0, %v4250
        %v4252 = vpop.f32.mrb[0].mxu0
        %v4253 = vpop.f32.mrb[0].mxu0
        %v4254 = vadd.f32 0.0, %v4253
        %v4255 = vpop.f32.mrb[0].mxu0
        %4256 = vmatprep.mubr.bf16.mxu0 0
        %4257 = vmatmul.mubr.bf16.gmra.mrb[0].mxu0 %v4039
        %v4258 = vpop.f32.mrb[0].mxu0
        %v4259 = vadd.f32 0.0, %v4258
        %v4260 = vpop.f32.mrb[0].mxu0
        %v4261 = vpop.f32.mrb[0].mxu0
        %v4262 = vadd.f32 0.0, %v4261
        %v4263 = vpop.f32.mrb[0].mxu0
        %4264 = vmatprep.mubr.bf16.mxu0 0
        %4265 = vmatmul.mubr.bf16.gmra.mrb[0].mxu0 %v4047
        %v4266 = vpop.f32.mrb[0].mxu0
        %v4267 = vadd.f32 0.0, %v4266
        %v4268 = vpop.f32.mrb[0].mxu0
        %v4269 = vpop.f32.mrb[0].mxu0
        %v4270 = vadd.f32 0.0, %v4269
        %v4271 = vpop.f32.mrb[0].mxu0
        %4272 = vmatprep.mubr.bf16.mxu0 0
        %4273 = vmatmul.mubr.bf16.gmra.mrb[0].mxu0 %v4055
        %v4274 = vpop.f32.mrb[0].mxu0
        %v4275 = vadd.f32 0.0, %v4274
        %v4276 = vpop.f32.mrb[0].mxu0
        %v4277 = vpop.f32.mrb[0].mxu0
        %v4278 = vadd.f32 0.0, %v4277
        %v4279 = vpop.f32.mrb[0].mxu0
        %4280 = vmatprep.mubr.bf16.mxu0 0
        %4281 = vmatmul.mubr.bf16.gmra.mrb[0].mxu0 %v4063
        %v4282 = vpop.f32.mrb[0].mxu0
        %v4283 = vadd.f32 0.0, %v4282
        %v4284 = vpop.f32.mrb[0].mxu0
        %v4285 = vpop.f32.mrb[0].mxu0
        %v4286 = vadd.f32 0.0, %v4285
        %v4287 = vpop.f32.mrb[0].mxu0
        %4288 = vdwg.mxu0
        %v4289 = vld [vmem:[#allocation3] sm:$0xff]
        %v4290 = vld [vmem:[#allocation3 + $0x8] sm:$0xff]
        %v4291 = vld [vmem:[#allocation3 + $0x10] sm:$0xff]
        %v4292 = vld [vmem:[#allocation3 + $0x18] sm:$0xff]
        %v4293 = vld [vmem:[#allocation3 + $0x20] sm:$0xff]
        %v4294 = vld [vmem:[#allocation3 + $0x28] sm:$0xff]
        %v4295 = vld [vmem:[#allocation3 + $0x30] sm:$0xff]
        %v4296 = vld [vmem:[#allocation3 + $0x38] sm:$0xff]
        %v4297 = vld [vmem:[#allocation3 + $0x40] sm:$0xff]
        %v4298 = vld [vmem:[#allocation3 + $0x48] sm:$0xff]
        %v4299 = vld [vmem:[#allocation3 + $0x50] sm:$0xff]
        %v4300 = vld [vmem:[#allocation3 + $0x58] sm:$0xff]
        %v4301 = vld [vmem:[#allocation3 + $0x60] sm:$0xff]
        %v4302 = vld [vmem:[#allocation3 + $0x68] sm:$0xff]
        %v4303 = vld [vmem:[#allocation3 + $0x70] sm:$0xff]
        %v4304 = vld [vmem:[#allocation3 + $0x78] sm:$0xff]
        %v4305 = vld [vmem:[#allocation3 + $0x80] sm:$0xff]
        %v4306 = vld [vmem:[#allocation3 + $0x88] sm:$0xff]
        %v4307 = vld [vmem:[#allocation3 + $0x90] sm:$0xff]
        %v4308 = vld [vmem:[#allocation3 + $0x98] sm:$0xff]
        %v4309 = vld [vmem:[#allocation3 + $0xa0] sm:$0xff]
        %v4310 = vld [vmem:[#allocation3 + $0xa8] sm:$0xff]
        %v4311 = vld [vmem:[#allocation3 + $0xb0] sm:$0xff]
        %v4312 = vld [vmem:[#allocation3 + $0xb8] sm:$0xff]
        %v4313 = vld [vmem:[#allocation3 + $0xc0] sm:$0xff]
        %v4314 = vld [vmem:[#allocation3 + $0xc8] sm:$0xff]
        %v4315 = vld [vmem:[#allocation3 + $0xd0] sm:$0xff]
        %v4316 = vld [vmem:[#allocation3 + $0xd8] sm:$0xff]
        %v4317 = vld [vmem:[#allocation3 + $0xe0] sm:$0xff]
        %v4318 = vld [vmem:[#allocation3 + $0xe8] sm:$0xff]
        %v4319 = vld [vmem:[#allocation3 + $0xf0] sm:$0xff]
        %v4320 = vld [vmem:[#allocation3 + $0xf8] sm:$0xff]
        %v4321 = vadd.f32 %v4289, %v4163
        %v4322 = vadd.f32 %v4290, %v4166
        %v4323 = vadd.f32 %v4291, %v4171
        %v4324 = vadd.f32 %v4292, %v4174
        %v4325 = vadd.f32 %v4293, %v4179
        %v4326 = vadd.f32 %v4294, %v4182
        %v4327 = vadd.f32 %v4295, %v4187
        %v4328 = vadd.f32 %v4296, %v4190
        %v4329 = vadd.f32 %v4297, %v4195
        %v4330 = vadd.f32 %v4298, %v4198
        %v4331 = vadd.f32 %v4299, %v4203
        %v4332 = vadd.f32 %v4300, %v4206
        %v4333 = vadd.f32 %v4301, %v4211
        %v4334 = vadd.f32 %v4302, %v4214
        %v4335 = vadd.f32 %v4303, %v4219
        %v4336 = vadd.f32 %v4304, %v4222
        %v4337 = vadd.f32 %v4305, %v4227
        %v4338 = vadd.f32 %v4306, %v4230
        %v4339 = vadd.f32 %v4307, %v4235
        %v4340 = vadd.f32 %v4308, %v4238
        %v4341 = vadd.f32 %v4309, %v4243
        %v4342 = vadd.f32 %v4310, %v4246
        %v4343 = vadd.f32 %v4311, %v4251
        %v4344 = vadd.f32 %v4312, %v4254
        %v4345 = vadd.f32 %v4313, %v4259
        %v4346 = vadd.f32 %v4314, %v4262
        %v4347 = vadd.f32 %v4315, %v4267
        %v4348 = vadd.f32 %v4316, %v4270
        %v4349 = vadd.f32 %v4317, %v4275
        %v4350 = vadd.f32 %v4318, %v4278
        %v4351 = vadd.f32 %v4319, %v4283
        %v4352 = vadd.f32 %v4320, %v4286
        %4353 = vst [vmem:[#allocation3] sm:$0xff] %v4321
        %4354 = vst [vmem:[#allocation3 + $0x8] sm:$0xff] %v4322
        %4355 = vst [vmem:[#allocation3 + $0x10] sm:$0xff] %v4323
        %4356 = vst [vmem:[#allocation3 + $0x18] sm:$0xff] %v4324
        %4357 = vst [vmem:[#allocation3 + $0x20] sm:$0xff] %v4325
        %4358 = vst [vmem:[#allocation3 + $0x28] sm:$0xff] %v4326
        %4359 = vst [vmem:[#allocation3 + $0x30] sm:$0xff] %v4327
        %4360 = vst [vmem:[#allocation3 + $0x38] sm:$0xff] %v4328
        %4361 = vst [vmem:[#allocation3 + $0x40] sm:$0xff] %v4329
        %4362 = vst [vmem:[#allocation3 + $0x48] sm:$0xff] %v4330
        %4363 = vst [vmem:[#allocation3 + $0x50] sm:$0xff] %v4331
        %4364 = vst [vmem:[#allocation3 + $0x58] sm:$0xff] %v4332
        %4365 = vst [vmem:[#allocation3 + $0x60] sm:$0xff] %v4333
        %4366 = vst [vmem:[#allocation3 + $0x68] sm:$0xff] %v4334
        %4367 = vst [vmem:[#allocation3 + $0x70] sm:$0xff] %v4335
        %4368 = vst [vmem:[#allocation3 + $0x78] sm:$0xff] %v4336
        %4369 = vst [vmem:[#allocation3 + $0x80] sm:$0xff] %v4337
        %4370 = vst [vmem:[#allocation3 + $0x88] sm:$0xff] %v4338
        %4371 = vst [vmem:[#allocation3 + $0x90] sm:$0xff] %v4339
        %4372 = vst [vmem:[#allocation3 + $0x98] sm:$0xff] %v4340
        %4373 = vst [vmem:[#allocation3 + $0xa0] sm:$0xff] %v4341
        %4374 = vst [vmem:[#allocation3 + $0xa8] sm:$0xff] %v4342
        %4375 = vst [vmem:[#allocation3 + $0xb0] sm:$0xff] %v4343
        %4376 = vst [vmem:[#allocation3 + $0xb8] sm:$0xff] %v4344
        %4377 = vst [vmem:[#allocation3 + $0xc0] sm:$0xff] %v4345
        %4378 = vst [vmem:[#allocation3 + $0xc8] sm:$0xff] %v4346
        %4379 = vst [vmem:[#allocation3 + $0xd0] sm:$0xff] %v4347
        %4380 = vst [vmem:[#allocation3 + $0xd8] sm:$0xff] %v4348
        %4381 = vst [vmem:[#allocation3 + $0xe0] sm:$0xff] %v4349
        %4382 = vst [vmem:[#allocation3 + $0xe8] sm:$0xff] %v4350
        %4383 = vst [vmem:[#allocation3 + $0xf0] sm:$0xff] %v4351
        %4384 = vst [vmem:[#allocation3 + $0xf8] sm:$0xff] %v4352
        %v4385 = vld [vmem:[#allocation2 + $0x10] sm:$0x80]
        %v4386 = vld [vmem:[#allocation2 + $0x18] sm:$0xff]
        %v4387 = vld [vmem:[#allocation2 + $0x20] sm:$0xff]
        %v4388 = vld [vmem:[#allocation2 + $0x28] sm:$0xff]
        %v4389 = vld [vmem:[#allocation2 + $0x30] sm:$0xff]
        %v4390 = vld [vmem:[#allocation2 + $0x38] sm:$0xff]
        %v4391 = vld [vmem:[#allocation2 + $0x40] sm:$0xff]
        %v4392 = vld [vmem:[#allocation2 + $0x48] sm:$0xff]
        %v4393 = vld [vmem:[#allocation2 + $0x50] sm:$0xff]
        %v4394 = vld [vmem:[#allocation2 + $0x58] sm:$0xff]
        %v4395 = vld [vmem:[#allocation2 + $0x60] sm:$0xff]
        %v4396 = vld [vmem:[#allocation2 + $0x68] sm:$0xff]
        %v4397 = vld [vmem:[#allocation2 + $0x70] sm:$0xff]
        %v4398 = vld [vmem:[#allocation2 + $0x78] sm:$0xff]
        %v4399 = vld [vmem:[#allocation2 + $0x80] sm:$0xff]
        %v4400 = vld [vmem:[#allocation2 + $0x88] sm:$0xff]
        %v4401 = vld [vmem:[#allocation2 + $0x90] sm:$0xff]
        %v4402 = vsel %vm1430, %v4385, 0
        %v4403 = vsel %vm1431, %v4386, 0
        %v4404 = vsel %vm1432, %v4387, 0
        %v4405 = vsel %vm1433, %v4388, 0
        %v4406 = vsel %vm1434, %v4389, 0
        %v4407 = vsel %vm1435, %v4390, 0
        %v4408 = vsel %vm1436, %v4391, 0
        %v4409 = vsel %vm1437, %v4392, 0
        %v4410 = vsel %vm1438, %v4393, 0
        %v4411 = vsel %vm1439, %v4394, 0
        %v4412 = vsel %vm1440, %v4395, 0
        %v4413 = vsel %vm1441, %v4396, 0
        %v4414 = vsel %vm1442, %v4397, 0
        %v4415 = vsel %vm1443, %v4398, 0
        %v4416 = vsel %vm1444, %v4399, 0
        %v4417 = vsel %vm1445, %v4400, 0
        %v4418 = vsel %vm1446, %v4401, 0
        %s4419 = scalar_lea.vmem %s3, 384
        %v4420 = vld [vmem:[%s4419] sm:$0xf]
        %v4421 = vld [vmem:[%s4419 + $0x4] sm:$0xf]
        %v4422 = vld [vmem:[%s4419 + $0x8] sm:$0xf]
        %v4423 = vld [vmem:[%s4419 + $0xc] sm:$0xf]
        %v4424 = vld [vmem:[%s4419 + $0x10] sm:$0xf]
        %v4425 = vld [vmem:[%s4419 + $0x14] sm:$0xf]
        %v4426 = vld [vmem:[%s4419 + $0x18] sm:$0xf]
        %v4427 = vld [vmem:[%s4419 + $0x1c] sm:$0xf]
        %v4428 = vld [vmem:[%s4419 + $0x20] sm:$0xf]
        %v4429 = vld [vmem:[%s4419 + $0x24] sm:$0xf]
        %v4430 = vld [vmem:[%s4419 + $0x28] sm:$0xf]
        %v4431 = vld [vmem:[%s4419 + $0x2c] sm:$0xf]
        %v4432 = vld [vmem:[%s4419 + $0x30] sm:$0xf]
        %v4433 = vld [vmem:[%s4419 + $0x34] sm:$0xf]
        %v4434 = vld [vmem:[%s4419 + $0x38] sm:$0xf]
        %v4435 = vld [vmem:[%s4419 + $0x3c] sm:$0xf]
        %v4437 = vshrl.u32 %v4402, 16
        %v4439 = vrot.slane %v4437, 7
        %v4441 = vshrl.u32 %v4403, 16
        %v4443 = vrot.slane %v4441, 7
        %v4444 = vshll.u32 %v4403, 16
        %v4446 = vor.u32 %v4443, %v4444
        %v4447 = vsel %vm1487, %v4439, %v4446
        %v4449 = vshrl.u32 %v4404, 16
        %v4451 = vrot.slane %v4449, 7
        %v4452 = vshll.u32 %v4404, 16
        %v4454 = vor.u32 %v4451, %v4452
        %v4455 = vsel %vm1487, %v4443, %v4454
        %v4457 = vshrl.u32 %v4405, 16
        %v4459 = vrot.slane %v4457, 7
        %v4460 = vshll.u32 %v4405, 16
        %v4462 = vor.u32 %v4459, %v4460
        %v4463 = vsel %vm1487, %v4451, %v4462
        %v4465 = vshrl.u32 %v4406, 16
        %v4467 = vrot.slane %v4465, 7
        %v4468 = vshll.u32 %v4406, 16
        %v4470 = vor.u32 %v4467, %v4468
        %v4471 = vsel %vm1487, %v4459, %v4470
        %v4473 = vshrl.u32 %v4407, 16
        %v4475 = vrot.slane %v4473, 7
        %v4476 = vshll.u32 %v4407, 16
        %v4478 = vor.u32 %v4475, %v4476
        %v4479 = vsel %vm1487, %v4467, %v4478
        %v4481 = vshrl.u32 %v4408, 16
        %v4483 = vrot.slane %v4481, 7
        %v4484 = vshll.u32 %v4408, 16
        %v4486 = vor.u32 %v4483, %v4484
        %v4487 = vsel %vm1487, %v4475, %v4486
        %v4489 = vshrl.u32 %v4409, 16
        %v4491 = vrot.slane %v4489, 7
        %v4492 = vshll.u32 %v4409, 16
        %v4494 = vor.u32 %v4491, %v4492
        %v4495 = vsel %vm1487, %v4483, %v4494
        %v4497 = vshrl.u32 %v4410, 16
        %v4499 = vrot.slane %v4497, 7
        %v4500 = vshll.u32 %v4410, 16
        %v4502 = vor.u32 %v4499, %v4500
        %v4503 = vsel %vm1487, %v4491, %v4502
        %v4505 = vshrl.u32 %v4411, 16
        %v4507 = vrot.slane %v4505, 7
        %v4508 = vshll.u32 %v4411, 16
        %v4510 = vor.u32 %v4507, %v4508
        %v4511 = vsel %vm1487, %v4499, %v4510
        %v4513 = vshrl.u32 %v4412, 16
        %v4515 = vrot.slane %v4513, 7
        %v4516 = vshll.u32 %v4412, 16
        %v4518 = vor.u32 %v4515, %v4516
        %v4519 = vsel %vm1487, %v4507, %v4518
        %v4521 = vshrl.u32 %v4413, 16
        %v4523 = vrot.slane %v4521, 7
        %v4524 = vshll.u32 %v4413, 16
        %v4526 = vor.u32 %v4523, %v4524
        %v4527 = vsel %vm1487, %v4515, %v4526
        %v4529 = vshrl.u32 %v4414, 16
        %v4531 = vrot.slane %v4529, 7
        %v4532 = vshll.u32 %v4414, 16
        %v4534 = vor.u32 %v4531, %v4532
        %v4535 = vsel %vm1487, %v4523, %v4534
        %v4537 = vshrl.u32 %v4415, 16
        %v4539 = vrot.slane %v4537, 7
        %v4540 = vshll.u32 %v4415, 16
        %v4542 = vor.u32 %v4539, %v4540
        %v4543 = vsel %vm1487, %v4531, %v4542
        %v4545 = vshrl.u32 %v4416, 16
        %v4547 = vrot.slane %v4545, 7
        %v4548 = vshll.u32 %v4416, 16
        %v4550 = vor.u32 %v4547, %v4548
        %v4551 = vsel %vm1487, %v4539, %v4550
        %v4553 = vshrl.u32 %v4417, 16
        %v4555 = vrot.slane %v4553, 7
        %v4556 = vshll.u32 %v4417, 16
        %v4558 = vor.u32 %v4555, %v4556
        %v4559 = vsel %vm1487, %v4547, %v4558
        %v4561 = vshrl.u32 %v4418, 16
        %v4563 = vrot.slane %v4561, 7
        %v4564 = vshll.u32 %v4418, 16
        %v4566 = vor.u32 %v4563, %v4564
        %v4567 = vsel %vm1487, %v4555, %v4566
        %v4600 = vunpack.c.l.b16 %v4420
        %v4601 = vunpack.c.l.b16 %v4421
        %v4602 = vunpack.c.l.b16 %v4422
        %v4603 = vunpack.c.l.b16 %v4423
        %v4604 = vunpack.c.l.b16 %v4424
        %v4605 = vunpack.c.l.b16 %v4425
        %v4606 = vunpack.c.l.b16 %v4426
        %v4607 = vunpack.c.l.b16 %v4427
        %v4608 = vunpack.c.l.b16 %v4428
        %v4609 = vunpack.c.l.b16 %v4429
        %v4610 = vunpack.c.l.b16 %v4430
        %v4611 = vunpack.c.l.b16 %v4431
        %v4612 = vunpack.c.l.b16 %v4432
        %v4613 = vunpack.c.l.b16 %v4433
        %v4614 = vunpack.c.l.b16 %v4434
        %v4615 = vunpack.c.l.b16 %v4435
        %v4616 = vpack.c.b16 %v4601, %v4600
        %v4617 = vpack.c.b16 %v4603, %v4602
        %v4618 = vpack.c.b16 %v4605, %v4604
        %v4619 = vpack.c.b16 %v4607, %v4606
        %v4620 = vpack.c.b16 %v4609, %v4608
        %v4621 = vpack.c.b16 %v4611, %v4610
        %v4622 = vpack.c.b16 %v4613, %v4612
        %v4623 = vpack.c.b16 %v4615, %v4614
        %4632 = vmatprep.subr.bf16.mxu0 0
        %4633 = vmatpush1.bf16.msra.mxu0 %v4616
        %4634 = vmatprep.subr.bf16.mxu0 0
        %4635 = vmatpush1.bf16.msra.mxu0 %v4617
        %4636 = vmatprep.subr.bf16.mxu0 0
        %4637 = vmatpush1.bf16.msra.mxu0 %v4618
        %4638 = vmatprep.subr.bf16.mxu0 0
        %4639 = vmatpush1.bf16.msra.mxu0 %v4619
        %4640 = vmatprep.subr.bf16.mxu0 0
        %4641 = vmatpush1.bf16.msra.mxu0 %v4620
        %4642 = vmatprep.subr.bf16.mxu0 0
        %4643 = vmatpush1.bf16.msra.mxu0 %v4621
        %4644 = vmatprep.subr.bf16.mxu0 0
        %4645 = vmatpush1.bf16.msra.mxu0 %v4622
        %4646 = vmatprep.subr.bf16.mxu0 0
        %4647 = vmatpush1.bf16.msra.mxu0 %v4623
        %4648 = vmatprep.subr.bf16.mxu0 0
        %4649 = vmatpush1.bf16.msra.mxu0 0
        %4650 = vmatprep.subr.bf16.mxu0 0
        %4651 = vmatpush1.bf16.msra.mxu0 0
        %4652 = vmatprep.subr.bf16.mxu0 0
        %4653 = vmatpush1.bf16.msra.mxu0 0
        %4654 = vmatprep.subr.bf16.mxu0 0
        %4655 = vmatpush1.bf16.msra.mxu0 0
        %4656 = vmatprep.subr.bf16.mxu0 0
        %4657 = vmatpush1.bf16.msra.mxu0 0
        %4658 = vmatprep.subr.bf16.mxu0 0
        %4659 = vmatpush1.bf16.msra.mxu0 0
        %4660 = vmatprep.subr.bf16.mxu0 0
        %4661 = vmatpush1.bf16.msra.mxu0 0
        %4662 = vmatprep.subr.bf16.mxu0 0
        %4663 = vmatpush1.bf16.msra.mxu0 0
        %4664 = vmatprep.mubr.bf16.mxu0 0
        %4665 = vmatmul.mubr.bf16.gmra.mrb[0].mxu0 %v4447
        %v4666 = vpop.f32.mrb[0].mxu0
        %v4667 = vadd.f32 0.0, %v4666
        %v4668 = vpop.f32.mrb[0].mxu0
        %v4669 = vpop.f32.mrb[0].mxu0
        %v4670 = vadd.f32 0.0, %v4669
        %v4671 = vpop.f32.mrb[0].mxu0
        %4672 = vmatprep.mubr.bf16.mxu0 0
        %4673 = vmatmul.mubr.bf16.gmra.mrb[0].mxu0 %v4455
        %v4674 = vpop.f32.mrb[0].mxu0
        %v4675 = vadd.f32 0.0, %v4674
        %v4676 = vpop.f32.mrb[0].mxu0
        %v4677 = vpop.f32.mrb[0].mxu0
        %v4678 = vadd.f32 0.0, %v4677
        %v4679 = vpop.f32.mrb[0].mxu0
        %4680 = vmatprep.mubr.bf16.mxu0 0
        %4681 = vmatmul.mubr.bf16.gmra.mrb[0].mxu0 %v4463
        %v4682 = vpop.f32.mrb[0].mxu0
        %v4683 = vadd.f32 0.0, %v4682
        %v4684 = vpop.f32.mrb[0].mxu0
        %v4685 = vpop.f32.mrb[0].mxu0
        %v4686 = vadd.f32 0.0, %v4685
        %v4687 = vpop.f32.mrb[0].mxu0
        %4688 = vmatprep.mubr.bf16.mxu0 0
        %4689 = vmatmul.mubr.bf16.gmra.mrb[0].mxu0 %v4471
        %v4690 = vpop.f32.mrb[0].mxu0
        %v4691 = vadd.f32 0.0, %v4690
        %v4692 = vpop.f32.mrb[0].mxu0
        %v4693 = vpop.f32.mrb[0].mxu0
        %v4694 = vadd.f32 0.0, %v4693
        %v4695 = vpop.f32.mrb[0].mxu0
        %4696 = vmatprep.mubr.bf16.mxu0 0
        %4697 = vmatmul.mubr.bf16.gmra.mrb[0].mxu0 %v4479
        %v4698 = vpop.f32.mrb[0].mxu0
        %v4699 = vadd.f32 0.0, %v4698
        %v4700 = vpop.f32.mrb[0].mxu0
        %v4701 = vpop.f32.mrb[0].mxu0
        %v4702 = vadd.f32 0.0, %v4701
        %v4703 = vpop.f32.mrb[0].mxu0
        %4704 = vmatprep.mubr.bf16.mxu0 0
        %4705 = vmatmul.mubr.bf16.gmra.mrb[0].mxu0 %v4487
        %v4706 = vpop.f32.mrb[0].mxu0
        %v4707 = vadd.f32 0.0, %v4706
        %v4708 = vpop.f32.mrb[0].mxu0
        %v4709 = vpop.f32.mrb[0].mxu0
        %v4710 = vadd.f32 0.0, %v4709
        %v4711 = vpop.f32.mrb[0].mxu0
        %4712 = vmatprep.mubr.bf16.mxu0 0
        %4713 = vmatmul.mubr.bf16.gmra.mrb[0].mxu0 %v4495
        %v4714 = vpop.f32.mrb[0].mxu0
        %v4715 = vadd.f32 0.0, %v4714
        %v4716 = vpop.f32.mrb[0].mxu0
        %v4717 = vpop.f32.mrb[0].mxu0
        %v4718 = vadd.f32 0.0, %v4717
        %v4719 = vpop.f32.mrb[0].mxu0
        %4720 = vmatprep.mubr.bf16.mxu0 0
        %4721 = vmatmul.mubr.bf16.gmra.mrb[0].mxu0 %v4503
        %v4722 = vpop.f32.mrb[0].mxu0
        %v4723 = vadd.f32 0.0, %v4722
        %v4724 = vpop.f32.mrb[0].mxu0
        %v4725 = vpop.f32.mrb[0].mxu0
        %v4726 = vadd.f32 0.0, %v4725
        %v4727 = vpop.f32.mrb[0].mxu0
        %4728 = vmatprep.mubr.bf16.mxu0 0
        %4729 = vmatmul.mubr.bf16.gmra.mrb[0].mxu0 %v4511
        %v4730 = vpop.f32.mrb[0].mxu0
        %v4731 = vadd.f32 0.0, %v4730
        %v4732 = vpop.f32.mrb[0].mxu0
        %v4733 = vpop.f32.mrb[0].mxu0
        %v4734 = vadd.f32 0.0, %v4733
        %v4735 = vpop.f32.mrb[0].mxu0
        %4736 = vmatprep.mubr.bf16.mxu0 0
        %4737 = vmatmul.mubr.bf16.gmra.mrb[0].mxu0 %v4519
        %v4738 = vpop.f32.mrb[0].mxu0
        %v4739 = vadd.f32 0.0, %v4738
        %v4740 = vpop.f32.mrb[0].mxu0
        %v4741 = vpop.f32.mrb[0].mxu0
        %v4742 = vadd.f32 0.0, %v4741
        %v4743 = vpop.f32.mrb[0].mxu0
        %4744 = vmatprep.mubr.bf16.mxu0 0
        %4745 = vmatmul.mubr.bf16.gmra.mrb[0].mxu0 %v4527
        %v4746 = vpop.f32.mrb[0].mxu0
        %v4747 = vadd.f32 0.0, %v4746
        %v4748 = vpop.f32.mrb[0].mxu0
        %v4749 = vpop.f32.mrb[0].mxu0
        %v4750 = vadd.f32 0.0, %v4749
        %v4751 = vpop.f32.mrb[0].mxu0
        %4752 = vmatprep.mubr.bf16.mxu0 0
        %4753 = vmatmul.mubr.bf16.gmra.mrb[0].mxu0 %v4535
        %v4754 = vpop.f32.mrb[0].mxu0
        %v4755 = vadd.f32 0.0, %v4754
        %v4756 = vpop.f32.mrb[0].mxu0
        %v4757 = vpop.f32.mrb[0].mxu0
        %v4758 = vadd.f32 0.0, %v4757
        %v4759 = vpop.f32.mrb[0].mxu0
        %4760 = vmatprep.mubr.bf16.mxu0 0
        %4761 = vmatmul.mubr.bf16.gmra.mrb[0].mxu0 %v4543
        %v4762 = vpop.f32.mrb[0].mxu0
        %v4763 = vadd.f32 0.0, %v4762
        %v4764 = vpop.f32.mrb[0].mxu0
        %v4765 = vpop.f32.mrb[0].mxu0
        %v4766 = vadd.f32 0.0, %v4765
        %v4767 = vpop.f32.mrb[0].mxu0
        %4768 = vmatprep.mubr.bf16.mxu0 0
        %4769 = vmatmul.mubr.bf16.gmra.mrb[0].mxu0 %v4551
        %v4770 = vpop.f32.mrb[0].mxu0
        %v4771 = vadd.f32 0.0, %v4770
        %v4772 = vpop.f32.mrb[0].mxu0
        %v4773 = vpop.f32.mrb[0].mxu0
        %v4774 = vadd.f32 0.0, %v4773
        %v4775 = vpop.f32.mrb[0].mxu0
        %4776 = vmatprep.mubr.bf16.mxu0 0
        %4777 = vmatmul.mubr.bf16.gmra.mrb[0].mxu0 %v4559
        %v4778 = vpop.f32.mrb[0].mxu0
        %v4779 = vadd.f32 0.0, %v4778
        %v4780 = vpop.f32.mrb[0].mxu0
        %v4781 = vpop.f32.mrb[0].mxu0
        %v4782 = vadd.f32 0.0, %v4781
        %v4783 = vpop.f32.mrb[0].mxu0
        %4784 = vmatprep.mubr.bf16.mxu0 0
        %4785 = vmatmul.mubr.bf16.gmra.mrb[0].mxu0 %v4567
        %v4786 = vpop.f32.mrb[0].mxu0
        %v4787 = vadd.f32 0.0, %v4786
        %v4788 = vpop.f32.mrb[0].mxu0
        %v4789 = vpop.f32.mrb[0].mxu0
        %v4790 = vadd.f32 0.0, %v4789
        %v4791 = vpop.f32.mrb[0].mxu0
        %4792 = vdwg.mxu0
        %v4793 = vld [vmem:[#allocation3] sm:$0xff]
        %v4794 = vld [vmem:[#allocation3 + $0x8] sm:$0xff]
        %v4795 = vld [vmem:[#allocation3 + $0x10] sm:$0xff]
        %v4796 = vld [vmem:[#allocation3 + $0x18] sm:$0xff]
        %v4797 = vld [vmem:[#allocation3 + $0x20] sm:$0xff]
        %v4798 = vld [vmem:[#allocation3 + $0x28] sm:$0xff]
        %v4799 = vld [vmem:[#allocation3 + $0x30] sm:$0xff]
        %v4800 = vld [vmem:[#allocation3 + $0x38] sm:$0xff]
        %v4801 = vld [vmem:[#allocation3 + $0x40] sm:$0xff]
        %v4802 = vld [vmem:[#allocation3 + $0x48] sm:$0xff]
        %v4803 = vld [vmem:[#allocation3 + $0x50] sm:$0xff]
        %v4804 = vld [vmem:[#allocation3 + $0x58] sm:$0xff]
        %v4805 = vld [vmem:[#allocation3 + $0x60] sm:$0xff]
        %v4806 = vld [vmem:[#allocation3 + $0x68] sm:$0xff]
        %v4807 = vld [vmem:[#allocation3 + $0x70] sm:$0xff]
        %v4808 = vld [vmem:[#allocation3 + $0x78] sm:$0xff]
        %v4809 = vld [vmem:[#allocation3 + $0x80] sm:$0xff]
        %v4810 = vld [vmem:[#allocation3 + $0x88] sm:$0xff]
        %v4811 = vld [vmem:[#allocation3 + $0x90] sm:$0xff]
        %v4812 = vld [vmem:[#allocation3 + $0x98] sm:$0xff]
        %v4813 = vld [vmem:[#allocation3 + $0xa0] sm:$0xff]
        %v4814 = vld [vmem:[#allocation3 + $0xa8] sm:$0xff]
        %v4815 = vld [vmem:[#allocation3 + $0xb0] sm:$0xff]
        %v4816 = vld [vmem:[#allocation3 + $0xb8] sm:$0xff]
        %v4817 = vld [vmem:[#allocation3 + $0xc0] sm:$0xff]
        %v4818 = vld [vmem:[#allocation3 + $0xc8] sm:$0xff]
        %v4819 = vld [vmem:[#allocation3 + $0xd0] sm:$0xff]
        %v4820 = vld [vmem:[#allocation3 + $0xd8] sm:$0xff]
        %v4821 = vld [vmem:[#allocation3 + $0xe0] sm:$0xff]
        %v4822 = vld [vmem:[#allocation3 + $0xe8] sm:$0xff]
        %v4823 = vld [vmem:[#allocation3 + $0xf0] sm:$0xff]
        %v4824 = vld [vmem:[#allocation3 + $0xf8] sm:$0xff]
        %v4825 = vadd.f32 %v4793, %v4667
        %v4826 = vadd.f32 %v4794, %v4670
        %v4827 = vadd.f32 %v4795, %v4675
        %v4828 = vadd.f32 %v4796, %v4678
        %v4829 = vadd.f32 %v4797, %v4683
        %v4830 = vadd.f32 %v4798, %v4686
        %v4831 = vadd.f32 %v4799, %v4691
        %v4832 = vadd.f32 %v4800, %v4694
        %v4833 = vadd.f32 %v4801, %v4699
        %v4834 = vadd.f32 %v4802, %v4702
        %v4835 = vadd.f32 %v4803, %v4707
        %v4836 = vadd.f32 %v4804, %v4710
        %v4837 = vadd.f32 %v4805, %v4715
        %v4838 = vadd.f32 %v4806, %v4718
        %v4839 = vadd.f32 %v4807, %v4723
        %v4840 = vadd.f32 %v4808, %v4726
        %v4841 = vadd.f32 %v4809, %v4731
        %v4842 = vadd.f32 %v4810, %v4734
        %v4843 = vadd.f32 %v4811, %v4739
        %v4844 = vadd.f32 %v4812, %v4742
        %v4845 = vadd.f32 %v4813, %v4747
        %v4846 = vadd.f32 %v4814, %v4750
        %v4847 = vadd.f32 %v4815, %v4755
        %v4848 = vadd.f32 %v4816, %v4758
        %v4849 = vadd.f32 %v4817, %v4763
        %v4850 = vadd.f32 %v4818, %v4766
        %v4851 = vadd.f32 %v4819, %v4771
        %v4852 = vadd.f32 %v4820, %v4774
        %v4853 = vadd.f32 %v4821, %v4779
        %v4854 = vadd.f32 %v4822, %v4782
        %v4855 = vadd.f32 %v4823, %v4787
        %v4856 = vadd.f32 %v4824, %v4790
        %4857 = vst [vmem:[#allocation3] sm:$0xff] %v4825
        %4858 = vst [vmem:[#allocation3 + $0x8] sm:$0xff] %v4826
        %4859 = vst [vmem:[#allocation3 + $0x10] sm:$0xff] %v4827
        %4860 = vst [vmem:[#allocation3 + $0x18] sm:$0xff] %v4828
        %4861 = vst [vmem:[#allocation3 + $0x20] sm:$0xff] %v4829
        %4862 = vst [vmem:[#allocation3 + $0x28] sm:$0xff] %v4830
        %4863 = vst [vmem:[#allocation3 + $0x30] sm:$0xff] %v4831
        %4864 = vst [vmem:[#allocation3 + $0x38] sm:$0xff] %v4832
        %4865 = vst [vmem:[#allocation3 + $0x40] sm:$0xff] %v4833
        %4866 = vst [vmem:[#allocation3 + $0x48] sm:$0xff] %v4834
        %4867 = vst [vmem:[#allocation3 + $0x50] sm:$0xff] %v4835
        %4868 = vst [vmem:[#allocation3 + $0x58] sm:$0xff] %v4836
        %4869 = vst [vmem:[#allocation3 + $0x60] sm:$0xff] %v4837
        %4870 = vst [vmem:[#allocation3 + $0x68] sm:$0xff] %v4838
        %4871 = vst [vmem:[#allocation3 + $0x70] sm:$0xff] %v4839
        %4872 = vst [vmem:[#allocation3 + $0x78] sm:$0xff] %v4840
        %4873 = vst [vmem:[#allocation3 + $0x80] sm:$0xff] %v4841
        %4874 = vst [vmem:[#allocation3 + $0x88] sm:$0xff] %v4842
        %4875 = vst [vmem:[#allocation3 + $0x90] sm:$0xff] %v4843
        %4876 = vst [vmem:[#allocation3 + $0x98] sm:$0xff] %v4844
        %4877 = vst [vmem:[#allocation3 + $0xa0] sm:$0xff] %v4845
        %4878 = vst [vmem:[#allocation3 + $0xa8] sm:$0xff] %v4846
        %4879 = vst [vmem:[#allocation3 + $0xb0] sm:$0xff] %v4847
        %4880 = vst [vmem:[#allocation3 + $0xb8] sm:$0xff] %v4848
        %4881 = vst [vmem:[#allocation3 + $0xc0] sm:$0xff] %v4849
        %4882 = vst [vmem:[#allocation3 + $0xc8] sm:$0xff] %v4850
        %4883 = vst [vmem:[#allocation3 + $0xd0] sm:$0xff] %v4851
        %4884 = vst [vmem:[#allocation3 + $0xd8] sm:$0xff] %v4852
        %4885 = vst [vmem:[#allocation3 + $0xe0] sm:$0xff] %v4853
        %4886 = vst [vmem:[#allocation3 + $0xe8] sm:$0xff] %v4854
        %4887 = vst [vmem:[#allocation3 + $0xf0] sm:$0xff] %v4855
        %4888 = vst [vmem:[#allocation3 + $0xf8] sm:$0xff] %v4856
        %v4889 = vld [vmem:[#allocation2 + $0x18] sm:$0xff]
        %v4890 = vld [vmem:[#allocation2 + $0x20] sm:$0xff]
        %v4891 = vld [vmem:[#allocation2 + $0x28] sm:$0xff]
        %v4892 = vld [vmem:[#allocation2 + $0x30] sm:$0xff]
        %v4893 = vld [vmem:[#allocation2 + $0x38] sm:$0xff]
        %v4894 = vld [vmem:[#allocation2 + $0x40] sm:$0xff]
        %v4895 = vld [vmem:[#allocation2 + $0x48] sm:$0xff]
        %v4896 = vld [vmem:[#allocation2 + $0x50] sm:$0xff]
        %v4897 = vld [vmem:[#allocation2 + $0x58] sm:$0xff]
        %v4898 = vld [vmem:[#allocation2 + $0x60] sm:$0xff]
        %v4899 = vld [vmem:[#allocation2 + $0x68] sm:$0xff]
        %v4900 = vld [vmem:[#allocation2 + $0x70] sm:$0xff]
        %v4901 = vld [vmem:[#allocation2 + $0x78] sm:$0xff]
        %v4902 = vld [vmem:[#allocation2 + $0x80] sm:$0xff]
        %v4903 = vld [vmem:[#allocation2 + $0x88] sm:$0xff]
        %v4904 = vld [vmem:[#allocation2 + $0x90] sm:$0xff]
        %s4905 = scalar_lea.vmem %s3, 448
        %v4906 = vld [vmem:[%s4905] sm:$0xf]
        %v4907 = vld [vmem:[%s4905 + $0x4] sm:$0xf]
        %v4908 = vld [vmem:[%s4905 + $0x8] sm:$0xf]
        %v4909 = vld [vmem:[%s4905 + $0xc] sm:$0xf]
        %v4910 = vld [vmem:[%s4905 + $0x10] sm:$0xf]
        %v4911 = vld [vmem:[%s4905 + $0x14] sm:$0xf]
        %v4912 = vld [vmem:[%s4905 + $0x18] sm:$0xf]
        %v4913 = vld [vmem:[%s4905 + $0x1c] sm:$0xf]
        %v4914 = vld [vmem:[%s4905 + $0x20] sm:$0xf]
        %v4915 = vld [vmem:[%s4905 + $0x24] sm:$0xf]
        %v4916 = vld [vmem:[%s4905 + $0x28] sm:$0xf]
        %v4917 = vld [vmem:[%s4905 + $0x2c] sm:$0xf]
        %v4918 = vld [vmem:[%s4905 + $0x30] sm:$0xf]
        %v4919 = vld [vmem:[%s4905 + $0x34] sm:$0xf]
        %v4920 = vld [vmem:[%s4905 + $0x38] sm:$0xf]
        %v4921 = vld [vmem:[%s4905 + $0x3c] sm:$0xf]
        %v4938 = vunpack.c.l.b16 %v4906
        %v4939 = vunpack.c.l.b16 %v4907
        %v4940 = vunpack.c.l.b16 %v4908
        %v4941 = vunpack.c.l.b16 %v4909
        %v4942 = vunpack.c.l.b16 %v4910
        %v4943 = vunpack.c.l.b16 %v4911
        %v4944 = vunpack.c.l.b16 %v4912
        %v4945 = vunpack.c.l.b16 %v4913
        %v4946 = vunpack.c.l.b16 %v4914
        %v4947 = vunpack.c.l.b16 %v4915
        %v4948 = vunpack.c.l.b16 %v4916
        %v4949 = vunpack.c.l.b16 %v4917
        %v4950 = vunpack.c.l.b16 %v4918
        %v4951 = vunpack.c.l.b16 %v4919
        %v4952 = vunpack.c.l.b16 %v4920
        %v4953 = vunpack.c.l.b16 %v4921
        %v4954 = vpack.c.b16 %v4939, %v4938
        %v4955 = vpack.c.b16 %v4941, %v4940
        %v4956 = vpack.c.b16 %v4943, %v4942
        %v4957 = vpack.c.b16 %v4945, %v4944
        %v4958 = vpack.c.b16 %v4947, %v4946
        %v4959 = vpack.c.b16 %v4949, %v4948
        %v4960 = vpack.c.b16 %v4951, %v4950
        %v4961 = vpack.c.b16 %v4953, %v4952
        %4970 = vmatprep.subr.bf16.mxu0 0
        %4971 = vmatpush1.bf16.msra.mxu0 %v4954
        %4972 = vmatprep.subr.bf16.mxu0 0
        %4973 = vmatpush1.bf16.msra.mxu0 %v4955
        %4974 = vmatprep.subr.bf16.mxu0 0
        %4975 = vmatpush1.bf16.msra.mxu0 %v4956
        %4976 = vmatprep.subr.bf16.mxu0 0
        %4977 = vmatpush1.bf16.msra.mxu0 %v4957
        %4978 = vmatprep.subr.bf16.mxu0 0
        %4979 = vmatpush1.bf16.msra.mxu0 %v4958
        %4980 = vmatprep.subr.bf16.mxu0 0
        %4981 = vmatpush1.bf16.msra.mxu0 %v4959
        %4982 = vmatprep.subr.bf16.mxu0 0
        %4983 = vmatpush1.bf16.msra.mxu0 %v4960
        %4984 = vmatprep.subr.bf16.mxu0 0
        %4985 = vmatpush1.bf16.msra.mxu0 %v4961
        %4986 = vmatprep.subr.bf16.mxu0 0
        %4987 = vmatpush1.bf16.msra.mxu0 0
        %4988 = vmatprep.subr.bf16.mxu0 0
        %4989 = vmatpush1.bf16.msra.mxu0 0
        %4990 = vmatprep.subr.bf16.mxu0 0
        %4991 = vmatpush1.bf16.msra.mxu0 0
        %4992 = vmatprep.subr.bf16.mxu0 0
        %4993 = vmatpush1.bf16.msra.mxu0 0
        %4994 = vmatprep.subr.bf16.mxu0 0
        %4995 = vmatpush1.bf16.msra.mxu0 0
        %4996 = vmatprep.subr.bf16.mxu0 0
        %4997 = vmatpush1.bf16.msra.mxu0 0
        %4998 = vmatprep.subr.bf16.mxu0 0
        %4999 = vmatpush1.bf16.msra.mxu0 0
        %5000 = vmatprep.subr.bf16.mxu0 0
        %5001 = vmatpush1.bf16.msra.mxu0 0
        %5002 = vmatprep.mubr.bf16.mxu0 0
        %5003 = vmatmul.mubr.bf16.gmra.mrb[0].mxu0 %v4889
        %v5004 = vpop.f32.mrb[0].mxu0
        %v5005 = vadd.f32 0.0, %v5004
        %v5006 = vpop.f32.mrb[0].mxu0
        %v5007 = vpop.f32.mrb[0].mxu0
        %v5008 = vadd.f32 0.0, %v5007
        %v5009 = vpop.f32.mrb[0].mxu0
        %5010 = vmatprep.mubr.bf16.mxu0 0
        %5011 = vmatmul.mubr.bf16.gmra.mrb[0].mxu0 %v4890
        %v5012 = vpop.f32.mrb[0].mxu0
        %v5013 = vadd.f32 0.0, %v5012
        %v5014 = vpop.f32.mrb[0].mxu0
        %v5015 = vpop.f32.mrb[0].mxu0
        %v5016 = vadd.f32 0.0, %v5015
        %v5017 = vpop.f32.mrb[0].mxu0
        %5018 = vmatprep.mubr.bf16.mxu0 0
        %5019 = vmatmul.mubr.bf16.gmra.mrb[0].mxu0 %v4891
        %v5020 = vpop.f32.mrb[0].mxu0
        %v5021 = vadd.f32 0.0, %v5020
        %v5022 = vpop.f32.mrb[0].mxu0
        %v5023 = vpop.f32.mrb[0].mxu0
        %v5024 = vadd.f32 0.0, %v5023
        %v5025 = vpop.f32.mrb[0].mxu0
        %5026 = vmatprep.mubr.bf16.mxu0 0
        %5027 = vmatmul.mubr.bf16.gmra.mrb[0].mxu0 %v4892
        %v5028 = vpop.f32.mrb[0].mxu0
        %v5029 = vadd.f32 0.0, %v5028
        %v5030 = vpop.f32.mrb[0].mxu0
        %v5031 = vpop.f32.mrb[0].mxu0
        %v5032 = vadd.f32 0.0, %v5031
        %v5033 = vpop.f32.mrb[0].mxu0
        %5034 = vmatprep.mubr.bf16.mxu0 0
        %5035 = vmatmul.mubr.bf16.gmra.mrb[0].mxu0 %v4893
        %v5036 = vpop.f32.mrb[0].mxu0
        %v5037 = vadd.f32 0.0, %v5036
        %v5038 = vpop.f32.mrb[0].mxu0
        %v5039 = vpop.f32.mrb[0].mxu0
        %v5040 = vadd.f32 0.0, %v5039
        %v5041 = vpop.f32.mrb[0].mxu0
        %5042 = vmatprep.mubr.bf16.mxu0 0
        %5043 = vmatmul.mubr.bf16.gmra.mrb[0].mxu0 %v4894
        %v5044 = vpop.f32.mrb[0].mxu0
        %v5045 = vadd.f32 0.0, %v5044
        %v5046 = vpop.f32.mrb[0].mxu0
        %v5047 = vpop.f32.mrb[0].mxu0
        %v5048 = vadd.f32 0.0, %v5047
        %v5049 = vpop.f32.mrb[0].mxu0
        %5050 = vmatprep.mubr.bf16.mxu0 0
        %5051 = vmatmul.mubr.bf16.gmra.mrb[0].mxu0 %v4895
        %v5052 = vpop.f32.mrb[0].mxu0
        %v5053 = vadd.f32 0.0, %v5052
        %v5054 = vpop.f32.mrb[0].mxu0
        %v5055 = vpop.f32.mrb[0].mxu0
        %v5056 = vadd.f32 0.0, %v5055
        %v5057 = vpop.f32.mrb[0].mxu0
        %5058 = vmatprep.mubr.bf16.mxu0 0
        %5059 = vmatmul.mubr.bf16.gmra.mrb[0].mxu0 %v4896
        %v5060 = vpop.f32.mrb[0].mxu0
        %v5061 = vadd.f32 0.0, %v5060
        %v5062 = vpop.f32.mrb[0].mxu0
        %v5063 = vpop.f32.mrb[0].mxu0
        %v5064 = vadd.f32 0.0, %v5063
        %v5065 = vpop.f32.mrb[0].mxu0
        %5066 = vmatprep.mubr.bf16.mxu0 0
        %5067 = vmatmul.mubr.bf16.gmra.mrb[0].mxu0 %v4897
        %v5068 = vpop.f32.mrb[0].mxu0
        %v5069 = vadd.f32 0.0, %v5068
        %v5070 = vpop.f32.mrb[0].mxu0
        %v5071 = vpop.f32.mrb[0].mxu0
        %v5072 = vadd.f32 0.0, %v5071
        %v5073 = vpop.f32.mrb[0].mxu0
        %5074 = vmatprep.mubr.bf16.mxu0 0
        %5075 = vmatmul.mubr.bf16.gmra.mrb[0].mxu0 %v4898
        %v5076 = vpop.f32.mrb[0].mxu0
        %v5077 = vadd.f32 0.0, %v5076
        %v5078 = vpop.f32.mrb[0].mxu0
        %v5079 = vpop.f32.mrb[0].mxu0
        %v5080 = vadd.f32 0.0, %v5079
        %v5081 = vpop.f32.mrb[0].mxu0
        %5082 = vmatprep.mubr.bf16.mxu0 0
        %5083 = vmatmul.mubr.bf16.gmra.mrb[0].mxu0 %v4899
        %v5084 = vpop.f32.mrb[0].mxu0
        %v5085 = vadd.f32 0.0, %v5084
        %v5086 = vpop.f32.mrb[0].mxu0
        %v5087 = vpop.f32.mrb[0].mxu0
        %v5088 = vadd.f32 0.0, %v5087
        %v5089 = vpop.f32.mrb[0].mxu0
        %5090 = vmatprep.mubr.bf16.mxu0 0
        %5091 = vmatmul.mubr.bf16.gmra.mrb[0].mxu0 %v4900
        %v5092 = vpop.f32.mrb[0].mxu0
        %v5093 = vadd.f32 0.0, %v5092
        %v5094 = vpop.f32.mrb[0].mxu0
        %v5095 = vpop.f32.mrb[0].mxu0
        %v5096 = vadd.f32 0.0, %v5095
        %v5097 = vpop.f32.mrb[0].mxu0
        %5098 = vmatprep.mubr.bf16.mxu0 0
        %5099 = vmatmul.mubr.bf16.gmra.mrb[0].mxu0 %v4901
        %v5100 = vpop.f32.mrb[0].mxu0
        %v5101 = vadd.f32 0.0, %v5100
        %v5102 = vpop.f32.mrb[0].mxu0
        %v5103 = vpop.f32.mrb[0].mxu0
        %v5104 = vadd.f32 0.0, %v5103
        %v5105 = vpop.f32.mrb[0].mxu0
        %5106 = vmatprep.mubr.bf16.mxu0 0
        %5107 = vmatmul.mubr.bf16.gmra.mrb[0].mxu0 %v4902
        %v5108 = vpop.f32.mrb[0].mxu0
        %v5109 = vadd.f32 0.0, %v5108
        %v5110 = vpop.f32.mrb[0].mxu0
        %v5111 = vpop.f32.mrb[0].mxu0
        %v5112 = vadd.f32 0.0, %v5111
        %v5113 = vpop.f32.mrb[0].mxu0
        %5114 = vmatprep.mubr.bf16.mxu0 0
        %5115 = vmatmul.mubr.bf16.gmra.mrb[0].mxu0 %v4903
        %v5116 = vpop.f32.mrb[0].mxu0
        %v5117 = vadd.f32 0.0, %v5116
        %v5118 = vpop.f32.mrb[0].mxu0
        %v5119 = vpop.f32.mrb[0].mxu0
        %v5120 = vadd.f32 0.0, %v5119
        %v5121 = vpop.f32.mrb[0].mxu0
        %5122 = vmatprep.mubr.bf16.mxu0 0
        %5123 = vmatmul.mubr.bf16.gmra.mrb[0].mxu0 %v4904
        %v5124 = vpop.f32.mrb[0].mxu0
        %v5125 = vadd.f32 0.0, %v5124
        %v5126 = vpop.f32.mrb[0].mxu0
        %v5127 = vpop.f32.mrb[0].mxu0
        %v5128 = vadd.f32 0.0, %v5127
        %v5129 = vpop.f32.mrb[0].mxu0
        %5130 = vdwg.mxu0
        %v5131 = vld [vmem:[#allocation3] sm:$0xff]
        %v5132 = vld [vmem:[#allocation3 + $0x8] sm:$0xff]
        %v5133 = vld [vmem:[#allocation3 + $0x10] sm:$0xff]
        %v5134 = vld [vmem:[#allocation3 + $0x18] sm:$0xff]
        %v5135 = vld [vmem:[#allocation3 + $0x20] sm:$0xff]
        %v5136 = vld [vmem:[#allocation3 + $0x28] sm:$0xff]
        %v5137 = vld [vmem:[#allocation3 + $0x30] sm:$0xff]
        %v5138 = vld [vmem:[#allocation3 + $0x38] sm:$0xff]
        %v5139 = vld [vmem:[#allocation3 + $0x40] sm:$0xff]
        %v5140 = vld [vmem:[#allocation3 + $0x48] sm:$0xff]
        %v5141 = vld [vmem:[#allocation3 + $0x50] sm:$0xff]
        %v5142 = vld [vmem:[#allocation3 + $0x58] sm:$0xff]
        %v5143 = vld [vmem:[#allocation3 + $0x60] sm:$0xff]
        %v5144 = vld [vmem:[#allocation3 + $0x68] sm:$0xff]
        %v5145 = vld [vmem:[#allocation3 + $0x70] sm:$0xff]
        %v5146 = vld [vmem:[#allocation3 + $0x78] sm:$0xff]
        %v5147 = vld [vmem:[#allocation3 + $0x80] sm:$0xff]
        %v5148 = vld [vmem:[#allocation3 + $0x88] sm:$0xff]
        %v5149 = vld [vmem:[#allocation3 + $0x90] sm:$0xff]
        %v5150 = vld [vmem:[#allocation3 + $0x98] sm:$0xff]
        %v5151 = vld [vmem:[#allocation3 + $0xa0] sm:$0xff]
        %v5152 = vld [vmem:[#allocation3 + $0xa8] sm:$0xff]
        %v5153 = vld [vmem:[#allocation3 + $0xb0] sm:$0xff]
        %v5154 = vld [vmem:[#allocation3 + $0xb8] sm:$0xff]
        %v5155 = vld [vmem:[#allocation3 + $0xc0] sm:$0xff]
        %v5156 = vld [vmem:[#allocation3 + $0xc8] sm:$0xff]
        %v5157 = vld [vmem:[#allocation3 + $0xd0] sm:$0xff]
        %v5158 = vld [vmem:[#allocation3 + $0xd8] sm:$0xff]
        %v5159 = vld [vmem:[#allocation3 + $0xe0] sm:$0xff]
        %v5160 = vld [vmem:[#allocation3 + $0xe8] sm:$0xff]
        %v5161 = vld [vmem:[#allocation3 + $0xf0] sm:$0xff]
        %v5162 = vld [vmem:[#allocation3 + $0xf8] sm:$0xff]
        %v5163 = vadd.f32 %v5131, %v5005
        %v5164 = vadd.f32 %v5132, %v5008
        %v5165 = vadd.f32 %v5133, %v5013
        %v5166 = vadd.f32 %v5134, %v5016
        %v5167 = vadd.f32 %v5135, %v5021
        %v5168 = vadd.f32 %v5136, %v5024
        %v5169 = vadd.f32 %v5137, %v5029
        %v5170 = vadd.f32 %v5138, %v5032
        %v5171 = vadd.f32 %v5139, %v5037
        %v5172 = vadd.f32 %v5140, %v5040
        %v5173 = vadd.f32 %v5141, %v5045
        %v5174 = vadd.f32 %v5142, %v5048
        %v5175 = vadd.f32 %v5143, %v5053
        %v5176 = vadd.f32 %v5144, %v5056
        %v5177 = vadd.f32 %v5145, %v5061
        %v5178 = vadd.f32 %v5146, %v5064
        %v5179 = vadd.f32 %v5147, %v5069
        %v5180 = vadd.f32 %v5148, %v5072
        %v5181 = vadd.f32 %v5149, %v5077
        %v5182 = vadd.f32 %v5150, %v5080
        %v5183 = vadd.f32 %v5151, %v5085
        %v5184 = vadd.f32 %v5152, %v5088
        %v5185 = vadd.f32 %v5153, %v5093
        %v5186 = vadd.f32 %v5154, %v5096
        %v5187 = vadd.f32 %v5155, %v5101
        %v5188 = vadd.f32 %v5156, %v5104
        %v5189 = vadd.f32 %v5157, %v5109
        %v5190 = vadd.f32 %v5158, %v5112
        %v5191 = vadd.f32 %v5159, %v5117
        %v5192 = vadd.f32 %v5160, %v5120
        %v5193 = vadd.f32 %v5161, %v5125
        %v5194 = vadd.f32 %v5162, %v5128
        %5195 = vst [vmem:[#allocation3] sm:$0xff] %v5163
        %5196 = vst [vmem:[#allocation3 + $0x8] sm:$0xff] %v5164
        %5197 = vst [vmem:[#allocation3 + $0x10] sm:$0xff] %v5165
        %5198 = vst [vmem:[#allocation3 + $0x18] sm:$0xff] %v5166
        %5199 = vst [vmem:[#allocation3 + $0x20] sm:$0xff] %v5167
        %5200 = vst [vmem:[#allocation3 + $0x28] sm:$0xff] %v5168
        %5201 = vst [vmem:[#allocation3 + $0x30] sm:$0xff] %v5169
        %5202 = vst [vmem:[#allocation3 + $0x38] sm:$0xff] %v5170
        %5203 = vst [vmem:[#allocation3 + $0x40] sm:$0xff] %v5171
        %5204 = vst [vmem:[#allocation3 + $0x48] sm:$0xff] %v5172
        %5205 = vst [vmem:[#allocation3 + $0x50] sm:$0xff] %v5173
        %5206 = vst [vmem:[#allocation3 + $0x58] sm:$0xff] %v5174
        %5207 = vst [vmem:[#allocation3 + $0x60] sm:$0xff] %v5175
        %5208 = vst [vmem:[#allocation3 + $0x68] sm:$0xff] %v5176
        %5209 = vst [vmem:[#allocation3 + $0x70] sm:$0xff] %v5177
        %5210 = vst [vmem:[#allocation3 + $0x78] sm:$0xff] %v5178
        %5211 = vst [vmem:[#allocation3 + $0x80] sm:$0xff] %v5179
        %5212 = vst [vmem:[#allocation3 + $0x88] sm:$0xff] %v5180
        %5213 = vst [vmem:[#allocation3 + $0x90] sm:$0xff] %v5181
        %5214 = vst [vmem:[#allocation3 + $0x98] sm:$0xff] %v5182
        %5215 = vst [vmem:[#allocation3 + $0xa0] sm:$0xff] %v5183
        %5216 = vst [vmem:[#allocation3 + $0xa8] sm:$0xff] %v5184
        %5217 = vst [vmem:[#allocation3 + $0xb0] sm:$0xff] %v5185
        %5218 = vst [vmem:[#allocation3 + $0xb8] sm:$0xff] %v5186
        %5219 = vst [vmem:[#allocation3 + $0xc0] sm:$0xff] %v5187
        %5220 = vst [vmem:[#allocation3 + $0xc8] sm:$0xff] %v5188
        %5221 = vst [vmem:[#allocation3 + $0xd0] sm:$0xff] %v5189
        %5222 = vst [vmem:[#allocation3 + $0xd8] sm:$0xff] %v5190
        %5223 = vst [vmem:[#allocation3 + $0xe0] sm:$0xff] %v5191
        %5224 = vst [vmem:[#allocation3 + $0xe8] sm:$0xff] %v5192
        %5225 = vst [vmem:[#allocation3 + $0xf0] sm:$0xff] %v5193
        %5226 = vst [vmem:[#allocation3 + $0xf8] sm:$0xff] %v5194
        %v5227 = vld [vmem:[#allocation2 + $0x18] sm:$0xff]
        %v5228 = vld [vmem:[#allocation2 + $0x20] sm:$0xff]
        %v5229 = vld [vmem:[#allocation2 + $0x28] sm:$0xff]
        %v5230 = vld [vmem:[#allocation2 + $0x30] sm:$0xff]
        %v5231 = vld [vmem:[#allocation2 + $0x38] sm:$0xff]
        %v5232 = vld [vmem:[#allocation2 + $0x40] sm:$0xff]
        %v5233 = vld [vmem:[#allocation2 + $0x48] sm:$0xff]
        %v5234 = vld [vmem:[#allocation2 + $0x50] sm:$0xff]
        %v5235 = vld [vmem:[#allocation2 + $0x58] sm:$0xff]
        %v5236 = vld [vmem:[#allocation2 + $0x60] sm:$0xff]
        %v5237 = vld [vmem:[#allocation2 + $0x68] sm:$0xff]
        %v5238 = vld [vmem:[#allocation2 + $0x70] sm:$0xff]
        %v5239 = vld [vmem:[#allocation2 + $0x78] sm:$0xff]
        %v5240 = vld [vmem:[#allocation2 + $0x80] sm:$0xff]
        %v5241 = vld [vmem:[#allocation2 + $0x88] sm:$0xff]
        %v5242 = vld [vmem:[#allocation2 + $0x90] sm:$0xff]
        %v5243 = vld [vmem:[#allocation2 + $0x98] sm:$0x1]
        %v5244 = vsel %vm2535, %v5227, 0
        %v5245 = vsel %vm2536, %v5228, 0
        %v5246 = vsel %vm2537, %v5229, 0
        %v5247 = vsel %vm2538, %v5230, 0
        %v5248 = vsel %vm2539, %v5231, 0
        %v5249 = vsel %vm2540, %v5232, 0
        %v5250 = vsel %vm2541, %v5233, 0
        %v5251 = vsel %vm2542, %v5234, 0
        %v5252 = vsel %vm2543, %v5235, 0
        %v5253 = vsel %vm2544, %v5236, 0
        %v5254 = vsel %vm2545, %v5237, 0
        %v5255 = vsel %vm2546, %v5238, 0
        %v5256 = vsel %vm2547, %v5239, 0
        %v5257 = vsel %vm2548, %v5240, 0
        %v5258 = vsel %vm2549, %v5241, 0
        %v5259 = vsel %vm2550, %v5242, 0
        %v5260 = vsel %vm2551, %v5243, 0
        %s5261 = scalar_lea.vmem %s3, 512
        %v5262 = vld [vmem:[%s5261] sm:$0xf]
        %v5263 = vld [vmem:[%s5261 + $0x4] sm:$0xf]
        %v5264 = vld [vmem:[%s5261 + $0x8] sm:$0xf]
        %v5265 = vld [vmem:[%s5261 + $0xc] sm:$0xf]
        %v5266 = vld [vmem:[%s5261 + $0x10] sm:$0xf]
        %v5267 = vld [vmem:[%s5261 + $0x14] sm:$0xf]
        %v5268 = vld [vmem:[%s5261 + $0x18] sm:$0xf]
        %v5269 = vld [vmem:[%s5261 + $0x1c] sm:$0xf]
        %v5270 = vld [vmem:[%s5261 + $0x20] sm:$0xf]
        %v5271 = vld [vmem:[%s5261 + $0x24] sm:$0xf]
        %v5272 = vld [vmem:[%s5261 + $0x28] sm:$0xf]
        %v5273 = vld [vmem:[%s5261 + $0x2c] sm:$0xf]
        %v5274 = vld [vmem:[%s5261 + $0x30] sm:$0xf]
        %v5275 = vld [vmem:[%s5261 + $0x34] sm:$0xf]
        %v5276 = vld [vmem:[%s5261 + $0x38] sm:$0xf]
        %v5277 = vld [vmem:[%s5261 + $0x3c] sm:$0xf]
        %v5279 = vshrl.u32 %v5244, 16
        %v5281 = vshll.u32 %v5244, 16
        %v5283 = vrot.slane %v5281, 1
        %v5284 = vor.u32 %v5279, %v5283
        %v5286 = vshll.u32 %v5245, 16
        %v5288 = vrot.slane %v5286, 1
        %v5289 = vsel %vm1302, %v5284, %v5288
        %v5290 = vshrl.u32 %v5245, 16
        %v5292 = vor.u32 %v5290, %v5288
        %v5294 = vshll.u32 %v5246, 16
        %v5296 = vrot.slane %v5294, 1
        %v5297 = vsel %vm1302, %v5292, %v5296
        %v5298 = vshrl.u32 %v5246, 16
        %v5300 = vor.u32 %v5298, %v5296
        %v5302 = vshll.u32 %v5247, 16
        %v5304 = vrot.slane %v5302, 1
        %v5305 = vsel %vm1302, %v5300, %v5304
        %v5306 = vshrl.u32 %v5247, 16
        %v5308 = vor.u32 %v5306, %v5304
        %v5310 = vshll.u32 %v5248, 16
        %v5312 = vrot.slane %v5310, 1
        %v5313 = vsel %vm1302, %v5308, %v5312
        %v5314 = vshrl.u32 %v5248, 16
        %v5316 = vor.u32 %v5314, %v5312
        %v5318 = vshll.u32 %v5249, 16
        %v5320 = vrot.slane %v5318, 1
        %v5321 = vsel %vm1302, %v5316, %v5320
        %v5322 = vshrl.u32 %v5249, 16
        %v5324 = vor.u32 %v5322, %v5320
        %v5326 = vshll.u32 %v5250, 16
        %v5328 = vrot.slane %v5326, 1
        %v5329 = vsel %vm1302, %v5324, %v5328
        %v5330 = vshrl.u32 %v5250, 16
        %v5332 = vor.u32 %v5330, %v5328
        %v5334 = vshll.u32 %v5251, 16
        %v5336 = vrot.slane %v5334, 1
        %v5337 = vsel %vm1302, %v5332, %v5336
        %v5338 = vshrl.u32 %v5251, 16
        %v5340 = vor.u32 %v5338, %v5336
        %v5342 = vshll.u32 %v5252, 16
        %v5344 = vrot.slane %v5342, 1
        %v5345 = vsel %vm1302, %v5340, %v5344
        %v5346 = vshrl.u32 %v5252, 16
        %v5348 = vor.u32 %v5346, %v5344
        %v5350 = vshll.u32 %v5253, 16
        %v5352 = vrot.slane %v5350, 1
        %v5353 = vsel %vm1302, %v5348, %v5352
        %v5354 = vshrl.u32 %v5253, 16
        %v5356 = vor.u32 %v5354, %v5352
        %v5358 = vshll.u32 %v5254, 16
        %v5360 = vrot.slane %v5358, 1
        %v5361 = vsel %vm1302, %v5356, %v5360
        %v5362 = vshrl.u32 %v5254, 16
        %v5364 = vor.u32 %v5362, %v5360
        %v5366 = vshll.u32 %v5255, 16
        %v5368 = vrot.slane %v5366, 1
        %v5369 = vsel %vm1302, %v5364, %v5368
        %v5370 = vshrl.u32 %v5255, 16
        %v5372 = vor.u32 %v5370, %v5368
        %v5374 = vshll.u32 %v5256, 16
        %v5376 = vrot.slane %v5374, 1
        %v5377 = vsel %vm1302, %v5372, %v5376
        %v5378 = vshrl.u32 %v5256, 16
        %v5380 = vor.u32 %v5378, %v5376
        %v5382 = vshll.u32 %v5257, 16
        %v5384 = vrot.slane %v5382, 1
        %v5385 = vsel %vm1302, %v5380, %v5384
        %v5386 = vshrl.u32 %v5257, 16
        %v5388 = vor.u32 %v5386, %v5384
        %v5390 = vshll.u32 %v5258, 16
        %v5392 = vrot.slane %v5390, 1
        %v5393 = vsel %vm1302, %v5388, %v5392
        %v5394 = vshrl.u32 %v5258, 16
        %v5396 = vor.u32 %v5394, %v5392
        %v5398 = vshll.u32 %v5259, 16
        %v5400 = vrot.slane %v5398, 1
        %v5401 = vsel %vm1302, %v5396, %v5400
        %v5402 = vshrl.u32 %v5259, 16
        %v5404 = vor.u32 %v5402, %v5400
        %v5406 = vshll.u32 %v5260, 16
        %v5408 = vrot.slane %v5406, 1
        %v5409 = vsel %vm1302, %v5404, %v5408
        %v5442 = vunpack.c.l.b16 %v5262
        %v5443 = vunpack.c.l.b16 %v5263
        %v5444 = vunpack.c.l.b16 %v5264
        %v5445 = vunpack.c.l.b16 %v5265
        %v5446 = vunpack.c.l.b16 %v5266
        %v5447 = vunpack.c.l.b16 %v5267
        %v5448 = vunpack.c.l.b16 %v5268
        %v5449 = vunpack.c.l.b16 %v5269
        %v5450 = vunpack.c.l.b16 %v5270
        %v5451 = vunpack.c.l.b16 %v5271
        %v5452 = vunpack.c.l.b16 %v5272
        %v5453 = vunpack.c.l.b16 %v5273
        %v5454 = vunpack.c.l.b16 %v5274
        %v5455 = vunpack.c.l.b16 %v5275
        %v5456 = vunpack.c.l.b16 %v5276
        %v5457 = vunpack.c.l.b16 %v5277
        %v5458 = vpack.c.b16 %v5443, %v5442
        %v5459 = vpack.c.b16 %v5445, %v5444
        %v5460 = vpack.c.b16 %v5447, %v5446
        %v5461 = vpack.c.b16 %v5449, %v5448
        %v5462 = vpack.c.b16 %v5451, %v5450
        %v5463 = vpack.c.b16 %v5453, %v5452
        %v5464 = vpack.c.b16 %v5455, %v5454
        %v5465 = vpack.c.b16 %v5457, %v5456
        %5474 = vmatprep.subr.bf16.mxu0 0
        %5475 = vmatpush1.bf16.msra.mxu0 %v5458
        %5476 = vmatprep.subr.bf16.mxu0 0
        %5477 = vmatpush1.bf16.msra.mxu0 %v5459
        %5478 = vmatprep.subr.bf16.mxu0 0
        %5479 = vmatpush1.bf16.msra.mxu0 %v5460
        %5480 = vmatprep.subr.bf16.mxu0 0
        %5481 = vmatpush1.bf16.msra.mxu0 %v5461
        %5482 = vmatprep.subr.bf16.mxu0 0
        %5483 = vmatpush1.bf16.msra.mxu0 %v5462
        %5484 = vmatprep.subr.bf16.mxu0 0
        %5485 = vmatpush1.bf16.msra.mxu0 %v5463
        %5486 = vmatprep.subr.bf16.mxu0 0
        %5487 = vmatpush1.bf16.msra.mxu0 %v5464
        %5488 = vmatprep.subr.bf16.mxu0 0
        %5489 = vmatpush1.bf16.msra.mxu0 %v5465
        %5490 = vmatprep.subr.bf16.mxu0 0
        %5491 = vmatpush1.bf16.msra.mxu0 0
        %5492 = vmatprep.subr.bf16.mxu0 0
        %5493 = vmatpush1.bf16.msra.mxu0 0
        %5494 = vmatprep.subr.bf16.mxu0 0
        %5495 = vmatpush1.bf16.msra.mxu0 0
        %5496 = vmatprep.subr.bf16.mxu0 0
        %5497 = vmatpush1.bf16.msra.mxu0 0
        %5498 = vmatprep.subr.bf16.mxu0 0
        %5499 = vmatpush1.bf16.msra.mxu0 0
        %5500 = vmatprep.subr.bf16.mxu0 0
        %5501 = vmatpush1.bf16.msra.mxu0 0
        %5502 = vmatprep.subr.bf16.mxu0 0
        %5503 = vmatpush1.bf16.msra.mxu0 0
        %5504 = vmatprep.subr.bf16.mxu0 0
        %5505 = vmatpush1.bf16.msra.mxu0 0
        %5506 = vmatprep.mubr.bf16.mxu0 0
        %5507 = vmatmul.mubr.bf16.gmra.mrb[0].mxu0 %v5289
        %v5508 = vpop.f32.mrb[0].mxu0
        %v5509 = vadd.f32 0.0, %v5508
        %v5510 = vpop.f32.mrb[0].mxu0
        %v5511 = vpop.f32.mrb[0].mxu0
        %v5512 = vadd.f32 0.0, %v5511
        %v5513 = vpop.f32.mrb[0].mxu0
        %5514 = vmatprep.mubr.bf16.mxu0 0
        %5515 = vmatmul.mubr.bf16.gmra.mrb[0].mxu0 %v5297
        %v5516 = vpop.f32.mrb[0].mxu0
        %v5517 = vadd.f32 0.0, %v5516
        %v5518 = vpop.f32.mrb[0].mxu0
        %v5519 = vpop.f32.mrb[0].mxu0
        %v5520 = vadd.f32 0.0, %v5519
        %v5521 = vpop.f32.mrb[0].mxu0
        %5522 = vmatprep.mubr.bf16.mxu0 0
        %5523 = vmatmul.mubr.bf16.gmra.mrb[0].mxu0 %v5305
        %v5524 = vpop.f32.mrb[0].mxu0
        %v5525 = vadd.f32 0.0, %v5524
        %v5526 = vpop.f32.mrb[0].mxu0
        %v5527 = vpop.f32.mrb[0].mxu0
        %v5528 = vadd.f32 0.0, %v5527
        %v5529 = vpop.f32.mrb[0].mxu0
        %5530 = vmatprep.mubr.bf16.mxu0 0
        %5531 = vmatmul.mubr.bf16.gmra.mrb[0].mxu0 %v5313
        %v5532 = vpop.f32.mrb[0].mxu0
        %v5533 = vadd.f32 0.0, %v5532
        %v5534 = vpop.f32.mrb[0].mxu0
        %v5535 = vpop.f32.mrb[0].mxu0
        %v5536 = vadd.f32 0.0, %v5535
        %v5537 = vpop.f32.mrb[0].mxu0
        %5538 = vmatprep.mubr.bf16.mxu0 0
        %5539 = vmatmul.mubr.bf16.gmra.mrb[0].mxu0 %v5321
        %v5540 = vpop.f32.mrb[0].mxu0
        %v5541 = vadd.f32 0.0, %v5540
        %v5542 = vpop.f32.mrb[0].mxu0
        %v5543 = vpop.f32.mrb[0].mxu0
        %v5544 = vadd.f32 0.0, %v5543
        %v5545 = vpop.f32.mrb[0].mxu0
        %5546 = vmatprep.mubr.bf16.mxu0 0
        %5547 = vmatmul.mubr.bf16.gmra.mrb[0].mxu0 %v5329
        %v5548 = vpop.f32.mrb[0].mxu0
        %v5549 = vadd.f32 0.0, %v5548
        %v5550 = vpop.f32.mrb[0].mxu0
        %v5551 = vpop.f32.mrb[0].mxu0
        %v5552 = vadd.f32 0.0, %v5551
        %v5553 = vpop.f32.mrb[0].mxu0
        %5554 = vmatprep.mubr.bf16.mxu0 0
        %5555 = vmatmul.mubr.bf16.gmra.mrb[0].mxu0 %v5337
        %v5556 = vpop.f32.mrb[0].mxu0
        %v5557 = vadd.f32 0.0, %v5556
        %v5558 = vpop.f32.mrb[0].mxu0
        %v5559 = vpop.f32.mrb[0].mxu0
        %v5560 = vadd.f32 0.0, %v5559
        %v5561 = vpop.f32.mrb[0].mxu0
        %5562 = vmatprep.mubr.bf16.mxu0 0
        %5563 = vmatmul.mubr.bf16.gmra.mrb[0].mxu0 %v5345
        %v5564 = vpop.f32.mrb[0].mxu0
        %v5565 = vadd.f32 0.0, %v5564
        %v5566 = vpop.f32.mrb[0].mxu0
        %v5567 = vpop.f32.mrb[0].mxu0
        %v5568 = vadd.f32 0.0, %v5567
        %v5569 = vpop.f32.mrb[0].mxu0
        %5570 = vmatprep.mubr.bf16.mxu0 0
        %5571 = vmatmul.mubr.bf16.gmra.mrb[0].mxu0 %v5353
        %v5572 = vpop.f32.mrb[0].mxu0
        %v5573 = vadd.f32 0.0, %v5572
        %v5574 = vpop.f32.mrb[0].mxu0
        %v5575 = vpop.f32.mrb[0].mxu0
        %v5576 = vadd.f32 0.0, %v5575
        %v5577 = vpop.f32.mrb[0].mxu0
        %5578 = vmatprep.mubr.bf16.mxu0 0
        %5579 = vmatmul.mubr.bf16.gmra.mrb[0].mxu0 %v5361
        %v5580 = vpop.f32.mrb[0].mxu0
        %v5581 = vadd.f32 0.0, %v5580
        %v5582 = vpop.f32.mrb[0].mxu0
        %v5583 = vpop.f32.mrb[0].mxu0
        %v5584 = vadd.f32 0.0, %v5583
        %v5585 = vpop.f32.mrb[0].mxu0
        %5586 = vmatprep.mubr.bf16.mxu0 0
        %5587 = vmatmul.mubr.bf16.gmra.mrb[0].mxu0 %v5369
        %v5588 = vpop.f32.mrb[0].mxu0
        %v5589 = vadd.f32 0.0, %v5588
        %v5590 = vpop.f32.mrb[0].mxu0
        %v5591 = vpop.f32.mrb[0].mxu0
        %v5592 = vadd.f32 0.0, %v5591
        %v5593 = vpop.f32.mrb[0].mxu0
        %5594 = vmatprep.mubr.bf16.mxu0 0
        %5595 = vmatmul.mubr.bf16.gmra.mrb[0].mxu0 %v5377
        %v5596 = vpop.f32.mrb[0].mxu0
        %v5597 = vadd.f32 0.0, %v5596
        %v5598 = vpop.f32.mrb[0].mxu0
        %v5599 = vpop.f32.mrb[0].mxu0
        %v5600 = vadd.f32 0.0, %v5599
        %v5601 = vpop.f32.mrb[0].mxu0
        %5602 = vmatprep.mubr.bf16.mxu0 0
        %5603 = vmatmul.mubr.bf16.gmra.mrb[0].mxu0 %v5385
        %v5604 = vpop.f32.mrb[0].mxu0
        %v5605 = vadd.f32 0.0, %v5604
        %v5606 = vpop.f32.mrb[0].mxu0
        %v5607 = vpop.f32.mrb[0].mxu0
        %v5608 = vadd.f32 0.0, %v5607
        %v5609 = vpop.f32.mrb[0].mxu0
        %5610 = vmatprep.mubr.bf16.mxu0 0
        %5611 = vmatmul.mubr.bf16.gmra.mrb[0].mxu0 %v5393
        %v5612 = vpop.f32.mrb[0].mxu0
        %v5613 = vadd.f32 0.0, %v5612
        %v5614 = vpop.f32.mrb[0].mxu0
        %v5615 = vpop.f32.mrb[0].mxu0
        %v5616 = vadd.f32 0.0, %v5615
        %v5617 = vpop.f32.mrb[0].mxu0
        %5618 = vmatprep.mubr.bf16.mxu0 0
        %5619 = vmatmul.mubr.bf16.gmra.mrb[0].mxu0 %v5401
        %v5620 = vpop.f32.mrb[0].mxu0
        %v5621 = vadd.f32 0.0, %v5620
        %v5622 = vpop.f32.mrb[0].mxu0
        %v5623 = vpop.f32.mrb[0].mxu0
        %v5624 = vadd.f32 0.0, %v5623
        %v5625 = vpop.f32.mrb[0].mxu0
        %5626 = vmatprep.mubr.bf16.mxu0 0
        %5627 = vmatmul.mubr.bf16.gmra.mrb[0].mxu0 %v5409
        %v5628 = vpop.f32.mrb[0].mxu0
        %v5629 = vadd.f32 0.0, %v5628
        %v5630 = vpop.f32.mrb[0].mxu0
        %v5631 = vpop.f32.mrb[0].mxu0
        %v5632 = vadd.f32 0.0, %v5631
        %v5633 = vpop.f32.mrb[0].mxu0
        %5634 = vdwg.mxu0
        %v5635 = vld [vmem:[#allocation3] sm:$0xff]
        %v5636 = vld [vmem:[#allocation3 + $0x8] sm:$0xff]
        %v5637 = vld [vmem:[#allocation3 + $0x10] sm:$0xff]
        %v5638 = vld [vmem:[#allocation3 + $0x18] sm:$0xff]
        %v5639 = vld [vmem:[#allocation3 + $0x20] sm:$0xff]
        %v5640 = vld [vmem:[#allocation3 + $0x28] sm:$0xff]
        %v5641 = vld [vmem:[#allocation3 + $0x30] sm:$0xff]
        %v5642 = vld [vmem:[#allocation3 + $0x38] sm:$0xff]
        %v5643 = vld [vmem:[#allocation3 + $0x40] sm:$0xff]
        %v5644 = vld [vmem:[#allocation3 + $0x48] sm:$0xff]
        %v5645 = vld [vmem:[#allocation3 + $0x50] sm:$0xff]
        %v5646 = vld [vmem:[#allocation3 + $0x58] sm:$0xff]
        %v5647 = vld [vmem:[#allocation3 + $0x60] sm:$0xff]
        %v5648 = vld [vmem:[#allocation3 + $0x68] sm:$0xff]
        %v5649 = vld [vmem:[#allocation3 + $0x70] sm:$0xff]
        %v5650 = vld [vmem:[#allocation3 + $0x78] sm:$0xff]
        %v5651 = vld [vmem:[#allocation3 + $0x80] sm:$0xff]
        %v5652 = vld [vmem:[#allocation3 + $0x88] sm:$0xff]
        %v5653 = vld [vmem:[#allocation3 + $0x90] sm:$0xff]
        %v5654 = vld [vmem:[#allocation3 + $0x98] sm:$0xff]
        %v5655 = vld [vmem:[#allocation3 + $0xa0] sm:$0xff]
        %v5656 = vld [vmem:[#allocation3 + $0xa8] sm:$0xff]
        %v5657 = vld [vmem:[#allocation3 + $0xb0] sm:$0xff]
        %v5658 = vld [vmem:[#allocation3 + $0xb8] sm:$0xff]
        %v5659 = vld [vmem:[#allocation3 + $0xc0] sm:$0xff]
        %v5660 = vld [vmem:[#allocation3 + $0xc8] sm:$0xff]
        %v5661 = vld [vmem:[#allocation3 + $0xd0] sm:$0xff]
        %v5662 = vld [vmem:[#allocation3 + $0xd8] sm:$0xff]
        %v5663 = vld [vmem:[#allocation3 + $0xe0] sm:$0xff]
        %v5664 = vld [vmem:[#allocation3 + $0xe8] sm:$0xff]
        %v5665 = vld [vmem:[#allocation3 + $0xf0] sm:$0xff]
        %v5666 = vld [vmem:[#allocation3 + $0xf8] sm:$0xff]
        %v5667 = vadd.f32 %v5635, %v5509
        %v5668 = vadd.f32 %v5636, %v5512
        %v5669 = vadd.f32 %v5637, %v5517
        %v5670 = vadd.f32 %v5638, %v5520
        %v5671 = vadd.f32 %v5639, %v5525
        %v5672 = vadd.f32 %v5640, %v5528
        %v5673 = vadd.f32 %v5641, %v5533
        %v5674 = vadd.f32 %v5642, %v5536
        %v5675 = vadd.f32 %v5643, %v5541
        %v5676 = vadd.f32 %v5644, %v5544
        %v5677 = vadd.f32 %v5645, %v5549
        %v5678 = vadd.f32 %v5646, %v5552
        %v5679 = vadd.f32 %v5647, %v5557
        %v5680 = vadd.f32 %v5648, %v5560
        %v5681 = vadd.f32 %v5649, %v5565
        %v5682 = vadd.f32 %v5650, %v5568
        %v5683 = vadd.f32 %v5651, %v5573
        %v5684 = vadd.f32 %v5652, %v5576
        %v5685 = vadd.f32 %v5653, %v5581
        %v5686 = vadd.f32 %v5654, %v5584
        %v5687 = vadd.f32 %v5655, %v5589
        %v5688 = vadd.f32 %v5656, %v5592
        %v5689 = vadd.f32 %v5657, %v5597
        %v5690 = vadd.f32 %v5658, %v5600
        %v5691 = vadd.f32 %v5659, %v5605
        %v5692 = vadd.f32 %v5660, %v5608
        %v5693 = vadd.f32 %v5661, %v5613
        %v5694 = vadd.f32 %v5662, %v5616
        %v5695 = vadd.f32 %v5663, %v5621
        %v5696 = vadd.f32 %v5664, %v5624
        %v5697 = vadd.f32 %v5665, %v5629
        %v5698 = vadd.f32 %v5666, %v5632
        %5699 = vst [vmem:[#allocation3] sm:$0xff] %v5667
        %5700 = vst [vmem:[#allocation3 + $0x8] sm:$0xff] %v5668
        %5701 = vst [vmem:[#allocation3 + $0x10] sm:$0xff] %v5669
        %5702 = vst [vmem:[#allocation3 + $0x18] sm:$0xff] %v5670
        %5703 = vst [vmem:[#allocation3 + $0x20] sm:$0xff] %v5671
        %5704 = vst [vmem:[#allocation3 + $0x28] sm:$0xff] %v5672
        %5705 = vst [vmem:[#allocation3 + $0x30] sm:$0xff] %v5673
        %5706 = vst [vmem:[#allocation3 + $0x38] sm:$0xff] %v5674
        %5707 = vst [vmem:[#allocation3 + $0x40] sm:$0xff] %v5675
        %5708 = vst [vmem:[#allocation3 + $0x48] sm:$0xff] %v5676
        %5709 = vst [vmem:[#allocation3 + $0x50] sm:$0xff] %v5677
        %5710 = vst [vmem:[#allocation3 + $0x58] sm:$0xff] %v5678
        %5711 = vst [vmem:[#allocation3 + $0x60] sm:$0xff] %v5679
        %5712 = vst [vmem:[#allocation3 + $0x68] sm:$0xff] %v5680
        %5713 = vst [vmem:[#allocation3 + $0x70] sm:$0xff] %v5681
        %5714 = vst [vmem:[#allocation3 + $0x78] sm:$0xff] %v5682
        %5715 = vst [vmem:[#allocation3 + $0x80] sm:$0xff] %v5683
        %5716 = vst [vmem:[#allocation3 + $0x88] sm:$0xff] %v5684
        %5717 = vst [vmem:[#allocation3 + $0x90] sm:$0xff] %v5685
        %5718 = vst [vmem:[#allocation3 + $0x98] sm:$0xff] %v5686
        %5719 = vst [vmem:[#allocation3 + $0xa0] sm:$0xff] %v5687
        %5720 = vst [vmem:[#allocation3 + $0xa8] sm:$0xff] %v5688
        %5721 = vst [vmem:[#allocation3 + $0xb0] sm:$0xff] %v5689
        %5722 = vst [vmem:[#allocation3 + $0xb8] sm:$0xff] %v5690
        %5723 = vst [vmem:[#allocation3 + $0xc0] sm:$0xff] %v5691
        %5724 = vst [vmem:[#allocation3 + $0xc8] sm:$0xff] %v5692
        %5725 = vst [vmem:[#allocation3 + $0xd0] sm:$0xff] %v5693
        %5726 = vst [vmem:[#allocation3 + $0xd8] sm:$0xff] %v5694
        %5727 = vst [vmem:[#allocation3 + $0xe0] sm:$0xff] %v5695
        %5728 = vst [vmem:[#allocation3 + $0xe8] sm:$0xff] %v5696
        %5729 = vst [vmem:[#allocation3 + $0xf0] sm:$0xff] %v5697
        %5730 = vst [vmem:[#allocation3 + $0xf8] sm:$0xff] %v5698
        %v5731 = vld [vmem:[#allocation3] sm:$0xff]
        %v5732 = vld [vmem:[#allocation3 + $0x8] sm:$0xff]
        %v5733 = vld [vmem:[#allocation3 + $0x10] sm:$0xff]
        %v5734 = vld [vmem:[#allocation3 + $0x18] sm:$0xff]
        %v5735 = vld [vmem:[#allocation3 + $0x20] sm:$0xff]
        %v5736 = vld [vmem:[#allocation3 + $0x28] sm:$0xff]
        %v5737 = vld [vmem:[#allocation3 + $0x30] sm:$0xff]
        %v5738 = vld [vmem:[#allocation3 + $0x38] sm:$0xff]
        %v5739 = vld [vmem:[#allocation3 + $0x40] sm:$0xff]
        %v5740 = vld [vmem:[#allocation3 + $0x48] sm:$0xff]
        %v5741 = vld [vmem:[#allocation3 + $0x50] sm:$0xff]
        %v5742 = vld [vmem:[#allocation3 + $0x58] sm:$0xff]
        %v5743 = vld [vmem:[#allocation3 + $0x60] sm:$0xff]
        %v5744 = vld [vmem:[#allocation3 + $0x68] sm:$0xff]
        %v5745 = vld [vmem:[#allocation3 + $0x70] sm:$0xff]
        %v5746 = vld [vmem:[#allocation3 + $0x78] sm:$0xff]
        %v5747 = vld [vmem:[#allocation3 + $0x80] sm:$0xff]
        %v5748 = vld [vmem:[#allocation3 + $0x88] sm:$0xff]
        %v5749 = vld [vmem:[#allocation3 + $0x90] sm:$0xff]
        %v5750 = vld [vmem:[#allocation3 + $0x98] sm:$0xff]
        %v5751 = vld [vmem:[#allocation3 + $0xa0] sm:$0xff]
        %v5752 = vld [vmem:[#allocation3 + $0xa8] sm:$0xff]
        %v5753 = vld [vmem:[#allocation3 + $0xb0] sm:$0xff]
        %v5754 = vld [vmem:[#allocation3 + $0xb8] sm:$0xff]
        %v5755 = vld [vmem:[#allocation3 + $0xc0] sm:$0xff]
        %v5756 = vld [vmem:[#allocation3 + $0xc8] sm:$0xff]
        %v5757 = vld [vmem:[#allocation3 + $0xd0] sm:$0xff]
        %v5758 = vld [vmem:[#allocation3 + $0xd8] sm:$0xff]
        %v5759 = vld [vmem:[#allocation3 + $0xe0] sm:$0xff]
        %v5760 = vld [vmem:[#allocation3 + $0xe8] sm:$0xff]
        %v5761 = vld [vmem:[#allocation3 + $0xf0] sm:$0xff]
        %v5762 = vld [vmem:[#allocation3 + $0xf8] sm:$0xff]
        %v5763 = vmax.f32 %v5731, 0.0
        %v5764 = vmax.f32 %v5732, 0.0
        %v5765 = vmax.f32 %v5733, 0.0
        %v5766 = vmax.f32 %v5734, 0.0
        %v5767 = vmax.f32 %v5735, 0.0
        %v5768 = vmax.f32 %v5736, 0.0
        %v5769 = vmax.f32 %v5737, 0.0
        %v5770 = vmax.f32 %v5738, 0.0
        %v5771 = vmax.f32 %v5739, 0.0
        %v5772 = vmax.f32 %v5740, 0.0
        %v5773 = vmax.f32 %v5741, 0.0
        %v5774 = vmax.f32 %v5742, 0.0
        %v5775 = vmax.f32 %v5743, 0.0
        %v5776 = vmax.f32 %v5744, 0.0
        %v5777 = vmax.f32 %v5745, 0.0
        %v5778 = vmax.f32 %v5746, 0.0
        %v5779 = vmax.f32 %v5747, 0.0
        %v5780 = vmax.f32 %v5748, 0.0
        %v5781 = vmax.f32 %v5749, 0.0
        %v5782 = vmax.f32 %v5750, 0.0
        %v5783 = vmax.f32 %v5751, 0.0
        %v5784 = vmax.f32 %v5752, 0.0
        %v5785 = vmax.f32 %v5753, 0.0
        %v5786 = vmax.f32 %v5754, 0.0
        %v5787 = vmax.f32 %v5755, 0.0
        %v5788 = vmax.f32 %v5756, 0.0
        %v5789 = vmax.f32 %v5757, 0.0
        %v5790 = vmax.f32 %v5758, 0.0
        %v5791 = vmax.f32 %v5759, 0.0
        %v5792 = vmax.f32 %v5760, 0.0
        %v5793 = vmax.f32 %v5761, 0.0
        %v5794 = vmax.f32 %v5762, 0.0
        %v5795 = vpack.c.bf16 %v5764, %v5763
        %v5796 = vpack.c.bf16 %v5766, %v5765
        %v5797 = vpack.c.bf16 %v5768, %v5767
        %v5798 = vpack.c.bf16 %v5770, %v5769
        %v5799 = vpack.c.bf16 %v5772, %v5771
        %v5800 = vpack.c.bf16 %v5774, %v5773
        %v5801 = vpack.c.bf16 %v5776, %v5775
        %v5802 = vpack.c.bf16 %v5778, %v5777
        %v5803 = vpack.c.bf16 %v5780, %v5779
        %v5804 = vpack.c.bf16 %v5782, %v5781
        %v5805 = vpack.c.bf16 %v5784, %v5783
        %v5806 = vpack.c.bf16 %v5786, %v5785
        %v5807 = vpack.c.bf16 %v5788, %v5787
        %v5808 = vpack.c.bf16 %v5790, %v5789
        %v5809 = vpack.c.bf16 %v5792, %v5791
        %v5810 = vpack.c.bf16 %v5794, %v5793
        %v5811 = vld [vmem:[%s5] sm:$0xf]
        %v5812 = vld [vmem:[%s5 + $0x4] sm:$0xf]
        %v5813 = vld [vmem:[%s5 + $0x8] sm:$0xf]
        %v5814 = vld [vmem:[%s5 + $0xc] sm:$0xf]
        %v5815 = vld [vmem:[%s5 + $0x10] sm:$0xf]
        %v5816 = vld [vmem:[%s5 + $0x14] sm:$0xf]
        %v5817 = vld [vmem:[%s5 + $0x18] sm:$0xf]
        %v5818 = vld [vmem:[%s5 + $0x1c] sm:$0xf]
        %v5819 = vld [vmem:[%s5 + $0x20] sm:$0xf]
        %v5820 = vld [vmem:[%s5 + $0x24] sm:$0xf]
        %v5821 = vld [vmem:[%s5 + $0x28] sm:$0xf]
        %v5822 = vld [vmem:[%s5 + $0x2c] sm:$0xf]
        %v5823 = vld [vmem:[%s5 + $0x30] sm:$0xf]
        %v5824 = vld [vmem:[%s5 + $0x34] sm:$0xf]
        %v5825 = vld [vmem:[%s5 + $0x38] sm:$0xf]
        %v5826 = vld [vmem:[%s5 + $0x3c] sm:$0xf]
        %v5827 = vld [vmem:[%s6] sm:$0x1]
        %v5829 = vlaneseq
        %v5830 = vshrl.u32 %v5829, 7
        %v5831 = vsub.s32 0, %v5830
        %v5832 = vrot.slane %v5827, %v5831
        %v5850 = vunpack.c.l.b16 %v5811
        %v5851 = vunpack.c.l.b16 %v5812
        %v5852 = vunpack.c.l.b16 %v5813
        %v5853 = vunpack.c.l.b16 %v5814
        %v5854 = vunpack.c.l.b16 %v5815
        %v5855 = vunpack.c.l.b16 %v5816
        %v5856 = vunpack.c.l.b16 %v5817
        %v5857 = vunpack.c.l.b16 %v5818
        %v5858 = vunpack.c.l.b16 %v5819
        %v5859 = vunpack.c.l.b16 %v5820
        %v5860 = vunpack.c.l.b16 %v5821
        %v5861 = vunpack.c.l.b16 %v5822
        %v5862 = vunpack.c.l.b16 %v5823
        %v5863 = vunpack.c.l.b16 %v5824
        %v5864 = vunpack.c.l.b16 %v5825
        %v5865 = vunpack.c.l.b16 %v5826
        %v5866 = vpack.c.b16 %v5851, %v5850
        %v5867 = vpack.c.b16 %v5853, %v5852
        %v5868 = vpack.c.b16 %v5855, %v5854
        %v5869 = vpack.c.b16 %v5857, %v5856
        %v5870 = vpack.c.b16 %v5859, %v5858
        %v5871 = vpack.c.b16 %v5861, %v5860
        %v5872 = vpack.c.b16 %v5863, %v5862
        %v5873 = vpack.c.b16 %v5865, %v5864
        %5882 = vmatprep.subr.bf16.mxu0 0
        %5883 = vmatpush1.bf16.msra.mxu0 %v5866
        %5884 = vmatprep.subr.bf16.mxu0 0
        %5885 = vmatpush1.bf16.msra.mxu0 %v5867
        %5886 = vmatprep.subr.bf16.mxu0 0
        %5887 = vmatpush1.bf16.msra.mxu0 %v5868
        %5888 = vmatprep.subr.bf16.mxu0 0
        %5889 = vmatpush1.bf16.msra.mxu0 %v5869
        %5890 = vmatprep.subr.bf16.mxu0 0
        %5891 = vmatpush1.bf16.msra.mxu0 %v5870
        %5892 = vmatprep.subr.bf16.mxu0 0
        %5893 = vmatpush1.bf16.msra.mxu0 %v5871
        %5894 = vmatprep.subr.bf16.mxu0 0
        %5895 = vmatpush1.bf16.msra.mxu0 %v5872
        %5896 = vmatprep.subr.bf16.mxu0 0
        %5897 = vmatpush1.bf16.msra.mxu0 %v5873
        %5898 = vmatprep.subr.bf16.mxu0 0
        %5899 = vmatpush1.bf16.msra.mxu0 0
        %5900 = vmatprep.subr.bf16.mxu0 0
        %5901 = vmatpush1.bf16.msra.mxu0 0
        %5902 = vmatprep.subr.bf16.mxu0 0
        %5903 = vmatpush1.bf16.msra.mxu0 0
        %5904 = vmatprep.subr.bf16.mxu0 0
        %5905 = vmatpush1.bf16.msra.mxu0 0
        %5906 = vmatprep.subr.bf16.mxu0 0
        %5907 = vmatpush1.bf16.msra.mxu0 0
        %5908 = vmatprep.subr.bf16.mxu0 0
        %5909 = vmatpush1.bf16.msra.mxu0 0
        %5910 = vmatprep.subr.bf16.mxu0 0
        %5911 = vmatpush1.bf16.msra.mxu0 0
        %5912 = vmatprep.subr.bf16.mxu0 0
        %5913 = vmatpush1.bf16.msra.mxu0 0
        %5914 = vmatprep.mubr.bf16.mxu0 0
        %5915 = vmatmul.mubr.bf16.gmra.mrb[0].mxu0 %v5795
        %v5916 = vpop.f32.mrb[0].mxu0
        %v5917 = vadd.f32 %v5832, %v5916
        %v5918 = vpop.f32.mrb[0].mxu0
        %v5919 = vpop.f32.mrb[0].mxu0
        %v5920 = vadd.f32 %v5832, %v5919
        %v5921 = vpop.f32.mrb[0].mxu0
        %5922 = vmatprep.mubr.bf16.mxu0 0
        %5923 = vmatmul.mubr.bf16.gmra.mrb[0].mxu0 %v5796
        %v5924 = vpop.f32.mrb[0].mxu0
        %v5925 = vadd.f32 %v5832, %v5924
        %v5926 = vpop.f32.mrb[0].mxu0
        %v5927 = vpop.f32.mrb[0].mxu0
        %v5928 = vadd.f32 %v5832, %v5927
        %v5929 = vpop.f32.mrb[0].mxu0
        %5930 = vmatprep.mubr.bf16.mxu0 0
        %5931 = vmatmul.mubr.bf16.gmra.mrb[0].mxu0 %v5797
        %v5932 = vpop.f32.mrb[0].mxu0
        %v5933 = vadd.f32 %v5832, %v5932
        %v5934 = vpop.f32.mrb[0].mxu0
        %v5935 = vpop.f32.mrb[0].mxu0
        %v5936 = vadd.f32 %v5832, %v5935
        %v5937 = vpop.f32.mrb[0].mxu0
        %5938 = vmatprep.mubr.bf16.mxu0 0
        %5939 = vmatmul.mubr.bf16.gmra.mrb[0].mxu0 %v5798
        %v5940 = vpop.f32.mrb[0].mxu0
        %v5941 = vadd.f32 %v5832, %v5940
        %v5942 = vpop.f32.mrb[0].mxu0
        %v5943 = vpop.f32.mrb[0].mxu0
        %v5944 = vadd.f32 %v5832, %v5943
        %v5945 = vpop.f32.mrb[0].mxu0
        %5946 = vmatprep.mubr.bf16.mxu0 0
        %5947 = vmatmul.mubr.bf16.gmra.mrb[0].mxu0 %v5799
        %v5948 = vpop.f32.mrb[0].mxu0
        %v5949 = vadd.f32 %v5832, %v5948
        %v5950 = vpop.f32.mrb[0].mxu0
        %v5951 = vpop.f32.mrb[0].mxu0
        %v5952 = vadd.f32 %v5832, %v5951
        %v5953 = vpop.f32.mrb[0].mxu0
        %5954 = vmatprep.mubr.bf16.mxu0 0
        %5955 = vmatmul.mubr.bf16.gmra.mrb[0].mxu0 %v5800
        %v5956 = vpop.f32.mrb[0].mxu0
        %v5957 = vadd.f32 %v5832, %v5956
        %v5958 = vpop.f32.mrb[0].mxu0
        %v5959 = vpop.f32.mrb[0].mxu0
        %v5960 = vadd.f32 %v5832, %v5959
        %v5961 = vpop.f32.mrb[0].mxu0
        %5962 = vmatprep.mubr.bf16.mxu0 0
        %5963 = vmatmul.mubr.bf16.gmra.mrb[0].mxu0 %v5801
        %v5964 = vpop.f32.mrb[0].mxu0
        %v5965 = vadd.f32 %v5832, %v5964
        %v5966 = vpop.f32.mrb[0].mxu0
        %v5967 = vpop.f32.mrb[0].mxu0
        %v5968 = vadd.f32 %v5832, %v5967
        %v5969 = vpop.f32.mrb[0].mxu0
        %5970 = vmatprep.mubr.bf16.mxu0 0
        %5971 = vmatmul.mubr.bf16.gmra.mrb[0].mxu0 %v5802
        %v5972 = vpop.f32.mrb[0].mxu0
        %v5973 = vadd.f32 %v5832, %v5972
        %v5974 = vpop.f32.mrb[0].mxu0
        %v5975 = vpop.f32.mrb[0].mxu0
        %v5976 = vadd.f32 %v5832, %v5975
        %v5977 = vpop.f32.mrb[0].mxu0
        %5978 = vmatprep.mubr.bf16.mxu0 0
        %5979 = vmatmul.mubr.bf16.gmra.mrb[0].mxu0 %v5803
        %v5980 = vpop.f32.mrb[0].mxu0
        %v5981 = vadd.f32 %v5832, %v5980
        %v5982 = vpop.f32.mrb[0].mxu0
        %v5983 = vpop.f32.mrb[0].mxu0
        %v5984 = vadd.f32 %v5832, %v5983
        %v5985 = vpop.f32.mrb[0].mxu0
        %5986 = vmatprep.mubr.bf16.mxu0 0
        %5987 = vmatmul.mubr.bf16.gmra.mrb[0].mxu0 %v5804
        %v5988 = vpop.f32.mrb[0].mxu0
        %v5989 = vadd.f32 %v5832, %v5988
        %v5990 = vpop.f32.mrb[0].mxu0
        %v5991 = vpop.f32.mrb[0].mxu0
        %v5992 = vadd.f32 %v5832, %v5991
        %v5993 = vpop.f32.mrb[0].mxu0
        %5994 = vmatprep.mubr.bf16.mxu0 0
        %5995 = vmatmul.mubr.bf16.gmra.mrb[0].mxu0 %v5805
        %v5996 = vpop.f32.mrb[0].mxu0
        %v5997 = vadd.f32 %v5832, %v5996
        %v5998 = vpop.f32.mrb[0].mxu0
        %v5999 = vpop.f32.mrb[0].mxu0
        %v6000 = vadd.f32 %v5832, %v5999
        %v6001 = vpop.f32.mrb[0].mxu0
        %6002 = vmatprep.mubr.bf16.mxu0 0
        %6003 = vmatmul.mubr.bf16.gmra.mrb[0].mxu0 %v5806
        %v6004 = vpop.f32.mrb[0].mxu0
        %v6005 = vadd.f32 %v5832, %v6004
        %v6006 = vpop.f32.mrb[0].mxu0
        %v6007 = vpop.f32.mrb[0].mxu0
        %v6008 = vadd.f32 %v5832, %v6007
        %v6009 = vpop.f32.mrb[0].mxu0
        %6010 = vmatprep.mubr.bf16.mxu0 0
        %6011 = vmatmul.mubr.bf16.gmra.mrb[0].mxu0 %v5807
        %v6012 = vpop.f32.mrb[0].mxu0
        %v6013 = vadd.f32 %v5832, %v6012
        %v6014 = vpop.f32.mrb[0].mxu0
        %v6015 = vpop.f32.mrb[0].mxu0
        %v6016 = vadd.f32 %v5832, %v6015
        %v6017 = vpop.f32.mrb[0].mxu0
        %6018 = vmatprep.mubr.bf16.mxu0 0
        %6019 = vmatmul.mubr.bf16.gmra.mrb[0].mxu0 %v5808
        %v6020 = vpop.f32.mrb[0].mxu0
        %v6021 = vadd.f32 %v5832, %v6020
        %v6022 = vpop.f32.mrb[0].mxu0
        %v6023 = vpop.f32.mrb[0].mxu0
        %v6024 = vadd.f32 %v5832, %v6023
        %v6025 = vpop.f32.mrb[0].mxu0
        %6026 = vmatprep.mubr.bf16.mxu0 0
        %6027 = vmatmul.mubr.bf16.gmra.mrb[0].mxu0 %v5809
        %v6028 = vpop.f32.mrb[0].mxu0
        %v6029 = vadd.f32 %v5832, %v6028
        %v6030 = vpop.f32.mrb[0].mxu0
        %v6031 = vpop.f32.mrb[0].mxu0
        %v6032 = vadd.f32 %v5832, %v6031
        %v6033 = vpop.f32.mrb[0].mxu0
        %6034 = vmatprep.mubr.bf16.mxu0 0
        %6035 = vmatmul.mubr.bf16.gmra.mrb[0].mxu0 %v5810
        %v6036 = vpop.f32.mrb[0].mxu0
        %v6037 = vadd.f32 %v5832, %v6036
        %v6038 = vpop.f32.mrb[0].mxu0
        %v6039 = vpop.f32.mrb[0].mxu0
        %v6040 = vadd.f32 %v5832, %v6039
        %v6041 = vpop.f32.mrb[0].mxu0
        %6042 = vdwg.mxu0
        %v6043 = vadd.f32 %v5917, %v280
        %v6044 = vadd.f32 %v5920, %v281
        %v6045 = vadd.f32 %v5925, %v282
        %v6046 = vadd.f32 %v5928, %v283
        %v6047 = vadd.f32 %v5933, %v284
        %v6048 = vadd.f32 %v5936, %v285
        %v6049 = vadd.f32 %v5941, %v286
        %v6050 = vadd.f32 %v5944, %v287
        %v6051 = vadd.f32 %v5949, %v288
        %v6052 = vadd.f32 %v5952, %v289
        %v6053 = vadd.f32 %v5957, %v290
        %v6054 = vadd.f32 %v5960, %v291
        %v6055 = vadd.f32 %v5965, %v292
        %v6056 = vadd.f32 %v5968, %v293
        %v6057 = vadd.f32 %v5973, %v294
        %v6058 = vadd.f32 %v5976, %v295
        %v6059 = vadd.f32 %v5981, %v296
        %v6060 = vadd.f32 %v5984, %v297
        %v6061 = vadd.f32 %v5989, %v298
        %v6062 = vadd.f32 %v5992, %v299
        %v6063 = vadd.f32 %v5997, %v300
        %v6064 = vadd.f32 %v6000, %v301
        %v6065 = vadd.f32 %v6005, %v302
        %v6066 = vadd.f32 %v6008, %v303
        %v6067 = vadd.f32 %v6013, %v304
        %v6068 = vadd.f32 %v6016, %v305
        %v6069 = vadd.f32 %v6021, %v306
        %v6070 = vadd.f32 %v6024, %v307
        %v6071 = vadd.f32 %v6029, %v308
        %v6072 = vadd.f32 %v6032, %v309
        %v6073 = vadd.f32 %v6037, %v310
        %v6074 = vadd.f32 %v6040, %v311
        %v6075 = vmax.f32 %v6043, 0.0
        %v6076 = vmax.f32 %v6044, 0.0
        %v6077 = vmax.f32 %v6045, 0.0
        %v6078 = vmax.f32 %v6046, 0.0
        %v6079 = vmax.f32 %v6047, 0.0
        %v6080 = vmax.f32 %v6048, 0.0
        %v6081 = vmax.f32 %v6049, 0.0
        %v6082 = vmax.f32 %v6050, 0.0
        %v6083 = vmax.f32 %v6051, 0.0
        %v6084 = vmax.f32 %v6052, 0.0
        %v6085 = vmax.f32 %v6053, 0.0
        %v6086 = vmax.f32 %v6054, 0.0
        %v6087 = vmax.f32 %v6055, 0.0
        %v6088 = vmax.f32 %v6056, 0.0
        %v6089 = vmax.f32 %v6057, 0.0
        %v6090 = vmax.f32 %v6058, 0.0
        %v6091 = vmax.f32 %v6059, 0.0
        %v6092 = vmax.f32 %v6060, 0.0
        %v6093 = vmax.f32 %v6061, 0.0
        %v6094 = vmax.f32 %v6062, 0.0
        %v6095 = vmax.f32 %v6063, 0.0
        %v6096 = vmax.f32 %v6064, 0.0
        %v6097 = vmax.f32 %v6065, 0.0
        %v6098 = vmax.f32 %v6066, 0.0
        %v6099 = vmax.f32 %v6067, 0.0
        %v6100 = vmax.f32 %v6068, 0.0
        %v6101 = vmax.f32 %v6069, 0.0
        %v6102 = vmax.f32 %v6070, 0.0
        %v6103 = vmax.f32 %v6071, 0.0
        %v6104 = vmax.f32 %v6072, 0.0
        %v6105 = vmax.f32 %v6073, 0.0
        %v6106 = vmax.f32 %v6074, 0.0
        %6107 = vst [vmem:[%s271] sm:$0xff] %v6075
        %6108 = vst [vmem:[%s271 + $0x8] sm:$0xff] %v6076
        %6109 = vst [vmem:[%s271 + $0x10] sm:$0xff] %v6077
        %6110 = vst [vmem:[%s271 + $0x18] sm:$0xff] %v6078
        %6111 = vst [vmem:[%s271 + $0x20] sm:$0xff] %v6079
        %6112 = vst [vmem:[%s271 + $0x28] sm:$0xff] %v6080
        %6113 = vst [vmem:[%s271 + $0x30] sm:$0xff] %v6081
        %6114 = vst [vmem:[%s271 + $0x38] sm:$0xff] %v6082
        %6115 = vst [vmem:[%s271 + $0x40] sm:$0xff] %v6083
        %6116 = vst [vmem:[%s271 + $0x48] sm:$0xff] %v6084
        %6117 = vst [vmem:[%s271 + $0x50] sm:$0xff] %v6085
        %6118 = vst [vmem:[%s271 + $0x58] sm:$0xff] %v6086
        %6119 = vst [vmem:[%s271 + $0x60] sm:$0xff] %v6087
        %6120 = vst [vmem:[%s271 + $0x68] sm:$0xff] %v6088
        %6121 = vst [vmem:[%s271 + $0x70] sm:$0xff] %v6089
        %6122 = vst [vmem:[%s271 + $0x78] sm:$0xff] %v6090
        %6123 = vst [vmem:[%s271 + $0x80] sm:$0xff] %v6091
        %6124 = vst [vmem:[%s271 + $0x88] sm:$0xff] %v6092
        %6125 = vst [vmem:[%s271 + $0x90] sm:$0xff] %v6093
        %6126 = vst [vmem:[%s271 + $0x98] sm:$0xff] %v6094
        %6127 = vst [vmem:[%s271 + $0xa0] sm:$0xff] %v6095
        %6128 = vst [vmem:[%s271 + $0xa8] sm:$0xff] %v6096
        %6129 = vst [vmem:[%s271 + $0xb0] sm:$0xff] %v6097
        %6130 = vst [vmem:[%s271 + $0xb8] sm:$0xff] %v6098
        %6131 = vst [vmem:[%s271 + $0xc0] sm:$0xff] %v6099
        %6132 = vst [vmem:[%s271 + $0xc8] sm:$0xff] %v6100
        %6133 = vst [vmem:[%s271 + $0xd0] sm:$0xff] %v6101
        %6134 = vst [vmem:[%s271 + $0xd8] sm:$0xff] %v6102
        %6135 = vst [vmem:[%s271 + $0xe0] sm:$0xff] %v6103
        %6136 = vst [vmem:[%s271 + $0xe8] sm:$0xff] %v6104
        %6137 = vst [vmem:[%s271 + $0xf0] sm:$0xff] %v6105
        %6138 = vst [vmem:[%s271 + $0xf8] sm:$0xff] %v6106
        %s6139 = sand.u32 %s181, 1
        %s6140 = scalar_lea.sflag [#allocation5], %s6139
        %s6141 = sand.u32 %s181, 1
        %s6142 = smul.addr %s6141, 256
        %s6143 = scalar_lea.vmem [#allocation4], %s6142
        // Predicated region
        $region49: #{bottleneck_forward_nhwc.1} parent=47 // pred_check
          %p6144 = pneg %p191
        $region50: #{bottleneck_forward_nhwc.1} parent=47 // pred_check_branch
          %6146 = sbr.rel (%p6144) target = $region52
        $region51: #{bottleneck_forward_nhwc.1} parent=47 // pred_region
          %s6148 = ssub.s32 4096, 4096
          %6149 = vsyncadd %s6140, %s6148
          %s6150 = smul.addr %s21, 32
          %s6151 = smul.addr %s6150, 128
          %s6152 = scalar_lea.hbm %s7, %s6151
          %s6153 = sshll.u32 %s6143, 4
          %s6154 = int_to_ptr.vmem [resolvable:$true] %s6153
          %6159 = dma.vmem_to_hbm [thread:$0]  %s6154, 4096, %s6152, %s6140, 128, 128, 8
        $region52: #{bottleneck_forward_nhwc.1} parent=47 // pred_fallthru
          _
      $region48: #{bottleneck_forward_nhwc.1} parent=5 // pred_fallthru
        _
      %p6160 = scmp.le.s32.totalorder 2, %s16
      // Predicated region
      $region53: #{bottleneck_forward_nhwc.1} parent=5 // pred_check
        %p6161 = pneg %p6160
      $region54: #{bottleneck_forward_nhwc.1} parent=5 // pred_check_branch
        %6163 = sbr.rel (%p6161) target = $region56
      $region55: #{bottleneck_forward_nhwc.1} parent=5 // pred_region
        %s6164 = ssub.s32 %s16, 2
        // Predicated region
        $region57: #{bottleneck_forward_nhwc.1} parent=55 // pred_check
          %p6165 = pneg %p197
        $region58: #{bottleneck_forward_nhwc.1} parent=55 // pred_check_branch
          %6167 = sbr.rel (%p6165) target = $region60
        $region59: #{bottleneck_forward_nhwc.1} parent=55 // pred_region
          %s6168 = sand.u32 %s182, 1
          %s6169 = scalar_lea.sflag [#allocation5], %s6168
          %s6170 = sand.u32 %s182, 1
          %s6171 = smul.addr %s6170, 256
          %s6172 = scalar_lea.vmem [#allocation4], %s6171
          %6173 = dma.done %s6169, 4096
        $region60: #{bottleneck_forward_nhwc.1} parent=55 // pred_fallthru
          _
      $region56: #{bottleneck_forward_nhwc.1} parent=5 // pred_fallthru
        _
    $region6: #{bottleneck_forward_nhwc.1} parent=1 // loop_footer
      %s20 = sadd.s32 1, %s16
    $region7: #{bottleneck_forward_nhwc.1} parent=1 // loop_footer_branch
      %15 = sbr.rel target = $region3
    $region8: #{bottleneck_forward_nhwc.1} parent=1 // loop_exit
      _
    %6174 = vsyncpa [#allocation5], 1
    %s6175 = scalar_lea.sflag [#allocation5], 1
    %6176 = vsyncpa %s6175, 1

</llo_original>
